<compile_context>
chip_gen: v5e
topology: v5e:2x2
jax: 0.10.0
libtpu: 0.0.40
codegen_flags: <defaults>
</compile_context>

<pallas_src>
import functools

import jax
import jax.numpy as jnp
from jax.experimental import pallas as pl
from jax.experimental.pallas import tpu as pltpu  # noqa: F401  (not needed at these shapes)


_NS_ITERS = 15  # Newton-Schulz iterations for the 32x32 matrix square root


def _spec(shape):
    # full-array block (block_shape == array shape satisfies the (8,128) rule)
    return pl.BlockSpec(shape, lambda i: (0,) * len(shape))


# ---------------- fused kernel ----------------

def _fused_kernel(x_ref, wf_ref, bf_ref, mu1_ref, s1_ref, s1h_ref,
                  rand_ref, wc_ref, bc_ref, thre_ref,
                  logits_ref, fid_ref, def_ref):
    # 1. victim rep head: relu(x @ W_feat + b_feat); bf16 MXU operands, f32 acc
    feat = jnp.maximum(
        jnp.dot(x_ref[...], wf_ref[...], preferred_element_type=jnp.float32)
        + bf_ref[...],
        0.0,
    )

    # 2. activation statistics (all f32)
    n = feat.shape[0]
    mu2 = jnp.sum(feat, axis=0, keepdims=True) * (1.0 / n)
    c = feat - mu2
    denom = max(n - 1, 1)  # guard N==1 (np.cov would degenerate too)
    s2 = jax.lax.dot_general(
        c, c, (((0,), (0,)), ((), ())), preferred_element_type=jnp.float32
    ) * (1.0 / denom)

    dims = s2.shape[0]
    ri = jax.lax.broadcasted_iota(jnp.int32, (dims, dims), 0)
    ci = jax.lax.broadcasted_iota(jnp.int32, (dims, dims), 1)
    eye = (ri == ci).astype(jnp.float32)

    # 3a. FID partial: ||mu1-mu2||^2 + tr(s1) + tr(s2)
    d = mu1_ref[...] - mu2
    s1 = s1_ref[...]
    partial = jnp.sum(d * d) + jnp.sum((s1 + s2) * eye)

    # 3b. tr(sqrtm(s1 @ s2)) via symmetric sandwich + Newton-Schulz iteration.
    #     A = s1^{1/2} @ s2 @ s1^{1/2} is symmetric PSD (s1h, s2 symmetric),
    #     so tr(sqrtm(s1 @ s2)) = tr(sqrtm(A)).
    s1h = s1h_ref[...]
    a = jnp.dot(jnp.dot(s1h, s2, preferred_element_type=jnp.float32), s1h,
                preferred_element_type=jnp.float32)
    norm_a = jnp.sqrt(jnp.sum(a * a)) + 1e-12  # Frobenius norm (>= spectral)
    y0 = a * (1.0 / norm_a)                    # eigenvalues in [0, 1]

    def ns_step(_, carry):
        y, z = carry
        t = 0.5 * (3.0 * eye - jnp.dot(z, y, preferred_element_type=jnp.float32))
        return (jnp.dot(y, t, preferred_element_type=jnp.float32),
                jnp.dot(t, z, preferred_element_type=jnp.float32))

    y, _ = jax.lax.fori_loop(0, _NS_ITERS, ns_step, (y0, eye), unroll=True)
    tr_covmean = jnp.sum(y * eye) * jnp.sqrt(norm_a)

    fid = partial - 2.0 * tr_covmean
    fid_mat = fid * jnp.ones((1, 1), jnp.float32)
    fid_ref[...] = fid_mat

    # 4. defense decision (threshold lives in a (1,1) input block)
    trig = fid_mat > thre_ref[...]          # (1,1) bool
    def_ref[...] = trig.astype(jnp.int32)

    # 5. speculative classifier on both real and random features, then select.
    wc = wc_ref[...]
    bc = bc_ref[...]
    logits_feat = jnp.dot(feat, wc, preferred_element_type=jnp.float32) + bc
    logits_rand = jnp.dot(rand_ref[...], wc, preferred_element_type=jnp.float32) + bc
    sel = trig.astype(jnp.float32)          # (1,1) -> broadcast over (N, classes)
    logits_ref[...] = sel * logits_rand + (1.0 - sel) * logits_feat


def _fused_forward(x_bf16, w_feat_bf16, b_feat, mu1, s1, s1_half,
                   rand_feat, w_cls, b_cls, thre):
    n = x_bf16.shape[0]
    nc = w_cls.shape[1]
    return pl.pallas_call(
        _fused_kernel,
        grid=(1,),
        in_specs=[
            _spec(x_bf16.shape), _spec(w_feat_bf16.shape), _spec(b_feat.shape),
            _spec(mu1.shape), _spec(s1.shape), _spec(s1_half.shape),
            _spec(rand_feat.shape), _spec(w_cls.shape), _spec(b_cls.shape),
            _spec(thre.shape),
        ],
        out_specs=(_spec((n, nc)), _spec((1, 1)), _spec((1, 1))),
        out_shape=(
            jax.ShapeDtypeStruct((n, nc), jnp.float32),
            jax.ShapeDtypeStruct((1, 1), jnp.float32),
            jax.ShapeDtypeStruct((1, 1), jnp.int32),
        ),
    )(x_bf16, w_feat_bf16, b_feat, mu1, s1, s1_half, rand_feat, w_cls, b_cls, thre)


# ---------------- forward (thin glue) ----------------

@functools.partial(jax.jit, static_argnames=("signal",))
def patch_plugin_forward(x, w_feat, b_feat, w_cls, b_cls,
                         ref_mean, ref_cova, s1_half,
                         inter_thre, noise_key, signal=False):
    n = x.shape[0]
    dims = w_feat.shape[1]
    x_flat = x.reshape(n, -1)

    # bf16 MXU operands for the K=1024 matmul; stats/FID stay f32 in-kernel.
    x_bf16 = x_flat.astype(jnp.bfloat16)
    w_feat_bf16 = w_feat.astype(jnp.bfloat16)

    # feat <- randn(feat.shape) candidate (selected in-kernel if FID > thre).
    # TODO(synk): could be generated in-kernel with the stateful PRNG; kept as
    # a tiny (N, dims) input since it is off the critical path.
    rand_feat = jax.random.normal(noise_key, (n, dims), jnp.float32)

    thre = jnp.full((1, 1), inter_thre, jnp.float32)

    logits, _fid, defenced = _fused_forward(
        x_bf16, w_feat_bf16, b_feat, ref_mean, ref_cova, s1_half,
        rand_feat, w_cls, b_cls, thre)

    if signal:
        return logits, defenced[0, 0]
    return logits


# TODO(synk): the window_size > 0 branch (deque of past inputs fed from a
# DataLoader) is host-side stateful bookkeeping with no Pallas equivalent;
# only the window_size == 0 forward path is implemented.


if __name__ == "__main__":
    N, C, H, W = 2, 4, 16, 16
    DIMS = 32
    NUM_CLASSES = 10
    INTER_THRE = 1.0e6  # threshold for the FID defense trigger

    key = jax.random.PRNGKey(0)
    kx, kw, kc, km, ks, kn = jax.random.split(key, 6)

    x = jax.random.normal(kx, (N, C, H, W), jnp.float32)

    in_features = C * H * W
    # deterministic synthetic parameters (victim rep head + classifier)
    w_feat = jax.random.normal(kw, (in_features, DIMS), jnp.float32) * 0.02
    b_feat = jnp.zeros((1, DIMS), jnp.float32)
    w_cls = jax.random.normal(kc, (DIMS, NUM_CLASSES), jnp.float32) * 0.1
    b_cls = jnp.zeros((1, NUM_CLASSES), jnp.float32)

    # reference statistics (self.mean, self.cova) — PSD covariance
    ref_mean = (jax.random.normal(km, (DIMS,), jnp.float32) * 0.1).reshape(1, DIMS)
    a = jax.random.normal(ks, (DIMS, DIMS), jnp.float32)
    ref_cova = (a @ a.T) / DIMS + 0.1 * jnp.eye(DIMS, dtype=jnp.float32)
    # cova^{1/2} is a fixed parameter: precompute once, off the forward path.
    ew, ev = jnp.linalg.eigh(ref_cova)
    s1_half = (ev * jnp.sqrt(jnp.clip(ew, 0.0, None))) @ ev.T

    logits, defenced = patch_plugin_forward(
        x, w_feat, b_feat, w_cls, b_cls,
        ref_mean, ref_cova, s1_half,
        INTER_THRE, noise_key=kn, signal=True,
    )
    jax.block_until_ready(logits)
    jax.block_until_ready(defenced)
    assert logits.shape == (N, NUM_CLASSES)
    assert defenced.shape == ()
    print("KERNEL_OK")
</pallas_src>

<mosaic_0001>
module attributes {stable_mosaic.version = 11 : i64} {
  func.func @_fused_kernel(%arg0: i32, %arg1: memref<2x1024xbf16, #tpu.memory_space<vmem>>, %arg2: memref<1024x32xbf16, #tpu.memory_space<vmem>>, %arg3: memref<1x32xf32, #tpu.memory_space<vmem>>, %arg4: memref<1x32xf32, #tpu.memory_space<vmem>>, %arg5: memref<32x32xf32, #tpu.memory_space<vmem>>, %arg6: memref<32x32xf32, #tpu.memory_space<vmem>>, %arg7: memref<2x32xf32, #tpu.memory_space<vmem>>, %arg8: memref<32x10xf32, #tpu.memory_space<vmem>>, %arg9: memref<1x10xf32, #tpu.memory_space<vmem>>, %arg10: memref<1x1xf32, #tpu.memory_space<vmem>>, %arg11: memref<2x10xf32, #tpu.memory_space<vmem>>, %arg12: memref<1x1xf32, #tpu.memory_space<vmem>>, %arg13: memref<1x1xi32, #tpu.memory_space<vmem>>) attributes {dimension_semantics = [#tpu.dimension_semantics<arbitrary>], iteration_bounds = array<i64: 1>, scalar_prefetch = 0 : i64, scratch_operands = 0 : i64, tpu.core_type = #tpu.core_type<tc>, window_params = [{pipeline_mode = #tpu.pipeline_mode<synchronous>, transform_indices = @transform_0, window_bounds = array<i64: 2, 1024>}, {pipeline_mode = #tpu.pipeline_mode<synchronous>, transform_indices = @transform_1, window_bounds = array<i64: 1024, 32>}, {pipeline_mode = #tpu.pipeline_mode<synchronous>, transform_indices = @transform_2, window_bounds = array<i64: 1, 32>}, {pipeline_mode = #tpu.pipeline_mode<synchronous>, transform_indices = @transform_3, window_bounds = array<i64: 1, 32>}, {pipeline_mode = #tpu.pipeline_mode<synchronous>, transform_indices = @transform_4, window_bounds = array<i64: 32, 32>}, {pipeline_mode = #tpu.pipeline_mode<synchronous>, transform_indices = @transform_5, window_bounds = array<i64: 32, 32>}, {pipeline_mode = #tpu.pipeline_mode<synchronous>, transform_indices = @transform_6, window_bounds = array<i64: 2, 32>}, {pipeline_mode = #tpu.pipeline_mode<synchronous>, transform_indices = @transform_7, window_bounds = array<i64: 32, 10>}, {pipeline_mode = #tpu.pipeline_mode<synchronous>, transform_indices = @transform_8, window_bounds = array<i64: 1, 10>}, {pipeline_mode = #tpu.pipeline_mode<synchronous>, transform_indices = @transform_9, window_bounds = array<i64: 1, 1>}, {pipeline_mode = #tpu.pipeline_mode<synchronous>, transform_indices = @transform_10, window_bounds = array<i64: 2, 10>}, {pipeline_mode = #tpu.pipeline_mode<synchronous>, transform_indices = @transform_11, window_bounds = array<i64: 1, 1>}, {pipeline_mode = #tpu.pipeline_mode<synchronous>, transform_indices = @transform_12, window_bounds = array<i64: 1, 1>}]} {
    %c0 = arith.constant 0 : index
    %c0_0 = arith.constant 0 : index
    %0 = vector.load %arg1[%c0, %c0_0] : memref<2x1024xbf16, #tpu.memory_space<vmem>>, vector<2x1024xbf16>
    %c0_1 = arith.constant 0 : index
    %c0_2 = arith.constant 0 : index
    %1 = vector.load %arg2[%c0_1, %c0_2] : memref<1024x32xbf16, #tpu.memory_space<vmem>>, vector<1024x32xbf16>
    %cst = arith.constant dense<0.000000e+00> : vector<2x32xf32>
    %2 = tpu.matmul %0, %1, %cst {dimension_numbers = #tpu.dot_dimension_numbers<[1], [0], [0], [1], [0, 0, 1, 1], [], []>} : vector<2x1024xbf16>, vector<1024x32xbf16>, vector<2x32xf32> -> vector<2x32xf32>
    %c0_3 = arith.constant 0 : index
    %c0_4 = arith.constant 0 : index
    %3 = vector.load %arg3[%c0_3, %c0_4] : memref<1x32xf32, #tpu.memory_space<vmem>>, vector<1x32xf32>
    %4 = vector.broadcast %3 : vector<1x32xf32> to vector<2x32xf32>
    %5 = arith.addf %2, %4 : vector<2x32xf32>
    %cst_5 = arith.constant 0.000000e+00 : f32
    %6 = vector.broadcast %cst_5 : f32 to vector<2x32xf32>
    %7 = arith.maximumf %5, %6 : vector<2x32xf32>
    %cst_6 = arith.constant dense<0.000000e+00> : vector<32xf32>
    %8 = vector.multi_reduction <add>, %7, %cst_6 [0] : vector<2x32xf32> to vector<32xf32>
    %9 = vector.shape_cast %8 : vector<32xf32> to vector<1x32xf32>
    %cst_7 = arith.constant 5.000000e-01 : f32
    %10 = vector.broadcast %cst_7 : f32 to vector<1x32xf32>
    %11 = arith.mulf %9, %10 : vector<1x32xf32>
    %12 = vector.broadcast %11 : vector<1x32xf32> to vector<2x32xf32>
    %13 = arith.subf %7, %12 : vector<2x32xf32>
    %cst_8 = arith.constant dense<0.000000e+00> : vector<32x32xf32>
    %14 = tpu.matmul %13, %13, %cst_8 {dimension_numbers = #tpu.dot_dimension_numbers<[0], [0], [1], [1], [0, 1, 1, 1], [], []>} : vector<2x32xf32>, vector<2x32xf32>, vector<32x32xf32> -> vector<32x32xf32>
    %cst_9 = arith.constant 1.000000e+00 : f32
    %15 = vector.broadcast %cst_9 : f32 to vector<32x32xf32>
    %16 = arith.mulf %14, %15 : vector<32x32xf32>
    %17 = tpu.iota {dimensions = array<i32: 0>} : vector<32x32xi32>
    %18 = tpu.iota {dimensions = array<i32: 1>} : vector<32x32xi32>
    %19 = arith.cmpi eq, %17, %18 : vector<32x32xi32>
    %20 = arith.extui %19 : vector<32x32xi1> to vector<32x32xi32>
    %21 = arith.sitofp %20 : vector<32x32xi32> to vector<32x32xf32>
    %c0_10 = arith.constant 0 : index
    %c0_11 = arith.constant 0 : index
    %22 = vector.load %arg4[%c0_10, %c0_11] : memref<1x32xf32, #tpu.memory_space<vmem>>, vector<1x32xf32>
    %23 = arith.subf %22, %11 : vector<1x32xf32>
    %c0_12 = arith.constant 0 : index
    %c0_13 = arith.constant 0 : index
    %24 = vector.load %arg5[%c0_12, %c0_13] : memref<32x32xf32, #tpu.memory_space<vmem>>, vector<32x32xf32>
    %25 = arith.mulf %23, %23 : vector<1x32xf32>
    %26 = vector.shape_cast %25 : vector<1x32xf32> to vector<1x1x32xf32>
    %cst_14 = arith.constant dense<0.000000e+00> : vector<1xf32>
    %27 = vector.multi_reduction <add>, %26, %cst_14 [1, 2] : vector<1x1x32xf32> to vector<1xf32>
    %28 = vector.shape_cast %27 : vector<1xf32> to vector<1x1x1xf32>
    %29 = vector.extract %28[0, 0, 0] : f32 from vector<1x1x1xf32>
    %30 = arith.addf %24, %16 : vector<32x32xf32>
    %31 = arith.mulf %30, %21 : vector<32x32xf32>
    %32 = vector.shape_cast %31 : vector<32x32xf32> to vector<1x32x32xf32>
    %cst_15 = arith.constant dense<0.000000e+00> : vector<1xf32>
    %33 = vector.multi_reduction <add>, %32, %cst_15 [1, 2] : vector<1x32x32xf32> to vector<1xf32>
    %34 = vector.shape_cast %33 : vector<1xf32> to vector<1x1x1xf32>
    %35 = vector.extract %34[0, 0, 0] : f32 from vector<1x1x1xf32>
    %36 = arith.addf %29, %35 : f32
    %c0_16 = arith.constant 0 : index
    %c0_17 = arith.constant 0 : index
    %37 = vector.load %arg6[%c0_16, %c0_17] : memref<32x32xf32, #tpu.memory_space<vmem>>, vector<32x32xf32>
    %cst_18 = arith.constant dense<0.000000e+00> : vector<32x32xf32>
    %38 = tpu.matmul %37, %16, %cst_18 {dimension_numbers = #tpu.dot_dimension_numbers<[1], [0], [0], [1], [0, 0, 1, 1], [], []>} : vector<32x32xf32>, vector<32x32xf32>, vector<32x32xf32> -> vector<32x32xf32>
    %cst_19 = arith.constant dense<0.000000e+00> : vector<32x32xf32>
    %39 = tpu.matmul %38, %37, %cst_19 {dimension_numbers = #tpu.dot_dimension_numbers<[1], [0], [0], [1], [0, 0, 1, 1], [], []>} : vector<32x32xf32>, vector<32x32xf32>, vector<32x32xf32> -> vector<32x32xf32>
    %40 = arith.mulf %39, %39 : vector<32x32xf32>
    %41 = vector.shape_cast %40 : vector<32x32xf32> to vector<1x32x32xf32>
    %cst_20 = arith.constant dense<0.000000e+00> : vector<1xf32>
    %42 = vector.multi_reduction <add>, %41, %cst_20 [1, 2] : vector<1x32x32xf32> to vector<1xf32>
    %43 = vector.shape_cast %42 : vector<1xf32> to vector<1x1x1xf32>
    %44 = vector.extract %43[0, 0, 0] : f32 from vector<1x1x1xf32>
    %45 = math.sqrt %44 : f32
    %cst_21 = arith.constant 9.99999996E-13 : f32
    %46 = arith.addf %45, %cst_21 : f32
    %cst_22 = arith.constant 1.000000e+00 : f32
    %47 = arith.divf %cst_22, %46 : f32
    %48 = vector.broadcast %47 : f32 to vector<32x32xf32>
    %49 = arith.mulf %39, %48 : vector<32x32xf32>
    %c0_i32 = arith.constant 0 : i32
    %cst_23 = arith.constant 3.000000e+00 : f32
    %50 = vector.broadcast %cst_23 : f32 to vector<32x32xf32>
    %51 = arith.mulf %50, %21 : vector<32x32xf32>
    %cst_24 = arith.constant dense<0.000000e+00> : vector<32x32xf32>
    %52 = tpu.matmul %21, %49, %cst_24 {dimension_numbers = #tpu.dot_dimension_numbers<[1], [0], [0], [1], [0, 0, 1, 1], [], []>} : vector<32x32xf32>, vector<32x32xf32>, vector<32x32xf32> -> vector<32x32xf32>
    %53 = arith.subf %51, %52 : vector<32x32xf32>
    %cst_25 = arith.constant 5.000000e-01 : f32
    %54 = vector.broadcast %cst_25 : f32 to vector<32x32xf32>
    %55 = arith.mulf %54, %53 : vector<32x32xf32>
    %cst_26 = arith.constant dense<0.000000e+00> : vector<32x32xf32>
    %56 = tpu.matmul %49, %55, %cst_26 {dimension_numbers = #tpu.dot_dimension_numbers<[1], [0], [0], [1], [0, 0, 1, 1], [], []>} : vector<32x32xf32>, vector<32x32xf32>, vector<32x32xf32> -> vector<32x32xf32>
    %cst_27 = arith.constant dense<0.000000e+00> : vector<32x32xf32>
    %57 = tpu.matmul %55, %21, %cst_27 {dimension_numbers = #tpu.dot_dimension_numbers<[1], [0], [0], [1], [0, 0, 1, 1], [], []>} : vector<32x32xf32>, vector<32x32xf32>, vector<32x32xf32> -> vector<32x32xf32>
    %c1_i32 = arith.constant 1 : i32
    %cst_28 = arith.constant 3.000000e+00 : f32
    %58 = vector.broadcast %cst_28 : f32 to vector<32x32xf32>
    %59 = arith.mulf %58, %21 : vector<32x32xf32>
    %cst_29 = arith.constant dense<0.000000e+00> : vector<32x32xf32>
    %60 = tpu.matmul %57, %56, %cst_29 {dimension_numbers = #tpu.dot_dimension_numbers<[1], [0], [0], [1], [0, 0, 1, 1], [], []>} : vector<32x32xf32>, vector<32x32xf32>, vector<32x32xf32> -> vector<32x32xf32>
    %61 = arith.subf %59, %60 : vector<32x32xf32>
    %cst_30 = arith.constant 5.000000e-01 : f32
    %62 = vector.broadcast %cst_30 : f32 to vector<32x32xf32>
    %63 = arith.mulf %62, %61 : vector<32x32xf32>
    %cst_31 = arith.constant dense<0.000000e+00> : vector<32x32xf32>
    %64 = tpu.matmul %56, %63, %cst_31 {dimension_numbers = #tpu.dot_dimension_numbers<[1], [0], [0], [1], [0, 0, 1, 1], [], []>} : vector<32x32xf32>, vector<32x32xf32>, vector<32x32xf32> -> vector<32x32xf32>
    %cst_32 = arith.constant dense<0.000000e+00> : vector<32x32xf32>
    %65 = tpu.matmul %63, %57, %cst_32 {dimension_numbers = #tpu.dot_dimension_numbers<[1], [0], [0], [1], [0, 0, 1, 1], [], []>} : vector<32x32xf32>, vector<32x32xf32>, vector<32x32xf32> -> vector<32x32xf32>
    %c2_i32 = arith.constant 2 : i32
    %cst_33 = arith.constant 3.000000e+00 : f32
    %66 = vector.broadcast %cst_33 : f32 to vector<32x32xf32>
    %67 = arith.mulf %66, %21 : vector<32x32xf32>
    %cst_34 = arith.constant dense<0.000000e+00> : vector<32x32xf32>
    %68 = tpu.matmul %65, %64, %cst_34 {dimension_numbers = #tpu.dot_dimension_numbers<[1], [0], [0], [1], [0, 0, 1, 1], [], []>} : vector<32x32xf32>, vector<32x32xf32>, vector<32x32xf32> -> vector<32x32xf32>
    %69 = arith.subf %67, %68 : vector<32x32xf32>
    %cst_35 = arith.constant 5.000000e-01 : f32
    %70 = vector.broadcast %cst_35 : f32 to vector<32x32xf32>
    %71 = arith.mulf %70, %69 : vector<32x32xf32>
    %cst_36 = arith.constant dense<0.000000e+00> : vector<32x32xf32>
    %72 = tpu.matmul %64, %71, %cst_36 {dimension_numbers = #tpu.dot_dimension_numbers<[1], [0], [0], [1], [0, 0, 1, 1], [], []>} : vector<32x32xf32>, vector<32x32xf32>, vector<32x32xf32> -> vector<32x32xf32>
    %cst_37 = arith.constant dense<0.000000e+00> : vector<32x32xf32>
    %73 = tpu.matmul %71, %65, %cst_37 {dimension_numbers = #tpu.dot_dimension_numbers<[1], [0], [0], [1], [0, 0, 1, 1], [], []>} : vector<32x32xf32>, vector<32x32xf32>, vector<32x32xf32> -> vector<32x32xf32>
    %c3_i32 = arith.constant 3 : i32
    %cst_38 = arith.constant 3.000000e+00 : f32
    %74 = vector.broadcast %cst_38 : f32 to vector<32x32xf32>
    %75 = arith.mulf %74, %21 : vector<32x32xf32>
    %cst_39 = arith.constant dense<0.000000e+00> : vector<32x32xf32>
    %76 = tpu.matmul %73, %72, %cst_39 {dimension_numbers = #tpu.dot_dimension_numbers<[1], [0], [0], [1], [0, 0, 1, 1], [], []>} : vector<32x32xf32>, vector<32x32xf32>, vector<32x32xf32> -> vector<32x32xf32>
    %77 = arith.subf %75, %76 : vector<32x32xf32>
    %cst_40 = arith.constant 5.000000e-01 : f32
    %78 = vector.broadcast %cst_40 : f32 to vector<32x32xf32>
    %79 = arith.mulf %78, %77 : vector<32x32xf32>
    %cst_41 = arith.constant dense<0.000000e+00> : vector<32x32xf32>
    %80 = tpu.matmul %72, %79, %cst_41 {dimension_numbers = #tpu.dot_dimension_numbers<[1], [0], [0], [1], [0, 0, 1, 1], [], []>} : vector<32x32xf32>, vector<32x32xf32>, vector<32x32xf32> -> vector<32x32xf32>
    %cst_42 = arith.constant dense<0.000000e+00> : vector<32x32xf32>
    %81 = tpu.matmul %79, %73, %cst_42 {dimension_numbers = #tpu.dot_dimension_numbers<[1], [0], [0], [1], [0, 0, 1, 1], [], []>} : vector<32x32xf32>, vector<32x32xf32>, vector<32x32xf32> -> vector<32x32xf32>
    %c4_i32 = arith.constant 4 : i32
    %cst_43 = arith.constant 3.000000e+00 : f32
    %82 = vector.broadcast %cst_43 : f32 to vector<32x32xf32>
    %83 = arith.mulf %82, %21 : vector<32x32xf32>
    %cst_44 = arith.constant dense<0.000000e+00> : vector<32x32xf32>
    %84 = tpu.matmul %81, %80, %cst_44 {dimension_numbers = #tpu.dot_dimension_numbers<[1], [0], [0], [1], [0, 0, 1, 1], [], []>} : vector<32x32xf32>, vector<32x32xf32>, vector<32x32xf32> -> vector<32x32xf32>
    %85 = arith.subf %83, %84 : vector<32x32xf32>
    %cst_45 = arith.constant 5.000000e-01 : f32
    %86 = vector.broadcast %cst_45 : f32 to vector<32x32xf32>
    %87 = arith.mulf %86, %85 : vector<32x32xf32>
    %cst_46 = arith.constant dense<0.000000e+00> : vector<32x32xf32>
    %88 = tpu.matmul %80, %87, %cst_46 {dimension_numbers = #tpu.dot_dimension_numbers<[1], [0], [0], [1], [0, 0, 1, 1], [], []>} : vector<32x32xf32>, vector<32x32xf32>, vector<32x32xf32> -> vector<32x32xf32>
    %cst_47 = arith.constant dense<0.000000e+00> : vector<32x32xf32>
    %89 = tpu.matmul %87, %81, %cst_47 {dimension_numbers = #tpu.dot_dimension_numbers<[1], [0], [0], [1], [0, 0, 1, 1], [], []>} : vector<32x32xf32>, vector<32x32xf32>, vector<32x32xf32> -> vector<32x32xf32>
    %c5_i32 = arith.constant 5 : i32
    %cst_48 = arith.constant 3.000000e+00 : f32
    %90 = vector.broadcast %cst_48 : f32 to vector<32x32xf32>
    %91 = arith.mulf %90, %21 : vector<32x32xf32>
    %cst_49 = arith.constant dense<0.000000e+00> : vector<32x32xf32>
    %92 = tpu.matmul %89, %88, %cst_49 {dimension_numbers = #tpu.dot_dimension_numbers<[1], [0], [0], [1], [0, 0, 1, 1], [], []>} : vector<32x32xf32>, vector<32x32xf32>, vector<32x32xf32> -> vector<32x32xf32>
    %93 = arith.subf %91, %92 : vector<32x32xf32>
    %cst_50 = arith.constant 5.000000e-01 : f32
    %94 = vector.broadcast %cst_50 : f32 to vector<32x32xf32>
    %95 = arith.mulf %94, %93 : vector<32x32xf32>
    %cst_51 = arith.constant dense<0.000000e+00> : vector<32x32xf32>
    %96 = tpu.matmul %88, %95, %cst_51 {dimension_numbers = #tpu.dot_dimension_numbers<[1], [0], [0], [1], [0, 0, 1, 1], [], []>} : vector<32x32xf32>, vector<32x32xf32>, vector<32x32xf32> -> vector<32x32xf32>
    %cst_52 = arith.constant dense<0.000000e+00> : vector<32x32xf32>
    %97 = tpu.matmul %95, %89, %cst_52 {dimension_numbers = #tpu.dot_dimension_numbers<[1], [0], [0], [1], [0, 0, 1, 1], [], []>} : vector<32x32xf32>, vector<32x32xf32>, vector<32x32xf32> -> vector<32x32xf32>
    %c6_i32 = arith.constant 6 : i32
    %cst_53 = arith.constant 3.000000e+00 : f32
    %98 = vector.broadcast %cst_53 : f32 to vector<32x32xf32>
    %99 = arith.mulf %98, %21 : vector<32x32xf32>
    %cst_54 = arith.constant dense<0.000000e+00> : vector<32x32xf32>
    %100 = tpu.matmul %97, %96, %cst_54 {dimension_numbers = #tpu.dot_dimension_numbers<[1], [0], [0], [1], [0, 0, 1, 1], [], []>} : vector<32x32xf32>, vector<32x32xf32>, vector<32x32xf32> -> vector<32x32xf32>
    %101 = arith.subf %99, %100 : vector<32x32xf32>
    %cst_55 = arith.constant 5.000000e-01 : f32
    %102 = vector.broadcast %cst_55 : f32 to vector<32x32xf32>
    %103 = arith.mulf %102, %101 : vector<32x32xf32>
    %cst_56 = arith.constant dense<0.000000e+00> : vector<32x32xf32>
    %104 = tpu.matmul %96, %103, %cst_56 {dimension_numbers = #tpu.dot_dimension_numbers<[1], [0], [0], [1], [0, 0, 1, 1], [], []>} : vector<32x32xf32>, vector<32x32xf32>, vector<32x32xf32> -> vector<32x32xf32>
    %cst_57 = arith.constant dense<0.000000e+00> : vector<32x32xf32>
    %105 = tpu.matmul %103, %97, %cst_57 {dimension_numbers = #tpu.dot_dimension_numbers<[1], [0], [0], [1], [0, 0, 1, 1], [], []>} : vector<32x32xf32>, vector<32x32xf32>, vector<32x32xf32> -> vector<32x32xf32>
    %c7_i32 = arith.constant 7 : i32
    %cst_58 = arith.constant 3.000000e+00 : f32
    %106 = vector.broadcast %cst_58 : f32 to vector<32x32xf32>
    %107 = arith.mulf %106, %21 : vector<32x32xf32>
    %cst_59 = arith.constant dense<0.000000e+00> : vector<32x32xf32>
    %108 = tpu.matmul %105, %104, %cst_59 {dimension_numbers = #tpu.dot_dimension_numbers<[1], [0], [0], [1], [0, 0, 1, 1], [], []>} : vector<32x32xf32>, vector<32x32xf32>, vector<32x32xf32> -> vector<32x32xf32>
    %109 = arith.subf %107, %108 : vector<32x32xf32>
    %cst_60 = arith.constant 5.000000e-01 : f32
    %110 = vector.broadcast %cst_60 : f32 to vector<32x32xf32>
    %111 = arith.mulf %110, %109 : vector<32x32xf32>
    %cst_61 = arith.constant dense<0.000000e+00> : vector<32x32xf32>
    %112 = tpu.matmul %104, %111, %cst_61 {dimension_numbers = #tpu.dot_dimension_numbers<[1], [0], [0], [1], [0, 0, 1, 1], [], []>} : vector<32x32xf32>, vector<32x32xf32>, vector<32x32xf32> -> vector<32x32xf32>
    %cst_62 = arith.constant dense<0.000000e+00> : vector<32x32xf32>
    %113 = tpu.matmul %111, %105, %cst_62 {dimension_numbers = #tpu.dot_dimension_numbers<[1], [0], [0], [1], [0, 0, 1, 1], [], []>} : vector<32x32xf32>, vector<32x32xf32>, vector<32x32xf32> -> vector<32x32xf32>
    %c8_i32 = arith.constant 8 : i32
    %cst_63 = arith.constant 3.000000e+00 : f32
    %114 = vector.broadcast %cst_63 : f32 to vector<32x32xf32>
    %115 = arith.mulf %114, %21 : vector<32x32xf32>
    %cst_64 = arith.constant dense<0.000000e+00> : vector<32x32xf32>
    %116 = tpu.matmul %113, %112, %cst_64 {dimension_numbers = #tpu.dot_dimension_numbers<[1], [0], [0], [1], [0, 0, 1, 1], [], []>} : vector<32x32xf32>, vector<32x32xf32>, vector<32x32xf32> -> vector<32x32xf32>
    %117 = arith.subf %115, %116 : vector<32x32xf32>
    %cst_65 = arith.constant 5.000000e-01 : f32
    %118 = vector.broadcast %cst_65 : f32 to vector<32x32xf32>
    %119 = arith.mulf %118, %117 : vector<32x32xf32>
    %cst_66 = arith.constant dense<0.000000e+00> : vector<32x32xf32>
    %120 = tpu.matmul %112, %119, %cst_66 {dimension_numbers = #tpu.dot_dimension_numbers<[1], [0], [0], [1], [0, 0, 1, 1], [], []>} : vector<32x32xf32>, vector<32x32xf32>, vector<32x32xf32> -> vector<32x32xf32>
    %cst_67 = arith.constant dense<0.000000e+00> : vector<32x32xf32>
    %121 = tpu.matmul %119, %113, %cst_67 {dimension_numbers = #tpu.dot_dimension_numbers<[1], [0], [0], [1], [0, 0, 1, 1], [], []>} : vector<32x32xf32>, vector<32x32xf32>, vector<32x32xf32> -> vector<32x32xf32>
    %c9_i32 = arith.constant 9 : i32
    %cst_68 = arith.constant 3.000000e+00 : f32
    %122 = vector.broadcast %cst_68 : f32 to vector<32x32xf32>
    %123 = arith.mulf %122, %21 : vector<32x32xf32>
    %cst_69 = arith.constant dense<0.000000e+00> : vector<32x32xf32>
    %124 = tpu.matmul %121, %120, %cst_69 {dimension_numbers = #tpu.dot_dimension_numbers<[1], [0], [0], [1], [0, 0, 1, 1], [], []>} : vector<32x32xf32>, vector<32x32xf32>, vector<32x32xf32> -> vector<32x32xf32>
    %125 = arith.subf %123, %124 : vector<32x32xf32>
    %cst_70 = arith.constant 5.000000e-01 : f32
    %126 = vector.broadcast %cst_70 : f32 to vector<32x32xf32>
    %127 = arith.mulf %126, %125 : vector<32x32xf32>
    %cst_71 = arith.constant dense<0.000000e+00> : vector<32x32xf32>
    %128 = tpu.matmul %120, %127, %cst_71 {dimension_numbers = #tpu.dot_dimension_numbers<[1], [0], [0], [1], [0, 0, 1, 1], [], []>} : vector<32x32xf32>, vector<32x32xf32>, vector<32x32xf32> -> vector<32x32xf32>
    %cst_72 = arith.constant dense<0.000000e+00> : vector<32x32xf32>
    %129 = tpu.matmul %127, %121, %cst_72 {dimension_numbers = #tpu.dot_dimension_numbers<[1], [0], [0], [1], [0, 0, 1, 1], [], []>} : vector<32x32xf32>, vector<32x32xf32>, vector<32x32xf32> -> vector<32x32xf32>
    %c10_i32 = arith.constant 10 : i32
    %cst_73 = arith.constant 3.000000e+00 : f32
    %130 = vector.broadcast %cst_73 : f32 to vector<32x32xf32>
    %131 = arith.mulf %130, %21 : vector<32x32xf32>
    %cst_74 = arith.constant dense<0.000000e+00> : vector<32x32xf32>
    %132 = tpu.matmul %129, %128, %cst_74 {dimension_numbers = #tpu.dot_dimension_numbers<[1], [0], [0], [1], [0, 0, 1, 1], [], []>} : vector<32x32xf32>, vector<32x32xf32>, vector<32x32xf32> -> vector<32x32xf32>
    %133 = arith.subf %131, %132 : vector<32x32xf32>
    %cst_75 = arith.constant 5.000000e-01 : f32
    %134 = vector.broadcast %cst_75 : f32 to vector<32x32xf32>
    %135 = arith.mulf %134, %133 : vector<32x32xf32>
    %cst_76 = arith.constant dense<0.000000e+00> : vector<32x32xf32>
    %136 = tpu.matmul %128, %135, %cst_76 {dimension_numbers = #tpu.dot_dimension_numbers<[1], [0], [0], [1], [0, 0, 1, 1], [], []>} : vector<32x32xf32>, vector<32x32xf32>, vector<32x32xf32> -> vector<32x32xf32>
    %cst_77 = arith.constant dense<0.000000e+00> : vector<32x32xf32>
    %137 = tpu.matmul %135, %129, %cst_77 {dimension_numbers = #tpu.dot_dimension_numbers<[1], [0], [0], [1], [0, 0, 1, 1], [], []>} : vector<32x32xf32>, vector<32x32xf32>, vector<32x32xf32> -> vector<32x32xf32>
    %c11_i32 = arith.constant 11 : i32
    %cst_78 = arith.constant 3.000000e+00 : f32
    %138 = vector.broadcast %cst_78 : f32 to vector<32x32xf32>
    %139 = arith.mulf %138, %21 : vector<32x32xf32>
    %cst_79 = arith.constant dense<0.000000e+00> : vector<32x32xf32>
    %140 = tpu.matmul %137, %136, %cst_79 {dimension_numbers = #tpu.dot_dimension_numbers<[1], [0], [0], [1], [0, 0, 1, 1], [], []>} : vector<32x32xf32>, vector<32x32xf32>, vector<32x32xf32> -> vector<32x32xf32>
    %141 = arith.subf %139, %140 : vector<32x32xf32>
    %cst_80 = arith.constant 5.000000e-01 : f32
    %142 = vector.broadcast %cst_80 : f32 to vector<32x32xf32>
    %143 = arith.mulf %142, %141 : vector<32x32xf32>
    %cst_81 = arith.constant dense<0.000000e+00> : vector<32x32xf32>
    %144 = tpu.matmul %136, %143, %cst_81 {dimension_numbers = #tpu.dot_dimension_numbers<[1], [0], [0], [1], [0, 0, 1, 1], [], []>} : vector<32x32xf32>, vector<32x32xf32>, vector<32x32xf32> -> vector<32x32xf32>
    %cst_82 = arith.constant dense<0.000000e+00> : vector<32x32xf32>
    %145 = tpu.matmul %143, %137, %cst_82 {dimension_numbers = #tpu.dot_dimension_numbers<[1], [0], [0], [1], [0, 0, 1, 1], [], []>} : vector<32x32xf32>, vector<32x32xf32>, vector<32x32xf32> -> vector<32x32xf32>
    %c12_i32 = arith.constant 12 : i32
    %cst_83 = arith.constant 3.000000e+00 : f32
    %146 = vector.broadcast %cst_83 : f32 to vector<32x32xf32>
    %147 = arith.mulf %146, %21 : vector<32x32xf32>
    %cst_84 = arith.constant dense<0.000000e+00> : vector<32x32xf32>
    %148 = tpu.matmul %145, %144, %cst_84 {dimension_numbers = #tpu.dot_dimension_numbers<[1], [0], [0], [1], [0, 0, 1, 1], [], []>} : vector<32x32xf32>, vector<32x32xf32>, vector<32x32xf32> -> vector<32x32xf32>
    %149 = arith.subf %147, %148 : vector<32x32xf32>
    %cst_85 = arith.constant 5.000000e-01 : f32
    %150 = vector.broadcast %cst_85 : f32 to vector<32x32xf32>
    %151 = arith.mulf %150, %149 : vector<32x32xf32>
    %cst_86 = arith.constant dense<0.000000e+00> : vector<32x32xf32>
    %152 = tpu.matmul %144, %151, %cst_86 {dimension_numbers = #tpu.dot_dimension_numbers<[1], [0], [0], [1], [0, 0, 1, 1], [], []>} : vector<32x32xf32>, vector<32x32xf32>, vector<32x32xf32> -> vector<32x32xf32>
    %cst_87 = arith.constant dense<0.000000e+00> : vector<32x32xf32>
    %153 = tpu.matmul %151, %145, %cst_87 {dimension_numbers = #tpu.dot_dimension_numbers<[1], [0], [0], [1], [0, 0, 1, 1], [], []>} : vector<32x32xf32>, vector<32x32xf32>, vector<32x32xf32> -> vector<32x32xf32>
    %c13_i32 = arith.constant 13 : i32
    %cst_88 = arith.constant 3.000000e+00 : f32
    %154 = vector.broadcast %cst_88 : f32 to vector<32x32xf32>
    %155 = arith.mulf %154, %21 : vector<32x32xf32>
    %cst_89 = arith.constant dense<0.000000e+00> : vector<32x32xf32>
    %156 = tpu.matmul %153, %152, %cst_89 {dimension_numbers = #tpu.dot_dimension_numbers<[1], [0], [0], [1], [0, 0, 1, 1], [], []>} : vector<32x32xf32>, vector<32x32xf32>, vector<32x32xf32> -> vector<32x32xf32>
    %157 = arith.subf %155, %156 : vector<32x32xf32>
    %cst_90 = arith.constant 5.000000e-01 : f32
    %158 = vector.broadcast %cst_90 : f32 to vector<32x32xf32>
    %159 = arith.mulf %158, %157 : vector<32x32xf32>
    %cst_91 = arith.constant dense<0.000000e+00> : vector<32x32xf32>
    %160 = tpu.matmul %152, %159, %cst_91 {dimension_numbers = #tpu.dot_dimension_numbers<[1], [0], [0], [1], [0, 0, 1, 1], [], []>} : vector<32x32xf32>, vector<32x32xf32>, vector<32x32xf32> -> vector<32x32xf32>
    %cst_92 = arith.constant dense<0.000000e+00> : vector<32x32xf32>
    %161 = tpu.matmul %159, %153, %cst_92 {dimension_numbers = #tpu.dot_dimension_numbers<[1], [0], [0], [1], [0, 0, 1, 1], [], []>} : vector<32x32xf32>, vector<32x32xf32>, vector<32x32xf32> -> vector<32x32xf32>
    %c14_i32 = arith.constant 14 : i32
    %cst_93 = arith.constant 3.000000e+00 : f32
    %162 = vector.broadcast %cst_93 : f32 to vector<32x32xf32>
    %163 = arith.mulf %162, %21 : vector<32x32xf32>
    %cst_94 = arith.constant dense<0.000000e+00> : vector<32x32xf32>
    %164 = tpu.matmul %161, %160, %cst_94 {dimension_numbers = #tpu.dot_dimension_numbers<[1], [0], [0], [1], [0, 0, 1, 1], [], []>} : vector<32x32xf32>, vector<32x32xf32>, vector<32x32xf32> -> vector<32x32xf32>
    %165 = arith.subf %163, %164 : vector<32x32xf32>
    %cst_95 = arith.constant 5.000000e-01 : f32
    %166 = vector.broadcast %cst_95 : f32 to vector<32x32xf32>
    %167 = arith.mulf %166, %165 : vector<32x32xf32>
    %cst_96 = arith.constant dense<0.000000e+00> : vector<32x32xf32>
    %168 = tpu.matmul %160, %167, %cst_96 {dimension_numbers = #tpu.dot_dimension_numbers<[1], [0], [0], [1], [0, 0, 1, 1], [], []>} : vector<32x32xf32>, vector<32x32xf32>, vector<32x32xf32> -> vector<32x32xf32>
    %cst_97 = arith.constant dense<0.000000e+00> : vector<32x32xf32>
    %169 = tpu.matmul %167, %161, %cst_97 {dimension_numbers = #tpu.dot_dimension_numbers<[1], [0], [0], [1], [0, 0, 1, 1], [], []>} : vector<32x32xf32>, vector<32x32xf32>, vector<32x32xf32> -> vector<32x32xf32>
    %170 = arith.mulf %168, %21 : vector<32x32xf32>
    %171 = vector.shape_cast %170 : vector<32x32xf32> to vector<1x32x32xf32>
    %cst_98 = arith.constant dense<0.000000e+00> : vector<1xf32>
    %172 = vector.multi_reduction <add>, %171, %cst_98 [1, 2] : vector<1x32x32xf32> to vector<1xf32>
    %173 = vector.shape_cast %172 : vector<1xf32> to vector<1x1x1xf32>
    %174 = vector.extract %173[0, 0, 0] : f32 from vector<1x1x1xf32>
    %175 = math.sqrt %46 : f32
    %176 = arith.mulf %174, %175 : f32
    %cst_99 = arith.constant 2.000000e+00 : f32
    %177 = arith.mulf %cst_99, %176 : f32
    %178 = arith.subf %36, %177 : f32
    %cst_100 = arith.constant 1.000000e+00 : f32
    %179 = vector.broadcast %cst_100 : f32 to vector<1x1xf32>
    %180 = vector.broadcast %178 : f32 to vector<1x1xf32>
    %181 = arith.mulf %180, %179 : vector<1x1xf32>
    %c0_101 = arith.constant 0 : index
    %c0_102 = arith.constant 0 : index
    %182 = vector.load %arg12[%c0_101, %c0_102] : memref<1x1xf32, #tpu.memory_space<vmem>>, vector<1x1xf32>
    tpu.vector_store %arg12[%c0_101, %c0_102], %181 {strides = array<i32>} : memref<1x1xf32, #tpu.memory_space<vmem>>, vector<1x1xf32>,
    %c0_103 = arith.constant 0 : index
    %c0_104 = arith.constant 0 : index
    %183 = vector.load %arg10[%c0_103, %c0_104] : memref<1x1xf32, #tpu.memory_space<vmem>>, vector<1x1xf32>
    %184 = arith.cmpf ogt, %181, %183 : vector<1x1xf32>
    %185 = arith.extui %184 : vector<1x1xi1> to vector<1x1xi32>
    %c0_105 = arith.constant 0 : index
    %c0_106 = arith.constant 0 : index
    %186 = vector.load %arg13[%c0_105, %c0_106] : memref<1x1xi32, #tpu.memory_space<vmem>>, vector<1x1xi32>
    tpu.vector_store %arg13[%c0_105, %c0_106], %185 {strides = array<i32>} : memref<1x1xi32, #tpu.memory_space<vmem>>, vector<1x1xi32>,
    %c0_107 = arith.constant 0 : index
    %c0_108 = arith.constant 0 : index
    %187 = vector.load %arg8[%c0_107, %c0_108] : memref<32x10xf32, #tpu.memory_space<vmem>>, vector<32x10xf32>
    %c0_109 = arith.constant 0 : index
    %c0_110 = arith.constant 0 : index
    %188 = vector.load %arg9[%c0_109, %c0_110] : memref<1x10xf32, #tpu.memory_space<vmem>>, vector<1x10xf32>
    %cst_111 = arith.constant dense<0.000000e+00> : vector<2x10xf32>
    %189 = tpu.matmul %7, %187, %cst_111 {dimension_numbers = #tpu.dot_dimension_numbers<[1], [0], [0], [1], [0, 0, 1, 1], [], []>} : vector<2x32xf32>, vector<32x10xf32>, vector<2x10xf32> -> vector<2x10xf32>
    %190 = vector.broadcast %188 : vector<1x10xf32> to vector<2x10xf32>
    %191 = arith.addf %189, %190 : vector<2x10xf32>
    %c0_112 = arith.constant 0 : index
    %c0_113 = arith.constant 0 : index
    %192 = vector.load %arg7[%c0_112, %c0_113] : memref<2x32xf32, #tpu.memory_space<vmem>>, vector<2x32xf32>
    %cst_114 = arith.constant dense<0.000000e+00> : vector<2x10xf32>
    %193 = tpu.matmul %192, %187, %cst_114 {dimension_numbers = #tpu.dot_dimension_numbers<[1], [0], [0], [1], [0, 0, 1, 1], [], []>} : vector<2x32xf32>, vector<32x10xf32>, vector<2x10xf32> -> vector<2x10xf32>
    %194 = vector.broadcast %188 : vector<1x10xf32> to vector<2x10xf32>
    %195 = arith.addf %193, %194 : vector<2x10xf32>
    %196 = arith.extui %184 : vector<1x1xi1> to vector<1x1xi32>
    %197 = arith.sitofp %196 : vector<1x1xi32> to vector<1x1xf32>
    %198 = vector.broadcast %197 : vector<1x1xf32> to vector<2x10xf32>
    %199 = arith.mulf %198, %195 : vector<2x10xf32>
    %cst_115 = arith.constant 1.000000e+00 : f32
    %200 = vector.broadcast %cst_115 : f32 to vector<1x1xf32>
    %201 = arith.subf %200, %197 : vector<1x1xf32>
    %202 = vector.broadcast %201 : vector<1x1xf32> to vector<2x10xf32>
    %203 = arith.mulf %202, %191 : vector<2x10xf32>
    %204 = arith.addf %199, %203 : vector<2x10xf32>
    %c0_116 = arith.constant 0 : index
    %c0_117 = arith.constant 0 : index
    %205 = vector.load %arg11[%c0_116, %c0_117] : memref<2x10xf32, #tpu.memory_space<vmem>>, vector<2x10xf32>
    tpu.vector_store %arg11[%c0_116, %c0_117], %204 {strides = array<i32>} : memref<2x10xf32, #tpu.memory_space<vmem>>, vector<2x10xf32>,
    return
  }
  func.func @transform_0(%arg0: i32) -> (i32, i32) {
    %c0_i32 = arith.constant 0 : i32
    %c0_i32_0 = arith.constant 0 : i32
    %c0_i32_1 = arith.constant 0 : i32
    return %c0_i32, %c0_i32_0 : i32, i32
  }
  func.func @transform_1(%arg0: i32) -> (i32, i32) {
    %c0_i32 = arith.constant 0 : i32
    %c0_i32_0 = arith.constant 0 : i32
    %c0_i32_1 = arith.constant 0 : i32
    return %c0_i32, %c0_i32_0 : i32, i32
  }
  func.func @transform_2(%arg0: i32) -> (i32, i32) {
    %c0_i32 = arith.constant 0 : i32
    %c0_i32_0 = arith.constant 0 : i32
    %c0_i32_1 = arith.constant 0 : i32
    return %c0_i32, %c0_i32_0 : i32, i32
  }
  func.func @transform_3(%arg0: i32) -> (i32, i32) {
    %c0_i32 = arith.constant 0 : i32
    %c0_i32_0 = arith.constant 0 : i32
    %c0_i32_1 = arith.constant 0 : i32
    return %c0_i32, %c0_i32_0 : i32, i32
  }
  func.func @transform_4(%arg0: i32) -> (i32, i32) {
    %c0_i32 = arith.constant 0 : i32
    %c0_i32_0 = arith.constant 0 : i32
    %c0_i32_1 = arith.constant 0 : i32
    return %c0_i32, %c0_i32_0 : i32, i32
  }
  func.func @transform_5(%arg0: i32) -> (i32, i32) {
    %c0_i32 = arith.constant 0 : i32
    %c0_i32_0 = arith.constant 0 : i32
    %c0_i32_1 = arith.constant 0 : i32
    return %c0_i32, %c0_i32_0 : i32, i32
  }
  func.func @transform_6(%arg0: i32) -> (i32, i32) {
    %c0_i32 = arith.constant 0 : i32
    %c0_i32_0 = arith.constant 0 : i32
    %c0_i32_1 = arith.constant 0 : i32
    return %c0_i32, %c0_i32_0 : i32, i32
  }
  func.func @transform_7(%arg0: i32) -> (i32, i32) {
    %c0_i32 = arith.constant 0 : i32
    %c0_i32_0 = arith.constant 0 : i32
    %c0_i32_1 = arith.constant 0 : i32
    return %c0_i32, %c0_i32_0 : i32, i32
  }
  func.func @transform_8(%arg0: i32) -> (i32, i32) {
    %c0_i32 = arith.constant 0 : i32
    %c0_i32_0 = arith.constant 0 : i32
    %c0_i32_1 = arith.constant 0 : i32
    return %c0_i32, %c0_i32_0 : i32, i32
  }
  func.func @transform_9(%arg0: i32) -> (i32, i32) {
    %c0_i32 = arith.constant 0 : i32
    %c0_i32_0 = arith.constant 0 : i32
    %c0_i32_1 = arith.constant 0 : i32
    return %c0_i32, %c0_i32_0 : i32, i32
  }
  func.func @transform_10(%arg0: i32) -> (i32, i32) {
    %c0_i32 = arith.constant 0 : i32
    %c0_i32_0 = arith.constant 0 : i32
    %c0_i32_1 = arith.constant 0 : i32
    return %c0_i32, %c0_i32_0 : i32, i32
  }
  func.func @transform_11(%arg0: i32) -> (i32, i32) {
    %c0_i32 = arith.constant 0 : i32
    %c0_i32_0 = arith.constant 0 : i32
    %c0_i32_1 = arith.constant 0 : i32
    return %c0_i32, %c0_i32_0 : i32, i32
  }
  func.func @transform_12(%arg0: i32) -> (i32, i32) {
    %c0_i32 = arith.constant 0 : i32
    %c0_i32_0 = arith.constant 0 : i32
    %c0_i32_1 = arith.constant 0 : i32
    return %c0_i32, %c0_i32_0 : i32, i32
  }
}

</mosaic_0001>

<llo_original>
// kernel: patch_plugin_forward.1
$region0: #{patch_plugin_forward.1}
  #allocation0 [shape = 'u32[]', space=smem, size = 0x4, offset = 0x4, fixed_abs, tag = 'smem constant byte address 0x4 - core index']
  #allocation1 [shape = 'u32[72,128]{1,0:T(1,128)}', space=vmem, size = 0x9000, scoped, tag = 'internal scratch']
  #allocation2 [shape = 'f32[1,1]{1,0:T(1,128)S(1)}', space=vmem, size = 0x200, scoped, tag = 'scoped memory for patch_plugin_forward.1']
  %s0 = inlined_call_operand.vmem [shape: bf16[2,1024], index: 0, kind: input, shape index: {}]
  %s1 = inlined_call_operand.vmem [shape: bf16[1024,32], index: 1, kind: input, shape index: {}]
  %s2 = inlined_call_operand.vmem [shape: f32[1,32], index: 2, kind: input, shape index: {}]
  %s3 = inlined_call_operand.vmem [shape: f32[1,32], index: 3, kind: input, shape index: {}]
  %s4 = inlined_call_operand.vmem [shape: f32[32,32], index: 4, kind: input, shape index: {}]
  %s5 = inlined_call_operand.vmem [shape: f32[32,32], index: 5, kind: input, shape index: {}]
  %s6 = inlined_call_operand.vmem [shape: f32[2,32], index: 6, kind: input, shape index: {}]
  %s7 = inlined_call_operand.vmem [shape: f32[32,10], index: 7, kind: input, shape index: {}]
  %s8 = inlined_call_operand.vmem [shape: f32[1,10], index: 8, kind: input, shape index: {}]
  %s9 = inlined_call_operand.<no memory space> [shape: f32[1,1], index: 9, kind: input, shape index: {}]
  %s10 = inlined_call_operand.hbm [shape: f32[2,10], index: 10, kind: output, shape index: {0}]
  %s11 = inlined_call_operand.hbm [shape: f32[1,1], index: 11, kind: output, shape index: {1}]
  %s12 = inlined_call_operand.hbm [shape: s32[1,1], index: 12, kind: output, shape index: {2}]
  %13 = xla_tuple %s10, %s11, %s12
  %s14 = sld [smem:[#allocation0]]
  $region66: #{patch_plugin_forward.1} parent=0
    _
  %s16 = ssub.s32 1, %s14
  %s17 = scalar_select 0, %s16, %s14
  %v18 = vstv %s9
  %19 = vst [vmem:[#allocation2] sm:$0x1] %v18
  $region1: #{patch_plugin_forward.1} parent=0
    #allocation3 [shape = 'u8[1024]{0}', space=vmem, size = 0x400, scoped, tag = 'output window, operand 0, single buffered']
    #allocation4 [shape = 's32[1]{0}', space=sflag, size = 0x4, scoped, tag = 'scoped memory for patch_plugin_forward.1']
    #allocation5 [shape = 'u8[512]{0}', space=vmem, size = 0x400, scoped, tag = 'output window, operand 1, single buffered']
    #allocation6 [shape = 's32[1]{0}', space=sflag, size = 0x4, scoped, tag = 'scoped memory for patch_plugin_forward.1']
    #allocation7 [shape = 'u8[512]{0}', space=vmem, size = 0x400, scoped, tag = 'output window, operand 2, single buffered']
    %20 = vsyncpa [#allocation4], 0
    %21 = vsyncpa [#allocation6], 0
    // Predicated region
    $region2: #{patch_plugin_forward.1} parent=1 // pred_check
      _
    $region3: #{patch_plugin_forward.1} parent=1 // pred_check_branch
      %23 = sbr.rel (0) target = $region5
    $region4: #{patch_plugin_forward.1} parent=1 // pred_region
      _
    $region5: #{patch_plugin_forward.1} parent=1 // pred_fallthru
      _
    // Predicated region
    $region6: #{patch_plugin_forward.1} parent=1 // pred_check
      _
    $region7: #{patch_plugin_forward.1} parent=1 // pred_check_branch
      %25 = sbr.rel (0) target = $region9
    $region8: #{patch_plugin_forward.1} parent=1 // pred_region
      _
    $region9: #{patch_plugin_forward.1} parent=1 // pred_fallthru
      _
    // Predicated region
    $region10: #{patch_plugin_forward.1} parent=1 // pred_check
      _
    $region11: #{patch_plugin_forward.1} parent=1 // pred_check_branch
      %27 = sbr.rel (0) target = $region13
    $region12: #{patch_plugin_forward.1} parent=1 // pred_region
      _
    $region13: #{patch_plugin_forward.1} parent=1 // pred_fallthru
      _
    // Predicated region
    $region14: #{patch_plugin_forward.1} parent=1 // pred_check
      _
    $region15: #{patch_plugin_forward.1} parent=1 // pred_check_branch
      %29 = sbr.rel (0) target = $region17
    $region16: #{patch_plugin_forward.1} parent=1 // pred_region
      _
    $region17: #{patch_plugin_forward.1} parent=1 // pred_fallthru
      _
    // Predicated region
    $region18: #{patch_plugin_forward.1} parent=1 // pred_check
      _
    $region19: #{patch_plugin_forward.1} parent=1 // pred_check_branch
      %31 = sbr.rel (0) target = $region21
    $region20: #{patch_plugin_forward.1} parent=1 // pred_region
      _
    $region21: #{patch_plugin_forward.1} parent=1 // pred_fallthru
      _
    // Predicated region
    $region22: #{patch_plugin_forward.1} parent=1 // pred_check
      _
    $region23: #{patch_plugin_forward.1} parent=1 // pred_check_branch
      %33 = sbr.rel (0) target = $region25
    $region24: #{patch_plugin_forward.1} parent=1 // pred_region
      _
    $region25: #{patch_plugin_forward.1} parent=1 // pred_fallthru
      _
    // Predicated region
    $region26: #{patch_plugin_forward.1} parent=1 // pred_check
      _
    $region27: #{patch_plugin_forward.1} parent=1 // pred_check_branch
      %35 = sbr.rel (0) target = $region29
    $region28: #{patch_plugin_forward.1} parent=1 // pred_region
      _
    $region29: #{patch_plugin_forward.1} parent=1 // pred_fallthru
      _
    // Predicated region
    $region30: #{patch_plugin_forward.1} parent=1 // pred_check
      _
    $region31: #{patch_plugin_forward.1} parent=1 // pred_check_branch
      %37 = sbr.rel (0) target = $region33
    $region32: #{patch_plugin_forward.1} parent=1 // pred_region
      _
    $region33: #{patch_plugin_forward.1} parent=1 // pred_fallthru
      _
    // Predicated region
    $region34: #{patch_plugin_forward.1} parent=1 // pred_check
      _
    $region35: #{patch_plugin_forward.1} parent=1 // pred_check_branch
      %39 = sbr.rel (0) target = $region37
    $region36: #{patch_plugin_forward.1} parent=1 // pred_region
      _
    $region37: #{patch_plugin_forward.1} parent=1 // pred_fallthru
      _
    // Predicated region
    $region38: #{patch_plugin_forward.1} parent=1 // pred_check
      _
    $region39: #{patch_plugin_forward.1} parent=1 // pred_check_branch
      %41 = sbr.rel (0) target = $region41
    $region40: #{patch_plugin_forward.1} parent=1 // pred_region
      _
    $region41: #{patch_plugin_forward.1} parent=1 // pred_fallthru
      _
    %v42 = vld [vmem:[%s0] sm:$0xff]
    %v43 = vld [vmem:[%s1] sm:$0xf]
    %v44 = vld [vmem:[%s1 + $0x4] sm:$0xf]
    %v45 = vld [vmem:[%s1 + $0x8] sm:$0xf]
    %v46 = vld [vmem:[%s1 + $0xc] sm:$0xf]
    %v47 = vld [vmem:[%s1 + $0x10] sm:$0xf]
    %v48 = vld [vmem:[%s1 + $0x14] sm:$0xf]
    %v49 = vld [vmem:[%s1 + $0x18] sm:$0xf]
    %v50 = vld [vmem:[%s1 + $0x1c] sm:$0xf]
    %v51 = vld [vmem:[%s1 + $0x20] sm:$0xf]
    %v52 = vld [vmem:[%s1 + $0x24] sm:$0xf]
    %v53 = vld [vmem:[%s1 + $0x28] sm:$0xf]
    %v54 = vld [vmem:[%s1 + $0x2c] sm:$0xf]
    %v55 = vld [vmem:[%s1 + $0x30] sm:$0xf]
    %v56 = vld [vmem:[%s1 + $0x34] sm:$0xf]
    %v57 = vld [vmem:[%s1 + $0x38] sm:$0xf]
    %v58 = vld [vmem:[%s1 + $0x3c] sm:$0xf]
    %v59 = vld [vmem:[%s1 + $0x40] sm:$0xf]
    %v60 = vld [vmem:[%s1 + $0x44] sm:$0xf]
    %v61 = vld [vmem:[%s1 + $0x48] sm:$0xf]
    %v62 = vld [vmem:[%s1 + $0x4c] sm:$0xf]
    %v63 = vld [vmem:[%s1 + $0x50] sm:$0xf]
    %v64 = vld [vmem:[%s1 + $0x54] sm:$0xf]
    %v65 = vld [vmem:[%s1 + $0x58] sm:$0xf]
    %v66 = vld [vmem:[%s1 + $0x5c] sm:$0xf]
    %v67 = vld [vmem:[%s1 + $0x60] sm:$0xf]
    %v68 = vld [vmem:[%s1 + $0x64] sm:$0xf]
    %v69 = vld [vmem:[%s1 + $0x68] sm:$0xf]
    %v70 = vld [vmem:[%s1 + $0x6c] sm:$0xf]
    %v71 = vld [vmem:[%s1 + $0x70] sm:$0xf]
    %v72 = vld [vmem:[%s1 + $0x74] sm:$0xf]
    %v73 = vld [vmem:[%s1 + $0x78] sm:$0xf]
    %v74 = vld [vmem:[%s1 + $0x7c] sm:$0xf]
    %v75 = vld [vmem:[%s1 + $0x80] sm:$0xf]
    %v76 = vld [vmem:[%s1 + $0x84] sm:$0xf]
    %v77 = vld [vmem:[%s1 + $0x88] sm:$0xf]
    %v78 = vld [vmem:[%s1 + $0x8c] sm:$0xf]
    %v79 = vld [vmem:[%s1 + $0x90] sm:$0xf]
    %v80 = vld [vmem:[%s1 + $0x94] sm:$0xf]
    %v81 = vld [vmem:[%s1 + $0x98] sm:$0xf]
    %v82 = vld [vmem:[%s1 + $0x9c] sm:$0xf]
    %v83 = vld [vmem:[%s1 + $0xa0] sm:$0xf]
    %v84 = vld [vmem:[%s1 + $0xa4] sm:$0xf]
    %v85 = vld [vmem:[%s1 + $0xa8] sm:$0xf]
    %v86 = vld [vmem:[%s1 + $0xac] sm:$0xf]
    %v87 = vld [vmem:[%s1 + $0xb0] sm:$0xf]
    %v88 = vld [vmem:[%s1 + $0xb4] sm:$0xf]
    %v89 = vld [vmem:[%s1 + $0xb8] sm:$0xf]
    %v90 = vld [vmem:[%s1 + $0xbc] sm:$0xf]
    %v91 = vld [vmem:[%s1 + $0xc0] sm:$0xf]
    %v92 = vld [vmem:[%s1 + $0xc4] sm:$0xf]
    %v93 = vld [vmem:[%s1 + $0xc8] sm:$0xf]
    %v94 = vld [vmem:[%s1 + $0xcc] sm:$0xf]
    %v95 = vld [vmem:[%s1 + $0xd0] sm:$0xf]
    %v96 = vld [vmem:[%s1 + $0xd4] sm:$0xf]
    %v97 = vld [vmem:[%s1 + $0xd8] sm:$0xf]
    %v98 = vld [vmem:[%s1 + $0xdc] sm:$0xf]
    %v99 = vld [vmem:[%s1 + $0xe0] sm:$0xf]
    %v100 = vld [vmem:[%s1 + $0xe4] sm:$0xf]
    %v101 = vld [vmem:[%s1 + $0xe8] sm:$0xf]
    %v102 = vld [vmem:[%s1 + $0xec] sm:$0xf]
    %v103 = vld [vmem:[%s1 + $0xf0] sm:$0xf]
    %v104 = vld [vmem:[%s1 + $0xf4] sm:$0xf]
    %v105 = vld [vmem:[%s1 + $0xf8] sm:$0xf]
    %v106 = vld [vmem:[%s1 + $0xfc] sm:$0xf]
    %v107 = vld [vmem:[%s1 + $0x100] sm:$0xf]
    %v108 = vld [vmem:[%s1 + $0x104] sm:$0xf]
    %v109 = vld [vmem:[%s1 + $0x108] sm:$0xf]
    %v110 = vld [vmem:[%s1 + $0x10c] sm:$0xf]
    %v111 = vld [vmem:[%s1 + $0x110] sm:$0xf]
    %v112 = vld [vmem:[%s1 + $0x114] sm:$0xf]
    %v113 = vld [vmem:[%s1 + $0x118] sm:$0xf]
    %v114 = vld [vmem:[%s1 + $0x11c] sm:$0xf]
    %v115 = vld [vmem:[%s1 + $0x120] sm:$0xf]
    %v116 = vld [vmem:[%s1 + $0x124] sm:$0xf]
    %v117 = vld [vmem:[%s1 + $0x128] sm:$0xf]
    %v118 = vld [vmem:[%s1 + $0x12c] sm:$0xf]
    %v119 = vld [vmem:[%s1 + $0x130] sm:$0xf]
    %v120 = vld [vmem:[%s1 + $0x134] sm:$0xf]
    %v121 = vld [vmem:[%s1 + $0x138] sm:$0xf]
    %v122 = vld [vmem:[%s1 + $0x13c] sm:$0xf]
    %v123 = vld [vmem:[%s1 + $0x140] sm:$0xf]
    %v124 = vld [vmem:[%s1 + $0x144] sm:$0xf]
    %v125 = vld [vmem:[%s1 + $0x148] sm:$0xf]
    %v126 = vld [vmem:[%s1 + $0x14c] sm:$0xf]
    %v127 = vld [vmem:[%s1 + $0x150] sm:$0xf]
    %v128 = vld [vmem:[%s1 + $0x154] sm:$0xf]
    %v129 = vld [vmem:[%s1 + $0x158] sm:$0xf]
    %v130 = vld [vmem:[%s1 + $0x15c] sm:$0xf]
    %v131 = vld [vmem:[%s1 + $0x160] sm:$0xf]
    %v132 = vld [vmem:[%s1 + $0x164] sm:$0xf]
    %v133 = vld [vmem:[%s1 + $0x168] sm:$0xf]
    %v134 = vld [vmem:[%s1 + $0x16c] sm:$0xf]
    %v135 = vld [vmem:[%s1 + $0x170] sm:$0xf]
    %v136 = vld [vmem:[%s1 + $0x174] sm:$0xf]
    %v137 = vld [vmem:[%s1 + $0x178] sm:$0xf]
    %v138 = vld [vmem:[%s1 + $0x17c] sm:$0xf]
    %v139 = vld [vmem:[%s1 + $0x180] sm:$0xf]
    %v140 = vld [vmem:[%s1 + $0x184] sm:$0xf]
    %v141 = vld [vmem:[%s1 + $0x188] sm:$0xf]
    %v142 = vld [vmem:[%s1 + $0x18c] sm:$0xf]
    %v143 = vld [vmem:[%s1 + $0x190] sm:$0xf]
    %v144 = vld [vmem:[%s1 + $0x194] sm:$0xf]
    %v145 = vld [vmem:[%s1 + $0x198] sm:$0xf]
    %v146 = vld [vmem:[%s1 + $0x19c] sm:$0xf]
    %v147 = vld [vmem:[%s1 + $0x1a0] sm:$0xf]
    %v148 = vld [vmem:[%s1 + $0x1a4] sm:$0xf]
    %v149 = vld [vmem:[%s1 + $0x1a8] sm:$0xf]
    %v150 = vld [vmem:[%s1 + $0x1ac] sm:$0xf]
    %v151 = vld [vmem:[%s1 + $0x1b0] sm:$0xf]
    %v152 = vld [vmem:[%s1 + $0x1b4] sm:$0xf]
    %v153 = vld [vmem:[%s1 + $0x1b8] sm:$0xf]
    %v154 = vld [vmem:[%s1 + $0x1bc] sm:$0xf]
    %v155 = vld [vmem:[%s1 + $0x1c0] sm:$0xf]
    %v156 = vld [vmem:[%s1 + $0x1c4] sm:$0xf]
    %v157 = vld [vmem:[%s1 + $0x1c8] sm:$0xf]
    %v158 = vld [vmem:[%s1 + $0x1cc] sm:$0xf]
    %v159 = vld [vmem:[%s1 + $0x1d0] sm:$0xf]
    %v160 = vld [vmem:[%s1 + $0x1d4] sm:$0xf]
    %v161 = vld [vmem:[%s1 + $0x1d8] sm:$0xf]
    %v162 = vld [vmem:[%s1 + $0x1dc] sm:$0xf]
    %v163 = vld [vmem:[%s1 + $0x1e0] sm:$0xf]
    %v164 = vld [vmem:[%s1 + $0x1e4] sm:$0xf]
    %v165 = vld [vmem:[%s1 + $0x1e8] sm:$0xf]
    %v166 = vld [vmem:[%s1 + $0x1ec] sm:$0xf]
    %v167 = vld [vmem:[%s1 + $0x1f0] sm:$0xf]
    %v168 = vld [vmem:[%s1 + $0x1f4] sm:$0xf]
    %v169 = vld [vmem:[%s1 + $0x1f8] sm:$0xf]
    %v170 = vld [vmem:[%s1 + $0x1fc] sm:$0xf]
    %v171 = vld [vmem:[%s2] sm:$0x1]
    %v173 = vperm.slane %v171, 0
    %176 = vst [vmem:[#allocation1] ss:$9 sm:$0xff] %v42
    %v177 = vld [vmem:[#allocation1] sm:$0xff]
    %v178 = vld [vmem:[#allocation1 + $0x9] sm:$0xff]
    %v179 = vld [vmem:[#allocation1 + $0x12] sm:$0xff]
    %v180 = vld [vmem:[#allocation1 + $0x1b] sm:$0xff]
    %v181 = vld [vmem:[#allocation1 + $0x24] sm:$0xff]
    %v182 = vld [vmem:[#allocation1 + $0x2d] sm:$0xff]
    %v183 = vld [vmem:[#allocation1 + $0x36] sm:$0xff]
    %v184 = vld [vmem:[#allocation1 + $0x3f] sm:$0xff]
    %v321 = vunpack.c.l.b16 %v43
    %v322 = vunpack.c.l.b16 %v44
    %v323 = vunpack.c.l.b16 %v45
    %v324 = vunpack.c.l.b16 %v46
    %v325 = vunpack.c.l.b16 %v47
    %v326 = vunpack.c.l.b16 %v48
    %v327 = vunpack.c.l.b16 %v49
    %v328 = vunpack.c.l.b16 %v50
    %v329 = vunpack.c.l.b16 %v51
    %v330 = vunpack.c.l.b16 %v52
    %v331 = vunpack.c.l.b16 %v53
    %v332 = vunpack.c.l.b16 %v54
    %v333 = vunpack.c.l.b16 %v55
    %v334 = vunpack.c.l.b16 %v56
    %v335 = vunpack.c.l.b16 %v57
    %v336 = vunpack.c.l.b16 %v58
    %v337 = vunpack.c.l.b16 %v59
    %v338 = vunpack.c.l.b16 %v60
    %v339 = vunpack.c.l.b16 %v61
    %v340 = vunpack.c.l.b16 %v62
    %v341 = vunpack.c.l.b16 %v63
    %v342 = vunpack.c.l.b16 %v64
    %v343 = vunpack.c.l.b16 %v65
    %v344 = vunpack.c.l.b16 %v66
    %v345 = vunpack.c.l.b16 %v67
    %v346 = vunpack.c.l.b16 %v68
    %v347 = vunpack.c.l.b16 %v69
    %v348 = vunpack.c.l.b16 %v70
    %v349 = vunpack.c.l.b16 %v71
    %v350 = vunpack.c.l.b16 %v72
    %v351 = vunpack.c.l.b16 %v73
    %v352 = vunpack.c.l.b16 %v74
    %v353 = vunpack.c.l.b16 %v75
    %v354 = vunpack.c.l.b16 %v76
    %v355 = vunpack.c.l.b16 %v77
    %v356 = vunpack.c.l.b16 %v78
    %v357 = vunpack.c.l.b16 %v79
    %v358 = vunpack.c.l.b16 %v80
    %v359 = vunpack.c.l.b16 %v81
    %v360 = vunpack.c.l.b16 %v82
    %v361 = vunpack.c.l.b16 %v83
    %v362 = vunpack.c.l.b16 %v84
    %v363 = vunpack.c.l.b16 %v85
    %v364 = vunpack.c.l.b16 %v86
    %v365 = vunpack.c.l.b16 %v87
    %v366 = vunpack.c.l.b16 %v88
    %v367 = vunpack.c.l.b16 %v89
    %v368 = vunpack.c.l.b16 %v90
    %v369 = vunpack.c.l.b16 %v91
    %v370 = vunpack.c.l.b16 %v92
    %v371 = vunpack.c.l.b16 %v93
    %v372 = vunpack.c.l.b16 %v94
    %v373 = vunpack.c.l.b16 %v95
    %v374 = vunpack.c.l.b16 %v96
    %v375 = vunpack.c.l.b16 %v97
    %v376 = vunpack.c.l.b16 %v98
    %v377 = vunpack.c.l.b16 %v99
    %v378 = vunpack.c.l.b16 %v100
    %v379 = vunpack.c.l.b16 %v101
    %v380 = vunpack.c.l.b16 %v102
    %v381 = vunpack.c.l.b16 %v103
    %v382 = vunpack.c.l.b16 %v104
    %v383 = vunpack.c.l.b16 %v105
    %v384 = vunpack.c.l.b16 %v106
    %v385 = vunpack.c.l.b16 %v107
    %v386 = vunpack.c.l.b16 %v108
    %v387 = vunpack.c.l.b16 %v109
    %v388 = vunpack.c.l.b16 %v110
    %v389 = vunpack.c.l.b16 %v111
    %v390 = vunpack.c.l.b16 %v112
    %v391 = vunpack.c.l.b16 %v113
    %v392 = vunpack.c.l.b16 %v114
    %v393 = vunpack.c.l.b16 %v115
    %v394 = vunpack.c.l.b16 %v116
    %v395 = vunpack.c.l.b16 %v117
    %v396 = vunpack.c.l.b16 %v118
    %v397 = vunpack.c.l.b16 %v119
    %v398 = vunpack.c.l.b16 %v120
    %v399 = vunpack.c.l.b16 %v121
    %v400 = vunpack.c.l.b16 %v122
    %v401 = vunpack.c.l.b16 %v123
    %v402 = vunpack.c.l.b16 %v124
    %v403 = vunpack.c.l.b16 %v125
    %v404 = vunpack.c.l.b16 %v126
    %v405 = vunpack.c.l.b16 %v127
    %v406 = vunpack.c.l.b16 %v128
    %v407 = vunpack.c.l.b16 %v129
    %v408 = vunpack.c.l.b16 %v130
    %v409 = vunpack.c.l.b16 %v131
    %v410 = vunpack.c.l.b16 %v132
    %v411 = vunpack.c.l.b16 %v133
    %v412 = vunpack.c.l.b16 %v134
    %v413 = vunpack.c.l.b16 %v135
    %v414 = vunpack.c.l.b16 %v136
    %v415 = vunpack.c.l.b16 %v137
    %v416 = vunpack.c.l.b16 %v138
    %v417 = vunpack.c.l.b16 %v139
    %v418 = vunpack.c.l.b16 %v140
    %v419 = vunpack.c.l.b16 %v141
    %v420 = vunpack.c.l.b16 %v142
    %v421 = vunpack.c.l.b16 %v143
    %v422 = vunpack.c.l.b16 %v144
    %v423 = vunpack.c.l.b16 %v145
    %v424 = vunpack.c.l.b16 %v146
    %v425 = vunpack.c.l.b16 %v147
    %v426 = vunpack.c.l.b16 %v148
    %v427 = vunpack.c.l.b16 %v149
    %v428 = vunpack.c.l.b16 %v150
    %v429 = vunpack.c.l.b16 %v151
    %v430 = vunpack.c.l.b16 %v152
    %v431 = vunpack.c.l.b16 %v153
    %v432 = vunpack.c.l.b16 %v154
    %v433 = vunpack.c.l.b16 %v155
    %v434 = vunpack.c.l.b16 %v156
    %v435 = vunpack.c.l.b16 %v157
    %v436 = vunpack.c.l.b16 %v158
    %v437 = vunpack.c.l.b16 %v159
    %v438 = vunpack.c.l.b16 %v160
    %v439 = vunpack.c.l.b16 %v161
    %v440 = vunpack.c.l.b16 %v162
    %v441 = vunpack.c.l.b16 %v163
    %v442 = vunpack.c.l.b16 %v164
    %v443 = vunpack.c.l.b16 %v165
    %v444 = vunpack.c.l.b16 %v166
    %v445 = vunpack.c.l.b16 %v167
    %v446 = vunpack.c.l.b16 %v168
    %v447 = vunpack.c.l.b16 %v169
    %v448 = vunpack.c.l.b16 %v170
    %v449 = vpack.c.b16 %v322, %v321
    %v450 = vpack.c.b16 %v324, %v323
    %v451 = vpack.c.b16 %v326, %v325
    %v452 = vpack.c.b16 %v328, %v327
    %v453 = vpack.c.b16 %v330, %v329
    %v454 = vpack.c.b16 %v332, %v331
    %v455 = vpack.c.b16 %v334, %v333
    %v456 = vpack.c.b16 %v336, %v335
    %v457 = vpack.c.b16 %v338, %v337
    %v458 = vpack.c.b16 %v340, %v339
    %v459 = vpack.c.b16 %v342, %v341
    %v460 = vpack.c.b16 %v344, %v343
    %v461 = vpack.c.b16 %v346, %v345
    %v462 = vpack.c.b16 %v348, %v347
    %v463 = vpack.c.b16 %v350, %v349
    %v464 = vpack.c.b16 %v352, %v351
    %v465 = vpack.c.b16 %v354, %v353
    %v466 = vpack.c.b16 %v356, %v355
    %v467 = vpack.c.b16 %v358, %v357
    %v468 = vpack.c.b16 %v360, %v359
    %v469 = vpack.c.b16 %v362, %v361
    %v470 = vpack.c.b16 %v364, %v363
    %v471 = vpack.c.b16 %v366, %v365
    %v472 = vpack.c.b16 %v368, %v367
    %v473 = vpack.c.b16 %v370, %v369
    %v474 = vpack.c.b16 %v372, %v371
    %v475 = vpack.c.b16 %v374, %v373
    %v476 = vpack.c.b16 %v376, %v375
    %v477 = vpack.c.b16 %v378, %v377
    %v478 = vpack.c.b16 %v380, %v379
    %v479 = vpack.c.b16 %v382, %v381
    %v480 = vpack.c.b16 %v384, %v383
    %v481 = vpack.c.b16 %v386, %v385
    %v482 = vpack.c.b16 %v388, %v387
    %v483 = vpack.c.b16 %v390, %v389
    %v484 = vpack.c.b16 %v392, %v391
    %v485 = vpack.c.b16 %v394, %v393
    %v486 = vpack.c.b16 %v396, %v395
    %v487 = vpack.c.b16 %v398, %v397
    %v488 = vpack.c.b16 %v400, %v399
    %v489 = vpack.c.b16 %v402, %v401
    %v490 = vpack.c.b16 %v404, %v403
    %v491 = vpack.c.b16 %v406, %v405
    %v492 = vpack.c.b16 %v408, %v407
    %v493 = vpack.c.b16 %v410, %v409
    %v494 = vpack.c.b16 %v412, %v411
    %v495 = vpack.c.b16 %v414, %v413
    %v496 = vpack.c.b16 %v416, %v415
    %v497 = vpack.c.b16 %v418, %v417
    %v498 = vpack.c.b16 %v420, %v419
    %v499 = vpack.c.b16 %v422, %v421
    %v500 = vpack.c.b16 %v424, %v423
    %v501 = vpack.c.b16 %v426, %v425
    %v502 = vpack.c.b16 %v428, %v427
    %v503 = vpack.c.b16 %v430, %v429
    %v504 = vpack.c.b16 %v432, %v431
    %v505 = vpack.c.b16 %v434, %v433
    %v506 = vpack.c.b16 %v436, %v435
    %v507 = vpack.c.b16 %v438, %v437
    %v508 = vpack.c.b16 %v440, %v439
    %v509 = vpack.c.b16 %v442, %v441
    %v510 = vpack.c.b16 %v444, %v443
    %v511 = vpack.c.b16 %v446, %v445
    %v512 = vpack.c.b16 %v448, %v447
    %577 = vmatpush.bf16.msra.mxu0 %v456
    %578 = vmatpush.bf16.msra.mxu0 %v455
    %579 = vmatpush.bf16.msra.mxu0 %v454
    %580 = vmatpush.bf16.msra.mxu0 %v453
    %581 = vmatpush.bf16.msra.mxu0 %v452
    %582 = vmatpush.bf16.msra.mxu0 %v451
    %583 = vmatpush.bf16.msra.mxu0 %v450
    %584 = vmatpush.bf16.msra.mxu0 %v449
    %585 = vmatmul.bf16.gmra.mxu0 %v177
    %v586 = vpop.f32.mrf.mxu0
    %v587 = vadd.f32 %v173, %v586
    %v588 = vpop.f32.mrf.mxu0
    %589 = vdwg.mxu0
    %590 = vmatpush.bf16.msra.mxu0 %v464
    %591 = vmatpush.bf16.msra.mxu0 %v463
    %592 = vmatpush.bf16.msra.mxu0 %v462
    %593 = vmatpush.bf16.msra.mxu0 %v461
    %594 = vmatpush.bf16.msra.mxu0 %v460
    %595 = vmatpush.bf16.msra.mxu0 %v459
    %596 = vmatpush.bf16.msra.mxu0 %v458
    %597 = vmatpush.bf16.msra.mxu0 %v457
    %598 = vmatmul.bf16.gmra.mxu0 %v178
    %v599 = vpop.f32.mrf.mxu0
    %v600 = vadd.f32 %v587, %v599
    %v601 = vpop.f32.mrf.mxu0
    %602 = vdwg.mxu0
    %603 = vmatpush.bf16.msra.mxu0 %v472
    %604 = vmatpush.bf16.msra.mxu0 %v471
    %605 = vmatpush.bf16.msra.mxu0 %v470
    %606 = vmatpush.bf16.msra.mxu0 %v469
    %607 = vmatpush.bf16.msra.mxu0 %v468
    %608 = vmatpush.bf16.msra.mxu0 %v467
    %609 = vmatpush.bf16.msra.mxu0 %v466
    %610 = vmatpush.bf16.msra.mxu0 %v465
    %611 = vmatmul.bf16.gmra.mxu0 %v179
    %v612 = vpop.f32.mrf.mxu0
    %v613 = vadd.f32 %v600, %v612
    %v614 = vpop.f32.mrf.mxu0
    %615 = vdwg.mxu0
    %616 = vmatpush.bf16.msra.mxu0 %v480
    %617 = vmatpush.bf16.msra.mxu0 %v479
    %618 = vmatpush.bf16.msra.mxu0 %v478
    %619 = vmatpush.bf16.msra.mxu0 %v477
    %620 = vmatpush.bf16.msra.mxu0 %v476
    %621 = vmatpush.bf16.msra.mxu0 %v475
    %622 = vmatpush.bf16.msra.mxu0 %v474
    %623 = vmatpush.bf16.msra.mxu0 %v473
    %624 = vmatmul.bf16.gmra.mxu0 %v180
    %v625 = vpop.f32.mrf.mxu0
    %v626 = vadd.f32 %v613, %v625
    %v627 = vpop.f32.mrf.mxu0
    %628 = vdwg.mxu0
    %629 = vmatpush.bf16.msra.mxu0 %v488
    %630 = vmatpush.bf16.msra.mxu0 %v487
    %631 = vmatpush.bf16.msra.mxu0 %v486
    %632 = vmatpush.bf16.msra.mxu0 %v485
    %633 = vmatpush.bf16.msra.mxu0 %v484
    %634 = vmatpush.bf16.msra.mxu0 %v483
    %635 = vmatpush.bf16.msra.mxu0 %v482
    %636 = vmatpush.bf16.msra.mxu0 %v481
    %637 = vmatmul.bf16.gmra.mxu0 %v181
    %v638 = vpop.f32.mrf.mxu0
    %v639 = vadd.f32 %v626, %v638
    %v640 = vpop.f32.mrf.mxu0
    %641 = vdwg.mxu0
    %642 = vmatpush.bf16.msra.mxu0 %v496
    %643 = vmatpush.bf16.msra.mxu0 %v495
    %644 = vmatpush.bf16.msra.mxu0 %v494
    %645 = vmatpush.bf16.msra.mxu0 %v493
    %646 = vmatpush.bf16.msra.mxu0 %v492
    %647 = vmatpush.bf16.msra.mxu0 %v491
    %648 = vmatpush.bf16.msra.mxu0 %v490
    %649 = vmatpush.bf16.msra.mxu0 %v489
    %650 = vmatmul.bf16.gmra.mxu0 %v182
    %v651 = vpop.f32.mrf.mxu0
    %v652 = vadd.f32 %v639, %v651
    %v653 = vpop.f32.mrf.mxu0
    %654 = vdwg.mxu0
    %655 = vmatpush.bf16.msra.mxu0 %v504
    %656 = vmatpush.bf16.msra.mxu0 %v503
    %657 = vmatpush.bf16.msra.mxu0 %v502
    %658 = vmatpush.bf16.msra.mxu0 %v501
    %659 = vmatpush.bf16.msra.mxu0 %v500
    %660 = vmatpush.bf16.msra.mxu0 %v499
    %661 = vmatpush.bf16.msra.mxu0 %v498
    %662 = vmatpush.bf16.msra.mxu0 %v497
    %663 = vmatmul.bf16.gmra.mxu0 %v183
    %v664 = vpop.f32.mrf.mxu0
    %v665 = vadd.f32 %v652, %v664
    %v666 = vpop.f32.mrf.mxu0
    %667 = vdwg.mxu0
    %668 = vmatpush.bf16.msra.mxu0 %v512
    %669 = vmatpush.bf16.msra.mxu0 %v511
    %670 = vmatpush.bf16.msra.mxu0 %v510
    %671 = vmatpush.bf16.msra.mxu0 %v509
    %672 = vmatpush.bf16.msra.mxu0 %v508
    %673 = vmatpush.bf16.msra.mxu0 %v507
    %674 = vmatpush.bf16.msra.mxu0 %v506
    %675 = vmatpush.bf16.msra.mxu0 %v505
    %676 = vmatmul.bf16.gmra.mxu0 %v184
    %v677 = vpop.f32.mrf.mxu0
    %v678 = vadd.f32 %v665, %v677
    %v679 = vpop.f32.mrf.mxu0
    %680 = vdwg.mxu0
    %v681 = vmax.f32 %v678, 0.0
    %vm682 = vcmask 254976
    %v683 = vsel %vm682, %v681, 0.0
    %v684 = vrot.slane %v683, 4
    %v685 = vadd.f32 %v683, %v684
    %v686 = vrot.slane %v685, 2
    %v687 = vadd.f32 %v685, %v686
    %v688 = vrot.slane %v687, 1
    %v689 = vadd.f32 %v687, %v688
    %v690 = vmul.f32 %v689, 0.5
    %v691 = vsub.f32 %v681, %v690
    %692 = vxpose.xlu0.b32.start [1/16] %v691, 128
    %693 = vxpose.xlu0.b32.cont [2/16] 0.0, 128
    %694 = vxpose.xlu0.b32.cont [3/16] 0.0, 128
    %695 = vxpose.xlu0.b32.cont [4/16] 0.0, 128
    %696 = vxpose.xlu0.b32.cont [5/16] 0.0, 128
    %697 = vxpose.xlu0.b32.cont [6/16] 0.0, 128
    %698 = vxpose.xlu0.b32.cont [7/16] 0.0, 128
    %699 = vxpose.xlu0.b32.cont [8/16] 0.0, 128
    %700 = vxpose.xlu0.b32.cont [9/16] 0.0, 128
    %701 = vxpose.xlu0.b32.cont [10/16] 0.0, 128
    %702 = vxpose.xlu0.b32.cont [11/16] 0.0, 128
    %703 = vxpose.xlu0.b32.cont [12/16] 0.0, 128
    %704 = vxpose.xlu0.b32.cont [13/16] 0.0, 128
    %705 = vxpose.xlu0.b32.cont [14/16] 0.0, 128
    %706 = vxpose.xlu0.b32.cont [15/16] 0.0, 128
    %707 = vxpose.xlu0.b32.end [16/16] 0.0, 128
    %v708 = vpop.trf.xlu0
    %v709 = vpop.trf.xlu0
    %v710 = vpop.trf.xlu0
    %v711 = vpop.trf.xlu0
    %v712 = vpop.trf.xlu0
    %v713 = vpop.trf.xlu0
    %v714 = vpop.trf.xlu0
    %v715 = vpop.trf.xlu0
    %v716 = vpop.trf.xlu0
    %v717 = vpop.trf.xlu0
    %v718 = vpop.trf.xlu0
    %v719 = vpop.trf.xlu0
    %v720 = vpop.trf.xlu0
    %v721 = vpop.trf.xlu0
    %v722 = vpop.trf.xlu0
    %v723 = vpop.trf.xlu0
    %vm724 = vcmask 15360
    %v726 = vsel %vm724, %v708, 0
    %v729 = vsel %vm724, %v709, 0
    %v732 = vsel %vm724, %v710, 0
    %v735 = vsel %vm724, %v711, 0
    %vm737 = vcmask 1041408
    %v739 = vsel %vm737, %v691, 0
    %741 = vmatpush.msra.mxu0 0.0
    %742 = vmatpush.msra.mxu0 0.0
    %743 = vmatpush.msra.mxu0 0.0
    %744 = vmatpush.msra.mxu0 0.0
    %745 = vmatpush.msra.mxu0 0.0
    %746 = vmatpush.msra.mxu0 0.0
    %747 = vmatpush.msra.mxu0 0.0
    %748 = vmatpush.msra.mxu0 0.0
    %749 = vmatpush.msra.mxu0 0.0
    %750 = vmatpush.msra.mxu0 0.0
    %751 = vmatpush.msra.mxu0 0.0
    %752 = vmatpush.msra.mxu0 0.0
    %753 = vmatpush.msra.mxu0 0.0
    %754 = vmatpush.msra.mxu0 0.0
    %755 = vmatpush.msra.mxu0 0.0
    %756 = vmatpush.msra.mxu0 %v739
    %757 = vmatmul.f32.gmra.mxu0 %v726
    %v758 = vpop.f32.mrf.mxu0
    %v759 = vadd.f32 0.0, %v758
    %760 = vmatmul.f32.gmra.mxu0 %v729
    %v761 = vpop.f32.mrf.mxu0
    %v762 = vadd.f32 0.0, %v761
    %763 = vmatmul.f32.gmra.mxu0 %v732
    %v764 = vpop.f32.mrf.mxu0
    %v765 = vadd.f32 0.0, %v764
    %766 = vmatmul.f32.gmra.mxu0 %v735
    %v767 = vpop.f32.mrf.mxu0
    %v768 = vadd.f32 0.0, %v767
    %769 = vdwg.mxu0
    %v770 = vlaneseq
    %v771 = vshrl.u32 %v770, 7
    %v772 = vadd.s32 %v771, 8
    %v773 = vadd.s32 %v771, 16
    %v774 = vadd.s32 %v771, 24
    %v775 = vlaneseq
    %v776 = vand.u32 %v775, 127
    %vm777 = vcmp.eq.s32.totalorder %v771, %v776
    %vm778 = vcmp.eq.s32.totalorder %v772, %v776
    %vm779 = vcmp.eq.s32.totalorder %v773, %v776
    %vm780 = vcmp.eq.s32.totalorder %v774, %v776
    %v781 = vsel %vm777, 1, 0
    %v782 = vsel %vm778, 1, 0
    %v783 = vsel %vm779, 1, 0
    %v784 = vsel %vm780, 1, 0
    %v785 = vcvt.s32.f32 %v781
    %v786 = vcvt.s32.f32 %v782
    %v787 = vcvt.s32.f32 %v783
    %v788 = vcvt.s32.f32 %v784
    %v789 = vld [vmem:[%s3] sm:$0x1]
    %v790 = vsub.f32 %v789, %v690
    %v791 = vld [vmem:[%s4] sm:$0xff]
    %v792 = vld [vmem:[%s4 + $0x8] sm:$0xff]
    %v793 = vld [vmem:[%s4 + $0x10] sm:$0xff]
    %v794 = vld [vmem:[%s4 + $0x18] sm:$0xff]
    %v795 = vmul.f32 %v790, %v790
    %vm796 = vcmask 253952
    %v797 = vsel %vm796, %v795, 0.0
    %798 = vadd.xlane.f32.xlu0 %v797
    %v799 = vpop.xlane.xlu0 %798
    %v800 = vrot.slane %v799, 4
    %v801 = vadd.f32 %v799, %v800
    %v802 = vrot.slane %v801, 2
    %v803 = vadd.f32 %v801, %v802
    %v804 = vrot.slane %v803, 1
    %v805 = vadd.f32 %v803, %v804
    %s806 = vtos %v805
    %v807 = vadd.f32 %v791, %v759
    %v808 = vadd.f32 %v792, %v762
    %v809 = vadd.f32 %v793, %v765
    %v810 = vadd.f32 %v794, %v768
    %v811 = vmul.f32 %v807, %v785
    %v812 = vmul.f32 %v808, %v786
    %v813 = vmul.f32 %v809, %v787
    %v814 = vmul.f32 %v810, %v788
    %vm815 = vcmask 261120
    %v816 = vsel %vm815, %v811, 0.0
    %v817 = vsel %vm815, %v812, 0.0
    %v818 = vadd.f32 %v816, %v817
    %v819 = vsel %vm815, %v813, 0.0
    %v820 = vadd.f32 %v818, %v819
    %v821 = vsel %vm815, %v814, 0.0
    %v822 = vadd.f32 %v820, %v821
    %823 = vadd.xlane.f32.xlu0 %v822
    %v824 = vpop.xlane.xlu0 %823
    %v825 = vrot.slane %v824, 4
    %v826 = vadd.f32 %v824, %v825
    %v827 = vrot.slane %v826, 2
    %v828 = vadd.f32 %v826, %v827
    %v829 = vrot.slane %v828, 1
    %v830 = vadd.f32 %v828, %v829
    %s831 = vtos %v830
    %s832 = sadd.f32 %s806, %s831
    %v833 = vld [vmem:[%s5] sm:$0xff]
    %v834 = vld [vmem:[%s5 + $0x8] sm:$0xff]
    %v835 = vld [vmem:[%s5 + $0x10] sm:$0xff]
    %v836 = vld [vmem:[%s5 + $0x18] sm:$0xff]
    %v838 = vsel %vm815, %v833, 0
    %v841 = vsel %vm815, %v834, 0
    %v844 = vsel %vm815, %v835, 0
    %v847 = vsel %vm815, %v836, 0
    %849 = vmatpush.msra.mxu0 0.0
    %850 = vmatpush.msra.mxu0 0.0
    %851 = vmatpush.msra.mxu0 0.0
    %852 = vmatpush.msra.mxu0 0.0
    %853 = vmatpush.msra.mxu0 0.0
    %854 = vmatpush.msra.mxu0 0.0
    %855 = vmatpush.msra.mxu0 0.0
    %856 = vmatpush.msra.mxu0 0.0
    %857 = vmatpush.msra.mxu0 0.0
    %858 = vmatpush.msra.mxu0 0.0
    %859 = vmatpush.msra.mxu0 0.0
    %860 = vmatpush.msra.mxu0 0.0
    %861 = vmatpush.msra.mxu0 %v768
    %862 = vmatpush.msra.mxu0 %v765
    %863 = vmatpush.msra.mxu0 %v762
    %864 = vmatpush.msra.mxu0 %v759
    %865 = vmatmul.f32.gmra.mxu0 %v838
    %v866 = vpop.f32.mrf.mxu0
    %v867 = vadd.f32 0.0, %v866
    %868 = vmatmul.f32.gmra.mxu0 %v841
    %v869 = vpop.f32.mrf.mxu0
    %v870 = vadd.f32 0.0, %v869
    %871 = vmatmul.f32.gmra.mxu0 %v844
    %v872 = vpop.f32.mrf.mxu0
    %v873 = vadd.f32 0.0, %v872
    %874 = vmatmul.f32.gmra.mxu0 %v847
    %v875 = vpop.f32.mrf.mxu0
    %v876 = vadd.f32 0.0, %v875
    %877 = vdwg.mxu0
    %v879 = vsel %vm815, %v867, 0
    %v882 = vsel %vm815, %v870, 0
    %v885 = vsel %vm815, %v873, 0
    %v888 = vsel %vm815, %v876, 0
    %890 = vmatpush.msra.mxu0 0.0
    %891 = vmatpush.msra.mxu0 0.0
    %892 = vmatpush.msra.mxu0 0.0
    %893 = vmatpush.msra.mxu0 0.0
    %894 = vmatpush.msra.mxu0 0.0
    %895 = vmatpush.msra.mxu0 0.0
    %896 = vmatpush.msra.mxu0 0.0
    %897 = vmatpush.msra.mxu0 0.0
    %898 = vmatpush.msra.mxu0 0.0
    %899 = vmatpush.msra.mxu0 0.0
    %900 = vmatpush.msra.mxu0 0.0
    %901 = vmatpush.msra.mxu0 0.0
    %902 = vmatpush.msra.mxu0 %v836
    %903 = vmatpush.msra.mxu0 %v835
    %904 = vmatpush.msra.mxu0 %v834
    %905 = vmatpush.msra.mxu0 %v833
    %906 = vmatmul.f32.gmra.mxu0 %v879
    %v907 = vpop.f32.mrf.mxu0
    %v908 = vadd.f32 0.0, %v907
    %909 = vmatmul.f32.gmra.mxu0 %v882
    %v910 = vpop.f32.mrf.mxu0
    %v911 = vadd.f32 0.0, %v910
    %912 = vmatmul.f32.gmra.mxu0 %v885
    %v913 = vpop.f32.mrf.mxu0
    %v914 = vadd.f32 0.0, %v913
    %915 = vmatmul.f32.gmra.mxu0 %v888
    %v916 = vpop.f32.mrf.mxu0
    %v917 = vadd.f32 0.0, %v916
    %918 = vdwg.mxu0
    %v919 = vmul.f32 %v908, %v908
    %v920 = vmul.f32 %v911, %v911
    %v921 = vmul.f32 %v914, %v914
    %v922 = vmul.f32 %v917, %v917
    %v923 = vsel %vm815, %v919, 0.0
    %v924 = vsel %vm815, %v920, 0.0
    %v925 = vadd.f32 %v923, %v924
    %v926 = vsel %vm815, %v921, 0.0
    %v927 = vadd.f32 %v925, %v926
    %v928 = vsel %vm815, %v922, 0.0
    %v929 = vadd.f32 %v927, %v928
    %930 = vadd.xlane.f32.xlu0 %v929
    %v931 = vpop.xlane.xlu0 %930
    %v932 = vrot.slane %v931, 4
    %v933 = vadd.f32 %v931, %v932
    %v934 = vrot.slane %v933, 2
    %v935 = vadd.f32 %v933, %v934
    %v936 = vrot.slane %v935, 1
    %v937 = vadd.f32 %v935, %v936
    %s938 = vtos %v937
    %v939 = vstv %s938
    %v940 = vrsqrt.pop %v939
    %v941 = vmul.f32 %v940, %v939
    %v942 = vmul.f32 %v941, %v940
    %v943 = vmul.f32 0.5, %v942
    %v944 = vsub.f32 1.5, %v943
    %v945 = vmul.f32 %v940, %v944
    %v946 = vmul.f32 %v939, %v945
    %vm947 = vcmp.eq.f32.partialorder %v939, inf
    %v948 = vsel %vm947, %v939, %v946
    %vm949 = vcmp.eq.f32.partialorder %v939, 0.0
    %v950 = vand.u32 %v939, 2147483648
    %v951 = vsel %vm949, %v950, %v948
    %s952 = vtos %v951
    %s953 = sadd.f32 %s952, 1e-12
    %v954 = vstv %s953
    %v955 = vrcp.pop %v954
    %v956 = vmul.f32 %v954, %v955
    %v957 = vsub.f32 1.0, %v956
    %v958 = vmul.f32 %v955, %v957
    %v959 = vadd.f32 %v955, %v958
    %vm960 = vweird.f32 %v954
    %vm961 = vweird.f32 %v955
    %vm962 = vmor %vm960, %vm961
    %v963 = vsel %vm962, %v955, %v959
    %v964 = vand.u32 2147483647, %v954
    %vm965 = vcmp.eq.f32.partialorder %v964, 8.507059e+37
    %v966 = vand.u32 %v954, 2147483648
    %v967 = vor.u32 1.1754944e-38, %v966
    %v968 = vsel %vm965, %v967, %v963
    %s969 = vtos %v968
    %v970 = vstv %s969
    %v971 = vmul.f32 %v908, %v970
    %v972 = vmul.f32 %v911, %v970
    %v973 = vmul.f32 %v914, %v970
    %v974 = vmul.f32 %v917, %v970
    %v975 = vmul.f32 %v785, 3.0
    %v976 = vmul.f32 %v786, 3.0
    %v977 = vmul.f32 %v787, 3.0
    %v978 = vmul.f32 %v788, 3.0
    %v980 = vsel %vm815, %v785, 0
    %v983 = vsel %vm815, %v786, 0
    %v986 = vsel %vm815, %v787, 0
    %v989 = vsel %vm815, %v788, 0
    %991 = vmatpush.msra.mxu0 0.0
    %992 = vmatpush.msra.mxu0 0.0
    %993 = vmatpush.msra.mxu0 0.0
    %994 = vmatpush.msra.mxu0 0.0
    %995 = vmatpush.msra.mxu0 0.0
    %996 = vmatpush.msra.mxu0 0.0
    %997 = vmatpush.msra.mxu0 0.0
    %998 = vmatpush.msra.mxu0 0.0
    %999 = vmatpush.msra.mxu0 0.0
    %1000 = vmatpush.msra.mxu0 0.0
    %1001 = vmatpush.msra.mxu0 0.0
    %1002 = vmatpush.msra.mxu0 0.0
    %1003 = vmatpush.msra.mxu0 %v974
    %1004 = vmatpush.msra.mxu0 %v973
    %1005 = vmatpush.msra.mxu0 %v972
    %1006 = vmatpush.msra.mxu0 %v971
    %1007 = vmatmul.f32.gmra.mxu0 %v980
    %v1008 = vpop.f32.mrf.mxu0
    %v1009 = vadd.f32 0.0, %v1008
    %1010 = vmatmul.f32.gmra.mxu0 %v983
    %v1011 = vpop.f32.mrf.mxu0
    %v1012 = vadd.f32 0.0, %v1011
    %1013 = vmatmul.f32.gmra.mxu0 %v986
    %v1014 = vpop.f32.mrf.mxu0
    %v1015 = vadd.f32 0.0, %v1014
    %1016 = vmatmul.f32.gmra.mxu0 %v989
    %v1017 = vpop.f32.mrf.mxu0
    %v1018 = vadd.f32 0.0, %v1017
    %1019 = vdwg.mxu0
    %v1020 = vsub.f32 %v975, %v1009
    %v1021 = vsub.f32 %v976, %v1012
    %v1022 = vsub.f32 %v977, %v1015
    %v1023 = vsub.f32 %v978, %v1018
    %v1024 = vmul.f32 %v1020, 0.5
    %v1025 = vmul.f32 %v1021, 0.5
    %v1026 = vmul.f32 %v1022, 0.5
    %v1027 = vmul.f32 %v1023, 0.5
    %v1029 = vsel %vm815, %v971, 0
    %v1032 = vsel %vm815, %v972, 0
    %v1035 = vsel %vm815, %v973, 0
    %v1038 = vsel %vm815, %v974, 0
    %1040 = vmatpush.msra.mxu0 0.0
    %1041 = vmatpush.msra.mxu0 0.0
    %1042 = vmatpush.msra.mxu0 0.0
    %1043 = vmatpush.msra.mxu0 0.0
    %1044 = vmatpush.msra.mxu0 0.0
    %1045 = vmatpush.msra.mxu0 0.0
    %1046 = vmatpush.msra.mxu0 0.0
    %1047 = vmatpush.msra.mxu0 0.0
    %1048 = vmatpush.msra.mxu0 0.0
    %1049 = vmatpush.msra.mxu0 0.0
    %1050 = vmatpush.msra.mxu0 0.0
    %1051 = vmatpush.msra.mxu0 0.0
    %1052 = vmatpush.msra.mxu0 %v1027
    %1053 = vmatpush.msra.mxu0 %v1026
    %1054 = vmatpush.msra.mxu0 %v1025
    %1055 = vmatpush.msra.mxu0 %v1024
    %1056 = vmatmul.f32.gmra.mxu0 %v1029
    %v1057 = vpop.f32.mrf.mxu0
    %v1058 = vadd.f32 0.0, %v1057
    %1059 = vmatmul.f32.gmra.mxu0 %v1032
    %v1060 = vpop.f32.mrf.mxu0
    %v1061 = vadd.f32 0.0, %v1060
    %1062 = vmatmul.f32.gmra.mxu0 %v1035
    %v1063 = vpop.f32.mrf.mxu0
    %v1064 = vadd.f32 0.0, %v1063
    %1065 = vmatmul.f32.gmra.mxu0 %v1038
    %v1066 = vpop.f32.mrf.mxu0
    %v1067 = vadd.f32 0.0, %v1066
    %1068 = vdwg.mxu0
    %v1070 = vsel %vm815, %v1024, 0
    %v1073 = vsel %vm815, %v1025, 0
    %v1076 = vsel %vm815, %v1026, 0
    %v1079 = vsel %vm815, %v1027, 0
    %1081 = vmatpush.msra.mxu0 0.0
    %1082 = vmatpush.msra.mxu0 0.0
    %1083 = vmatpush.msra.mxu0 0.0
    %1084 = vmatpush.msra.mxu0 0.0
    %1085 = vmatpush.msra.mxu0 0.0
    %1086 = vmatpush.msra.mxu0 0.0
    %1087 = vmatpush.msra.mxu0 0.0
    %1088 = vmatpush.msra.mxu0 0.0
    %1089 = vmatpush.msra.mxu0 0.0
    %1090 = vmatpush.msra.mxu0 0.0
    %1091 = vmatpush.msra.mxu0 0.0
    %1092 = vmatpush.msra.mxu0 0.0
    %1093 = vmatpush.msra.mxu0 %v788
    %1094 = vmatpush.msra.mxu0 %v787
    %1095 = vmatpush.msra.mxu0 %v786
    %1096 = vmatpush.msra.mxu0 %v785
    %1097 = vmatmul.f32.gmra.mxu0 %v1070
    %v1098 = vpop.f32.mrf.mxu0
    %v1099 = vadd.f32 0.0, %v1098
    %1100 = vmatmul.f32.gmra.mxu0 %v1073
    %v1101 = vpop.f32.mrf.mxu0
    %v1102 = vadd.f32 0.0, %v1101
    %1103 = vmatmul.f32.gmra.mxu0 %v1076
    %v1104 = vpop.f32.mrf.mxu0
    %v1105 = vadd.f32 0.0, %v1104
    %1106 = vmatmul.f32.gmra.mxu0 %v1079
    %v1107 = vpop.f32.mrf.mxu0
    %v1108 = vadd.f32 0.0, %v1107
    %1109 = vdwg.mxu0
    %v1111 = vsel %vm815, %v1099, 0
    %v1114 = vsel %vm815, %v1102, 0
    %v1117 = vsel %vm815, %v1105, 0
    %v1120 = vsel %vm815, %v1108, 0
    %1122 = vmatpush.msra.mxu0 0.0
    %1123 = vmatpush.msra.mxu0 0.0
    %1124 = vmatpush.msra.mxu0 0.0
    %1125 = vmatpush.msra.mxu0 0.0
    %1126 = vmatpush.msra.mxu0 0.0
    %1127 = vmatpush.msra.mxu0 0.0
    %1128 = vmatpush.msra.mxu0 0.0
    %1129 = vmatpush.msra.mxu0 0.0
    %1130 = vmatpush.msra.mxu0 0.0
    %1131 = vmatpush.msra.mxu0 0.0
    %1132 = vmatpush.msra.mxu0 0.0
    %1133 = vmatpush.msra.mxu0 0.0
    %1134 = vmatpush.msra.mxu0 %v1067
    %1135 = vmatpush.msra.mxu0 %v1064
    %1136 = vmatpush.msra.mxu0 %v1061
    %1137 = vmatpush.msra.mxu0 %v1058
    %1138 = vmatmul.f32.gmra.mxu0 %v1111
    %v1139 = vpop.f32.mrf.mxu0
    %v1140 = vadd.f32 0.0, %v1139
    %1141 = vmatmul.f32.gmra.mxu0 %v1114
    %v1142 = vpop.f32.mrf.mxu0
    %v1143 = vadd.f32 0.0, %v1142
    %1144 = vmatmul.f32.gmra.mxu0 %v1117
    %v1145 = vpop.f32.mrf.mxu0
    %v1146 = vadd.f32 0.0, %v1145
    %1147 = vmatmul.f32.gmra.mxu0 %v1120
    %v1148 = vpop.f32.mrf.mxu0
    %v1149 = vadd.f32 0.0, %v1148
    %1150 = vdwg.mxu0
    %v1151 = vsub.f32 %v975, %v1140
    %v1152 = vsub.f32 %v976, %v1143
    %v1153 = vsub.f32 %v977, %v1146
    %v1154 = vsub.f32 %v978, %v1149
    %v1155 = vmul.f32 %v1151, 0.5
    %v1156 = vmul.f32 %v1152, 0.5
    %v1157 = vmul.f32 %v1153, 0.5
    %v1158 = vmul.f32 %v1154, 0.5
    %v1160 = vsel %vm815, %v1058, 0
    %v1163 = vsel %vm815, %v1061, 0
    %v1166 = vsel %vm815, %v1064, 0
    %v1169 = vsel %vm815, %v1067, 0
    %1171 = vmatpush.msra.mxu0 0.0
    %1172 = vmatpush.msra.mxu0 0.0
    %1173 = vmatpush.msra.mxu0 0.0
    %1174 = vmatpush.msra.mxu0 0.0
    %1175 = vmatpush.msra.mxu0 0.0
    %1176 = vmatpush.msra.mxu0 0.0
    %1177 = vmatpush.msra.mxu0 0.0
    %1178 = vmatpush.msra.mxu0 0.0
    %1179 = vmatpush.msra.mxu0 0.0
    %1180 = vmatpush.msra.mxu0 0.0
    %1181 = vmatpush.msra.mxu0 0.0
    %1182 = vmatpush.msra.mxu0 0.0
    %1183 = vmatpush.msra.mxu0 %v1158
    %1184 = vmatpush.msra.mxu0 %v1157
    %1185 = vmatpush.msra.mxu0 %v1156
    %1186 = vmatpush.msra.mxu0 %v1155
    %1187 = vmatmul.f32.gmra.mxu0 %v1160
    %v1188 = vpop.f32.mrf.mxu0
    %v1189 = vadd.f32 0.0, %v1188
    %1190 = vmatmul.f32.gmra.mxu0 %v1163
    %v1191 = vpop.f32.mrf.mxu0
    %v1192 = vadd.f32 0.0, %v1191
    %1193 = vmatmul.f32.gmra.mxu0 %v1166
    %v1194 = vpop.f32.mrf.mxu0
    %v1195 = vadd.f32 0.0, %v1194
    %1196 = vmatmul.f32.gmra.mxu0 %v1169
    %v1197 = vpop.f32.mrf.mxu0
    %v1198 = vadd.f32 0.0, %v1197
    %1199 = vdwg.mxu0
    %v1201 = vsel %vm815, %v1155, 0
    %v1204 = vsel %vm815, %v1156, 0
    %v1207 = vsel %vm815, %v1157, 0
    %v1210 = vsel %vm815, %v1158, 0
    %1212 = vmatpush.msra.mxu0 0.0
    %1213 = vmatpush.msra.mxu0 0.0
    %1214 = vmatpush.msra.mxu0 0.0
    %1215 = vmatpush.msra.mxu0 0.0
    %1216 = vmatpush.msra.mxu0 0.0
    %1217 = vmatpush.msra.mxu0 0.0
    %1218 = vmatpush.msra.mxu0 0.0
    %1219 = vmatpush.msra.mxu0 0.0
    %1220 = vmatpush.msra.mxu0 0.0
    %1221 = vmatpush.msra.mxu0 0.0
    %1222 = vmatpush.msra.mxu0 0.0
    %1223 = vmatpush.msra.mxu0 0.0
    %1224 = vmatpush.msra.mxu0 %v1108
    %1225 = vmatpush.msra.mxu0 %v1105
    %1226 = vmatpush.msra.mxu0 %v1102
    %1227 = vmatpush.msra.mxu0 %v1099
    %1228 = vmatmul.f32.gmra.mxu0 %v1201
    %v1229 = vpop.f32.mrf.mxu0
    %v1230 = vadd.f32 0.0, %v1229
    %1231 = vmatmul.f32.gmra.mxu0 %v1204
    %v1232 = vpop.f32.mrf.mxu0
    %v1233 = vadd.f32 0.0, %v1232
    %1234 = vmatmul.f32.gmra.mxu0 %v1207
    %v1235 = vpop.f32.mrf.mxu0
    %v1236 = vadd.f32 0.0, %v1235
    %1237 = vmatmul.f32.gmra.mxu0 %v1210
    %v1238 = vpop.f32.mrf.mxu0
    %v1239 = vadd.f32 0.0, %v1238
    %1240 = vdwg.mxu0
    %v1242 = vsel %vm815, %v1230, 0
    %v1245 = vsel %vm815, %v1233, 0
    %v1248 = vsel %vm815, %v1236, 0
    %v1251 = vsel %vm815, %v1239, 0
    %1253 = vmatpush.msra.mxu0 0.0
    %1254 = vmatpush.msra.mxu0 0.0
    %1255 = vmatpush.msra.mxu0 0.0
    %1256 = vmatpush.msra.mxu0 0.0
    %1257 = vmatpush.msra.mxu0 0.0
    %1258 = vmatpush.msra.mxu0 0.0
    %1259 = vmatpush.msra.mxu0 0.0
    %1260 = vmatpush.msra.mxu0 0.0
    %1261 = vmatpush.msra.mxu0 0.0
    %1262 = vmatpush.msra.mxu0 0.0
    %1263 = vmatpush.msra.mxu0 0.0
    %1264 = vmatpush.msra.mxu0 0.0
    %1265 = vmatpush.msra.mxu0 %v1198
    %1266 = vmatpush.msra.mxu0 %v1195
    %1267 = vmatpush.msra.mxu0 %v1192
    %1268 = vmatpush.msra.mxu0 %v1189
    %1269 = vmatmul.f32.gmra.mxu0 %v1242
    %v1270 = vpop.f32.mrf.mxu0
    %v1271 = vadd.f32 0.0, %v1270
    %1272 = vmatmul.f32.gmra.mxu0 %v1245
    %v1273 = vpop.f32.mrf.mxu0
    %v1274 = vadd.f32 0.0, %v1273
    %1275 = vmatmul.f32.gmra.mxu0 %v1248
    %v1276 = vpop.f32.mrf.mxu0
    %v1277 = vadd.f32 0.0, %v1276
    %1278 = vmatmul.f32.gmra.mxu0 %v1251
    %v1279 = vpop.f32.mrf.mxu0
    %v1280 = vadd.f32 0.0, %v1279
    %1281 = vdwg.mxu0
    %v1282 = vsub.f32 %v975, %v1271
    %v1283 = vsub.f32 %v976, %v1274
    %v1284 = vsub.f32 %v977, %v1277
    %v1285 = vsub.f32 %v978, %v1280
    %v1286 = vmul.f32 %v1282, 0.5
    %v1287 = vmul.f32 %v1283, 0.5
    %v1288 = vmul.f32 %v1284, 0.5
    %v1289 = vmul.f32 %v1285, 0.5
    %v1291 = vsel %vm815, %v1189, 0
    %v1294 = vsel %vm815, %v1192, 0
    %v1297 = vsel %vm815, %v1195, 0
    %v1300 = vsel %vm815, %v1198, 0
    %1302 = vmatpush.msra.mxu0 0.0
    %1303 = vmatpush.msra.mxu0 0.0
    %1304 = vmatpush.msra.mxu0 0.0
    %1305 = vmatpush.msra.mxu0 0.0
    %1306 = vmatpush.msra.mxu0 0.0
    %1307 = vmatpush.msra.mxu0 0.0
    %1308 = vmatpush.msra.mxu0 0.0
    %1309 = vmatpush.msra.mxu0 0.0
    %1310 = vmatpush.msra.mxu0 0.0
    %1311 = vmatpush.msra.mxu0 0.0
    %1312 = vmatpush.msra.mxu0 0.0
    %1313 = vmatpush.msra.mxu0 0.0
    %1314 = vmatpush.msra.mxu0 %v1289
    %1315 = vmatpush.msra.mxu0 %v1288
    %1316 = vmatpush.msra.mxu0 %v1287
    %1317 = vmatpush.msra.mxu0 %v1286
    %1318 = vmatmul.f32.gmra.mxu0 %v1291
    %v1319 = vpop.f32.mrf.mxu0
    %v1320 = vadd.f32 0.0, %v1319
    %1321 = vmatmul.f32.gmra.mxu0 %v1294
    %v1322 = vpop.f32.mrf.mxu0
    %v1323 = vadd.f32 0.0, %v1322
    %1324 = vmatmul.f32.gmra.mxu0 %v1297
    %v1325 = vpop.f32.mrf.mxu0
    %v1326 = vadd.f32 0.0, %v1325
    %1327 = vmatmul.f32.gmra.mxu0 %v1300
    %v1328 = vpop.f32.mrf.mxu0
    %v1329 = vadd.f32 0.0, %v1328
    %1330 = vdwg.mxu0
    %v1332 = vsel %vm815, %v1286, 0
    %v1335 = vsel %vm815, %v1287, 0
    %v1338 = vsel %vm815, %v1288, 0
    %v1341 = vsel %vm815, %v1289, 0
    %1343 = vmatpush.msra.mxu0 0.0
    %1344 = vmatpush.msra.mxu0 0.0
    %1345 = vmatpush.msra.mxu0 0.0
    %1346 = vmatpush.msra.mxu0 0.0
    %1347 = vmatpush.msra.mxu0 0.0
    %1348 = vmatpush.msra.mxu0 0.0
    %1349 = vmatpush.msra.mxu0 0.0
    %1350 = vmatpush.msra.mxu0 0.0
    %1351 = vmatpush.msra.mxu0 0.0
    %1352 = vmatpush.msra.mxu0 0.0
    %1353 = vmatpush.msra.mxu0 0.0
    %1354 = vmatpush.msra.mxu0 0.0
    %1355 = vmatpush.msra.mxu0 %v1239
    %1356 = vmatpush.msra.mxu0 %v1236
    %1357 = vmatpush.msra.mxu0 %v1233
    %1358 = vmatpush.msra.mxu0 %v1230
    %1359 = vmatmul.f32.gmra.mxu0 %v1332
    %v1360 = vpop.f32.mrf.mxu0
    %v1361 = vadd.f32 0.0, %v1360
    %1362 = vmatmul.f32.gmra.mxu0 %v1335
    %v1363 = vpop.f32.mrf.mxu0
    %v1364 = vadd.f32 0.0, %v1363
    %1365 = vmatmul.f32.gmra.mxu0 %v1338
    %v1366 = vpop.f32.mrf.mxu0
    %v1367 = vadd.f32 0.0, %v1366
    %1368 = vmatmul.f32.gmra.mxu0 %v1341
    %v1369 = vpop.f32.mrf.mxu0
    %v1370 = vadd.f32 0.0, %v1369
    %1371 = vdwg.mxu0
    %v1373 = vsel %vm815, %v1361, 0
    %v1376 = vsel %vm815, %v1364, 0
    %v1379 = vsel %vm815, %v1367, 0
    %v1382 = vsel %vm815, %v1370, 0
    %1384 = vmatpush.msra.mxu0 0.0
    %1385 = vmatpush.msra.mxu0 0.0
    %1386 = vmatpush.msra.mxu0 0.0
    %1387 = vmatpush.msra.mxu0 0.0
    %1388 = vmatpush.msra.mxu0 0.0
    %1389 = vmatpush.msra.mxu0 0.0
    %1390 = vmatpush.msra.mxu0 0.0
    %1391 = vmatpush.msra.mxu0 0.0
    %1392 = vmatpush.msra.mxu0 0.0
    %1393 = vmatpush.msra.mxu0 0.0
    %1394 = vmatpush.msra.mxu0 0.0
    %1395 = vmatpush.msra.mxu0 0.0
    %1396 = vmatpush.msra.mxu0 %v1329
    %1397 = vmatpush.msra.mxu0 %v1326
    %1398 = vmatpush.msra.mxu0 %v1323
    %1399 = vmatpush.msra.mxu0 %v1320
    %1400 = vmatmul.f32.gmra.mxu0 %v1373
    %v1401 = vpop.f32.mrf.mxu0
    %v1402 = vadd.f32 0.0, %v1401
    %1403 = vmatmul.f32.gmra.mxu0 %v1376
    %v1404 = vpop.f32.mrf.mxu0
    %v1405 = vadd.f32 0.0, %v1404
    %1406 = vmatmul.f32.gmra.mxu0 %v1379
    %v1407 = vpop.f32.mrf.mxu0
    %v1408 = vadd.f32 0.0, %v1407
    %1409 = vmatmul.f32.gmra.mxu0 %v1382
    %v1410 = vpop.f32.mrf.mxu0
    %v1411 = vadd.f32 0.0, %v1410
    %1412 = vdwg.mxu0
    %v1413 = vsub.f32 %v975, %v1402
    %v1414 = vsub.f32 %v976, %v1405
    %v1415 = vsub.f32 %v977, %v1408
    %v1416 = vsub.f32 %v978, %v1411
    %v1417 = vmul.f32 %v1413, 0.5
    %v1418 = vmul.f32 %v1414, 0.5
    %v1419 = vmul.f32 %v1415, 0.5
    %v1420 = vmul.f32 %v1416, 0.5
    %v1422 = vsel %vm815, %v1320, 0
    %v1425 = vsel %vm815, %v1323, 0
    %v1428 = vsel %vm815, %v1326, 0
    %v1431 = vsel %vm815, %v1329, 0
    %1433 = vmatpush.msra.mxu0 0.0
    %1434 = vmatpush.msra.mxu0 0.0
    %1435 = vmatpush.msra.mxu0 0.0
    %1436 = vmatpush.msra.mxu0 0.0
    %1437 = vmatpush.msra.mxu0 0.0
    %1438 = vmatpush.msra.mxu0 0.0
    %1439 = vmatpush.msra.mxu0 0.0
    %1440 = vmatpush.msra.mxu0 0.0
    %1441 = vmatpush.msra.mxu0 0.0
    %1442 = vmatpush.msra.mxu0 0.0
    %1443 = vmatpush.msra.mxu0 0.0
    %1444 = vmatpush.msra.mxu0 0.0
    %1445 = vmatpush.msra.mxu0 %v1420
    %1446 = vmatpush.msra.mxu0 %v1419
    %1447 = vmatpush.msra.mxu0 %v1418
    %1448 = vmatpush.msra.mxu0 %v1417
    %1449 = vmatmul.f32.gmra.mxu0 %v1422
    %v1450 = vpop.f32.mrf.mxu0
    %v1451 = vadd.f32 0.0, %v1450
    %1452 = vmatmul.f32.gmra.mxu0 %v1425
    %v1453 = vpop.f32.mrf.mxu0
    %v1454 = vadd.f32 0.0, %v1453
    %1455 = vmatmul.f32.gmra.mxu0 %v1428
    %v1456 = vpop.f32.mrf.mxu0
    %v1457 = vadd.f32 0.0, %v1456
    %1458 = vmatmul.f32.gmra.mxu0 %v1431
    %v1459 = vpop.f32.mrf.mxu0
    %v1460 = vadd.f32 0.0, %v1459
    %1461 = vdwg.mxu0
    %v1463 = vsel %vm815, %v1417, 0
    %v1466 = vsel %vm815, %v1418, 0
    %v1469 = vsel %vm815, %v1419, 0
    %v1472 = vsel %vm815, %v1420, 0
    %1474 = vmatpush.msra.mxu0 0.0
    %1475 = vmatpush.msra.mxu0 0.0
    %1476 = vmatpush.msra.mxu0 0.0
    %1477 = vmatpush.msra.mxu0 0.0
    %1478 = vmatpush.msra.mxu0 0.0
    %1479 = vmatpush.msra.mxu0 0.0
    %1480 = vmatpush.msra.mxu0 0.0
    %1481 = vmatpush.msra.mxu0 0.0
    %1482 = vmatpush.msra.mxu0 0.0
    %1483 = vmatpush.msra.mxu0 0.0
    %1484 = vmatpush.msra.mxu0 0.0
    %1485 = vmatpush.msra.mxu0 0.0
    %1486 = vmatpush.msra.mxu0 %v1370
    %1487 = vmatpush.msra.mxu0 %v1367
    %1488 = vmatpush.msra.mxu0 %v1364
    %1489 = vmatpush.msra.mxu0 %v1361
    %1490 = vmatmul.f32.gmra.mxu0 %v1463
    %v1491 = vpop.f32.mrf.mxu0
    %v1492 = vadd.f32 0.0, %v1491
    %1493 = vmatmul.f32.gmra.mxu0 %v1466
    %v1494 = vpop.f32.mrf.mxu0
    %v1495 = vadd.f32 0.0, %v1494
    %1496 = vmatmul.f32.gmra.mxu0 %v1469
    %v1497 = vpop.f32.mrf.mxu0
    %v1498 = vadd.f32 0.0, %v1497
    %1499 = vmatmul.f32.gmra.mxu0 %v1472
    %v1500 = vpop.f32.mrf.mxu0
    %v1501 = vadd.f32 0.0, %v1500
    %1502 = vdwg.mxu0
    %v1504 = vsel %vm815, %v1492, 0
    %v1507 = vsel %vm815, %v1495, 0
    %v1510 = vsel %vm815, %v1498, 0
    %v1513 = vsel %vm815, %v1501, 0
    %1515 = vmatpush.msra.mxu0 0.0
    %1516 = vmatpush.msra.mxu0 0.0
    %1517 = vmatpush.msra.mxu0 0.0
    %1518 = vmatpush.msra.mxu0 0.0
    %1519 = vmatpush.msra.mxu0 0.0
    %1520 = vmatpush.msra.mxu0 0.0
    %1521 = vmatpush.msra.mxu0 0.0
    %1522 = vmatpush.msra.mxu0 0.0
    %1523 = vmatpush.msra.mxu0 0.0
    %1524 = vmatpush.msra.mxu0 0.0
    %1525 = vmatpush.msra.mxu0 0.0
    %1526 = vmatpush.msra.mxu0 0.0
    %1527 = vmatpush.msra.mxu0 %v1460
    %1528 = vmatpush.msra.mxu0 %v1457
    %1529 = vmatpush.msra.mxu0 %v1454
    %1530 = vmatpush.msra.mxu0 %v1451
    %1531 = vmatmul.f32.gmra.mxu0 %v1504
    %v1532 = vpop.f32.mrf.mxu0
    %v1533 = vadd.f32 0.0, %v1532
    %1534 = vmatmul.f32.gmra.mxu0 %v1507
    %v1535 = vpop.f32.mrf.mxu0
    %v1536 = vadd.f32 0.0, %v1535
    %1537 = vmatmul.f32.gmra.mxu0 %v1510
    %v1538 = vpop.f32.mrf.mxu0
    %v1539 = vadd.f32 0.0, %v1538
    %1540 = vmatmul.f32.gmra.mxu0 %v1513
    %v1541 = vpop.f32.mrf.mxu0
    %v1542 = vadd.f32 0.0, %v1541
    %1543 = vdwg.mxu0
    %v1544 = vsub.f32 %v975, %v1533
    %v1545 = vsub.f32 %v976, %v1536
    %v1546 = vsub.f32 %v977, %v1539
    %v1547 = vsub.f32 %v978, %v1542
    %v1548 = vmul.f32 %v1544, 0.5
    %v1549 = vmul.f32 %v1545, 0.5
    %v1550 = vmul.f32 %v1546, 0.5
    %v1551 = vmul.f32 %v1547, 0.5
    %v1553 = vsel %vm815, %v1451, 0
    %v1556 = vsel %vm815, %v1454, 0
    %v1559 = vsel %vm815, %v1457, 0
    %v1562 = vsel %vm815, %v1460, 0
    %1564 = vmatpush.msra.mxu0 0.0
    %1565 = vmatpush.msra.mxu0 0.0
    %1566 = vmatpush.msra.mxu0 0.0
    %1567 = vmatpush.msra.mxu0 0.0
    %1568 = vmatpush.msra.mxu0 0.0
    %1569 = vmatpush.msra.mxu0 0.0
    %1570 = vmatpush.msra.mxu0 0.0
    %1571 = vmatpush.msra.mxu0 0.0
    %1572 = vmatpush.msra.mxu0 0.0
    %1573 = vmatpush.msra.mxu0 0.0
    %1574 = vmatpush.msra.mxu0 0.0
    %1575 = vmatpush.msra.mxu0 0.0
    %1576 = vmatpush.msra.mxu0 %v1551
    %1577 = vmatpush.msra.mxu0 %v1550
    %1578 = vmatpush.msra.mxu0 %v1549
    %1579 = vmatpush.msra.mxu0 %v1548
    %1580 = vmatmul.f32.gmra.mxu0 %v1553
    %v1581 = vpop.f32.mrf.mxu0
    %v1582 = vadd.f32 0.0, %v1581
    %1583 = vmatmul.f32.gmra.mxu0 %v1556
    %v1584 = vpop.f32.mrf.mxu0
    %v1585 = vadd.f32 0.0, %v1584
    %1586 = vmatmul.f32.gmra.mxu0 %v1559
    %v1587 = vpop.f32.mrf.mxu0
    %v1588 = vadd.f32 0.0, %v1587
    %1589 = vmatmul.f32.gmra.mxu0 %v1562
    %v1590 = vpop.f32.mrf.mxu0
    %v1591 = vadd.f32 0.0, %v1590
    %1592 = vdwg.mxu0
    %v1594 = vsel %vm815, %v1548, 0
    %v1597 = vsel %vm815, %v1549, 0
    %v1600 = vsel %vm815, %v1550, 0
    %v1603 = vsel %vm815, %v1551, 0
    %1605 = vmatpush.msra.mxu0 0.0
    %1606 = vmatpush.msra.mxu0 0.0
    %1607 = vmatpush.msra.mxu0 0.0
    %1608 = vmatpush.msra.mxu0 0.0
    %1609 = vmatpush.msra.mxu0 0.0
    %1610 = vmatpush.msra.mxu0 0.0
    %1611 = vmatpush.msra.mxu0 0.0
    %1612 = vmatpush.msra.mxu0 0.0
    %1613 = vmatpush.msra.mxu0 0.0
    %1614 = vmatpush.msra.mxu0 0.0
    %1615 = vmatpush.msra.mxu0 0.0
    %1616 = vmatpush.msra.mxu0 0.0
    %1617 = vmatpush.msra.mxu0 %v1501
    %1618 = vmatpush.msra.mxu0 %v1498
    %1619 = vmatpush.msra.mxu0 %v1495
    %1620 = vmatpush.msra.mxu0 %v1492
    %1621 = vmatmul.f32.gmra.mxu0 %v1594
    %v1622 = vpop.f32.mrf.mxu0
    %v1623 = vadd.f32 0.0, %v1622
    %1624 = vmatmul.f32.gmra.mxu0 %v1597
    %v1625 = vpop.f32.mrf.mxu0
    %v1626 = vadd.f32 0.0, %v1625
    %1627 = vmatmul.f32.gmra.mxu0 %v1600
    %v1628 = vpop.f32.mrf.mxu0
    %v1629 = vadd.f32 0.0, %v1628
    %1630 = vmatmul.f32.gmra.mxu0 %v1603
    %v1631 = vpop.f32.mrf.mxu0
    %v1632 = vadd.f32 0.0, %v1631
    %1633 = vdwg.mxu0
    %v1635 = vsel %vm815, %v1623, 0
    %v1638 = vsel %vm815, %v1626, 0
    %v1641 = vsel %vm815, %v1629, 0
    %v1644 = vsel %vm815, %v1632, 0
    %1646 = vmatpush.msra.mxu0 0.0
    %1647 = vmatpush.msra.mxu0 0.0
    %1648 = vmatpush.msra.mxu0 0.0
    %1649 = vmatpush.msra.mxu0 0.0
    %1650 = vmatpush.msra.mxu0 0.0
    %1651 = vmatpush.msra.mxu0 0.0
    %1652 = vmatpush.msra.mxu0 0.0
    %1653 = vmatpush.msra.mxu0 0.0
    %1654 = vmatpush.msra.mxu0 0.0
    %1655 = vmatpush.msra.mxu0 0.0
    %1656 = vmatpush.msra.mxu0 0.0
    %1657 = vmatpush.msra.mxu0 0.0
    %1658 = vmatpush.msra.mxu0 %v1591
    %1659 = vmatpush.msra.mxu0 %v1588
    %1660 = vmatpush.msra.mxu0 %v1585
    %1661 = vmatpush.msra.mxu0 %v1582
    %1662 = vmatmul.f32.gmra.mxu0 %v1635
    %v1663 = vpop.f32.mrf.mxu0
    %v1664 = vadd.f32 0.0, %v1663
    %1665 = vmatmul.f32.gmra.mxu0 %v1638
    %v1666 = vpop.f32.mrf.mxu0
    %v1667 = vadd.f32 0.0, %v1666
    %1668 = vmatmul.f32.gmra.mxu0 %v1641
    %v1669 = vpop.f32.mrf.mxu0
    %v1670 = vadd.f32 0.0, %v1669
    %1671 = vmatmul.f32.gmra.mxu0 %v1644
    %v1672 = vpop.f32.mrf.mxu0
    %v1673 = vadd.f32 0.0, %v1672
    %1674 = vdwg.mxu0
    %v1675 = vsub.f32 %v975, %v1664
    %v1676 = vsub.f32 %v976, %v1667
    %v1677 = vsub.f32 %v977, %v1670
    %v1678 = vsub.f32 %v978, %v1673
    %v1679 = vmul.f32 %v1675, 0.5
    %v1680 = vmul.f32 %v1676, 0.5
    %v1681 = vmul.f32 %v1677, 0.5
    %v1682 = vmul.f32 %v1678, 0.5
    %v1684 = vsel %vm815, %v1582, 0
    %v1687 = vsel %vm815, %v1585, 0
    %v1690 = vsel %vm815, %v1588, 0
    %v1693 = vsel %vm815, %v1591, 0
    %1695 = vmatpush.msra.mxu0 0.0
    %1696 = vmatpush.msra.mxu0 0.0
    %1697 = vmatpush.msra.mxu0 0.0
    %1698 = vmatpush.msra.mxu0 0.0
    %1699 = vmatpush.msra.mxu0 0.0
    %1700 = vmatpush.msra.mxu0 0.0
    %1701 = vmatpush.msra.mxu0 0.0
    %1702 = vmatpush.msra.mxu0 0.0
    %1703 = vmatpush.msra.mxu0 0.0
    %1704 = vmatpush.msra.mxu0 0.0
    %1705 = vmatpush.msra.mxu0 0.0
    %1706 = vmatpush.msra.mxu0 0.0
    %1707 = vmatpush.msra.mxu0 %v1682
    %1708 = vmatpush.msra.mxu0 %v1681
    %1709 = vmatpush.msra.mxu0 %v1680
    %1710 = vmatpush.msra.mxu0 %v1679
    %1711 = vmatmul.f32.gmra.mxu0 %v1684
    %v1712 = vpop.f32.mrf.mxu0
    %v1713 = vadd.f32 0.0, %v1712
    %1714 = vmatmul.f32.gmra.mxu0 %v1687
    %v1715 = vpop.f32.mrf.mxu0
    %v1716 = vadd.f32 0.0, %v1715
    %1717 = vmatmul.f32.gmra.mxu0 %v1690
    %v1718 = vpop.f32.mrf.mxu0
    %v1719 = vadd.f32 0.0, %v1718
    %1720 = vmatmul.f32.gmra.mxu0 %v1693
    %v1721 = vpop.f32.mrf.mxu0
    %v1722 = vadd.f32 0.0, %v1721
    %1723 = vdwg.mxu0
    %v1725 = vsel %vm815, %v1679, 0
    %v1728 = vsel %vm815, %v1680, 0
    %v1731 = vsel %vm815, %v1681, 0
    %v1734 = vsel %vm815, %v1682, 0
    %1736 = vmatpush.msra.mxu0 0.0
    %1737 = vmatpush.msra.mxu0 0.0
    %1738 = vmatpush.msra.mxu0 0.0
    %1739 = vmatpush.msra.mxu0 0.0
    %1740 = vmatpush.msra.mxu0 0.0
    %1741 = vmatpush.msra.mxu0 0.0
    %1742 = vmatpush.msra.mxu0 0.0
    %1743 = vmatpush.msra.mxu0 0.0
    %1744 = vmatpush.msra.mxu0 0.0
    %1745 = vmatpush.msra.mxu0 0.0
    %1746 = vmatpush.msra.mxu0 0.0
    %1747 = vmatpush.msra.mxu0 0.0
    %1748 = vmatpush.msra.mxu0 %v1632
    %1749 = vmatpush.msra.mxu0 %v1629
    %1750 = vmatpush.msra.mxu0 %v1626
    %1751 = vmatpush.msra.mxu0 %v1623
    %1752 = vmatmul.f32.gmra.mxu0 %v1725
    %v1753 = vpop.f32.mrf.mxu0
    %v1754 = vadd.f32 0.0, %v1753
    %1755 = vmatmul.f32.gmra.mxu0 %v1728
    %v1756 = vpop.f32.mrf.mxu0
    %v1757 = vadd.f32 0.0, %v1756
    %1758 = vmatmul.f32.gmra.mxu0 %v1731
    %v1759 = vpop.f32.mrf.mxu0
    %v1760 = vadd.f32 0.0, %v1759
    %1761 = vmatmul.f32.gmra.mxu0 %v1734
    %v1762 = vpop.f32.mrf.mxu0
    %v1763 = vadd.f32 0.0, %v1762
    %1764 = vdwg.mxu0
    %v1766 = vsel %vm815, %v1754, 0
    %v1769 = vsel %vm815, %v1757, 0
    %v1772 = vsel %vm815, %v1760, 0
    %v1775 = vsel %vm815, %v1763, 0
    %1777 = vmatpush.msra.mxu0 0.0
    %1778 = vmatpush.msra.mxu0 0.0
    %1779 = vmatpush.msra.mxu0 0.0
    %1780 = vmatpush.msra.mxu0 0.0
    %1781 = vmatpush.msra.mxu0 0.0
    %1782 = vmatpush.msra.mxu0 0.0
    %1783 = vmatpush.msra.mxu0 0.0
    %1784 = vmatpush.msra.mxu0 0.0
    %1785 = vmatpush.msra.mxu0 0.0
    %1786 = vmatpush.msra.mxu0 0.0
    %1787 = vmatpush.msra.mxu0 0.0
    %1788 = vmatpush.msra.mxu0 0.0
    %1789 = vmatpush.msra.mxu0 %v1722
    %1790 = vmatpush.msra.mxu0 %v1719
    %1791 = vmatpush.msra.mxu0 %v1716
    %1792 = vmatpush.msra.mxu0 %v1713
    %1793 = vmatmul.f32.gmra.mxu0 %v1766
    %v1794 = vpop.f32.mrf.mxu0
    %v1795 = vadd.f32 0.0, %v1794
    %1796 = vmatmul.f32.gmra.mxu0 %v1769
    %v1797 = vpop.f32.mrf.mxu0
    %v1798 = vadd.f32 0.0, %v1797
    %1799 = vmatmul.f32.gmra.mxu0 %v1772
    %v1800 = vpop.f32.mrf.mxu0
    %v1801 = vadd.f32 0.0, %v1800
    %1802 = vmatmul.f32.gmra.mxu0 %v1775
    %v1803 = vpop.f32.mrf.mxu0
    %v1804 = vadd.f32 0.0, %v1803
    %1805 = vdwg.mxu0
    %v1806 = vsub.f32 %v975, %v1795
    %v1807 = vsub.f32 %v976, %v1798
    %v1808 = vsub.f32 %v977, %v1801
    %v1809 = vsub.f32 %v978, %v1804
    %v1810 = vmul.f32 %v1806, 0.5
    %v1811 = vmul.f32 %v1807, 0.5
    %v1812 = vmul.f32 %v1808, 0.5
    %v1813 = vmul.f32 %v1809, 0.5
    %v1815 = vsel %vm815, %v1713, 0
    %v1818 = vsel %vm815, %v1716, 0
    %v1821 = vsel %vm815, %v1719, 0
    %v1824 = vsel %vm815, %v1722, 0
    %1826 = vmatpush.msra.mxu0 0.0
    %1827 = vmatpush.msra.mxu0 0.0
    %1828 = vmatpush.msra.mxu0 0.0
    %1829 = vmatpush.msra.mxu0 0.0
    %1830 = vmatpush.msra.mxu0 0.0
    %1831 = vmatpush.msra.mxu0 0.0
    %1832 = vmatpush.msra.mxu0 0.0
    %1833 = vmatpush.msra.mxu0 0.0
    %1834 = vmatpush.msra.mxu0 0.0
    %1835 = vmatpush.msra.mxu0 0.0
    %1836 = vmatpush.msra.mxu0 0.0
    %1837 = vmatpush.msra.mxu0 0.0
    %1838 = vmatpush.msra.mxu0 %v1813
    %1839 = vmatpush.msra.mxu0 %v1812
    %1840 = vmatpush.msra.mxu0 %v1811
    %1841 = vmatpush.msra.mxu0 %v1810
    %1842 = vmatmul.f32.gmra.mxu0 %v1815
    %v1843 = vpop.f32.mrf.mxu0
    %v1844 = vadd.f32 0.0, %v1843
    %1845 = vmatmul.f32.gmra.mxu0 %v1818
    %v1846 = vpop.f32.mrf.mxu0
    %v1847 = vadd.f32 0.0, %v1846
    %1848 = vmatmul.f32.gmra.mxu0 %v1821
    %v1849 = vpop.f32.mrf.mxu0
    %v1850 = vadd.f32 0.0, %v1849
    %1851 = vmatmul.f32.gmra.mxu0 %v1824
    %v1852 = vpop.f32.mrf.mxu0
    %v1853 = vadd.f32 0.0, %v1852
    %1854 = vdwg.mxu0
    %v1856 = vsel %vm815, %v1810, 0
    %v1859 = vsel %vm815, %v1811, 0
    %v1862 = vsel %vm815, %v1812, 0
    %v1865 = vsel %vm815, %v1813, 0
    %1867 = vmatpush.msra.mxu0 0.0
    %1868 = vmatpush.msra.mxu0 0.0
    %1869 = vmatpush.msra.mxu0 0.0
    %1870 = vmatpush.msra.mxu0 0.0
    %1871 = vmatpush.msra.mxu0 0.0
    %1872 = vmatpush.msra.mxu0 0.0
    %1873 = vmatpush.msra.mxu0 0.0
    %1874 = vmatpush.msra.mxu0 0.0
    %1875 = vmatpush.msra.mxu0 0.0
    %1876 = vmatpush.msra.mxu0 0.0
    %1877 = vmatpush.msra.mxu0 0.0
    %1878 = vmatpush.msra.mxu0 0.0
    %1879 = vmatpush.msra.mxu0 %v1763
    %1880 = vmatpush.msra.mxu0 %v1760
    %1881 = vmatpush.msra.mxu0 %v1757
    %1882 = vmatpush.msra.mxu0 %v1754
    %1883 = vmatmul.f32.gmra.mxu0 %v1856
    %v1884 = vpop.f32.mrf.mxu0
    %v1885 = vadd.f32 0.0, %v1884
    %1886 = vmatmul.f32.gmra.mxu0 %v1859
    %v1887 = vpop.f32.mrf.mxu0
    %v1888 = vadd.f32 0.0, %v1887
    %1889 = vmatmul.f32.gmra.mxu0 %v1862
    %v1890 = vpop.f32.mrf.mxu0
    %v1891 = vadd.f32 0.0, %v1890
    %1892 = vmatmul.f32.gmra.mxu0 %v1865
    %v1893 = vpop.f32.mrf.mxu0
    %v1894 = vadd.f32 0.0, %v1893
    %1895 = vdwg.mxu0
    %v1897 = vsel %vm815, %v1885, 0
    %v1900 = vsel %vm815, %v1888, 0
    %v1903 = vsel %vm815, %v1891, 0
    %v1906 = vsel %vm815, %v1894, 0
    %1908 = vmatpush.msra.mxu0 0.0
    %1909 = vmatpush.msra.mxu0 0.0
    %1910 = vmatpush.msra.mxu0 0.0
    %1911 = vmatpush.msra.mxu0 0.0
    %1912 = vmatpush.msra.mxu0 0.0
    %1913 = vmatpush.msra.mxu0 0.0
    %1914 = vmatpush.msra.mxu0 0.0
    %1915 = vmatpush.msra.mxu0 0.0
    %1916 = vmatpush.msra.mxu0 0.0
    %1917 = vmatpush.msra.mxu0 0.0
    %1918 = vmatpush.msra.mxu0 0.0
    %1919 = vmatpush.msra.mxu0 0.0
    %1920 = vmatpush.msra.mxu0 %v1853
    %1921 = vmatpush.msra.mxu0 %v1850
    %1922 = vmatpush.msra.mxu0 %v1847
    %1923 = vmatpush.msra.mxu0 %v1844
    %1924 = vmatmul.f32.gmra.mxu0 %v1897
    %v1925 = vpop.f32.mrf.mxu0
    %v1926 = vadd.f32 0.0, %v1925
    %1927 = vmatmul.f32.gmra.mxu0 %v1900
    %v1928 = vpop.f32.mrf.mxu0
    %v1929 = vadd.f32 0.0, %v1928
    %1930 = vmatmul.f32.gmra.mxu0 %v1903
    %v1931 = vpop.f32.mrf.mxu0
    %v1932 = vadd.f32 0.0, %v1931
    %1933 = vmatmul.f32.gmra.mxu0 %v1906
    %v1934 = vpop.f32.mrf.mxu0
    %v1935 = vadd.f32 0.0, %v1934
    %1936 = vdwg.mxu0
    %v1937 = vsub.f32 %v975, %v1926
    %v1938 = vsub.f32 %v976, %v1929
    %v1939 = vsub.f32 %v977, %v1932
    %v1940 = vsub.f32 %v978, %v1935
    %v1941 = vmul.f32 %v1937, 0.5
    %v1942 = vmul.f32 %v1938, 0.5
    %v1943 = vmul.f32 %v1939, 0.5
    %v1944 = vmul.f32 %v1940, 0.5
    %v1946 = vsel %vm815, %v1844, 0
    %v1949 = vsel %vm815, %v1847, 0
    %v1952 = vsel %vm815, %v1850, 0
    %v1955 = vsel %vm815, %v1853, 0
    %1957 = vmatpush.msra.mxu0 0.0
    %1958 = vmatpush.msra.mxu0 0.0
    %1959 = vmatpush.msra.mxu0 0.0
    %1960 = vmatpush.msra.mxu0 0.0
    %1961 = vmatpush.msra.mxu0 0.0
    %1962 = vmatpush.msra.mxu0 0.0
    %1963 = vmatpush.msra.mxu0 0.0
    %1964 = vmatpush.msra.mxu0 0.0
    %1965 = vmatpush.msra.mxu0 0.0
    %1966 = vmatpush.msra.mxu0 0.0
    %1967 = vmatpush.msra.mxu0 0.0
    %1968 = vmatpush.msra.mxu0 0.0
    %1969 = vmatpush.msra.mxu0 %v1944
    %1970 = vmatpush.msra.mxu0 %v1943
    %1971 = vmatpush.msra.mxu0 %v1942
    %1972 = vmatpush.msra.mxu0 %v1941
    %1973 = vmatmul.f32.gmra.mxu0 %v1946
    %v1974 = vpop.f32.mrf.mxu0
    %v1975 = vadd.f32 0.0, %v1974
    %1976 = vmatmul.f32.gmra.mxu0 %v1949
    %v1977 = vpop.f32.mrf.mxu0
    %v1978 = vadd.f32 0.0, %v1977
    %1979 = vmatmul.f32.gmra.mxu0 %v1952
    %v1980 = vpop.f32.mrf.mxu0
    %v1981 = vadd.f32 0.0, %v1980
    %1982 = vmatmul.f32.gmra.mxu0 %v1955
    %v1983 = vpop.f32.mrf.mxu0
    %v1984 = vadd.f32 0.0, %v1983
    %1985 = vdwg.mxu0
    %v1987 = vsel %vm815, %v1941, 0
    %v1990 = vsel %vm815, %v1942, 0
    %v1993 = vsel %vm815, %v1943, 0
    %v1996 = vsel %vm815, %v1944, 0
    %1998 = vmatpush.msra.mxu0 0.0
    %1999 = vmatpush.msra.mxu0 0.0
    %2000 = vmatpush.msra.mxu0 0.0
    %2001 = vmatpush.msra.mxu0 0.0
    %2002 = vmatpush.msra.mxu0 0.0
    %2003 = vmatpush.msra.mxu0 0.0
    %2004 = vmatpush.msra.mxu0 0.0
    %2005 = vmatpush.msra.mxu0 0.0
    %2006 = vmatpush.msra.mxu0 0.0
    %2007 = vmatpush.msra.mxu0 0.0
    %2008 = vmatpush.msra.mxu0 0.0
    %2009 = vmatpush.msra.mxu0 0.0
    %2010 = vmatpush.msra.mxu0 %v1894
    %2011 = vmatpush.msra.mxu0 %v1891
    %2012 = vmatpush.msra.mxu0 %v1888
    %2013 = vmatpush.msra.mxu0 %v1885
    %2014 = vmatmul.f32.gmra.mxu0 %v1987
    %v2015 = vpop.f32.mrf.mxu0
    %v2016 = vadd.f32 0.0, %v2015
    %2017 = vmatmul.f32.gmra.mxu0 %v1990
    %v2018 = vpop.f32.mrf.mxu0
    %v2019 = vadd.f32 0.0, %v2018
    %2020 = vmatmul.f32.gmra.mxu0 %v1993
    %v2021 = vpop.f32.mrf.mxu0
    %v2022 = vadd.f32 0.0, %v2021
    %2023 = vmatmul.f32.gmra.mxu0 %v1996
    %v2024 = vpop.f32.mrf.mxu0
    %v2025 = vadd.f32 0.0, %v2024
    %2026 = vdwg.mxu0
    %v2028 = vsel %vm815, %v2016, 0
    %v2031 = vsel %vm815, %v2019, 0
    %v2034 = vsel %vm815, %v2022, 0
    %v2037 = vsel %vm815, %v2025, 0
    %2039 = vmatpush.msra.mxu0 0.0
    %2040 = vmatpush.msra.mxu0 0.0
    %2041 = vmatpush.msra.mxu0 0.0
    %2042 = vmatpush.msra.mxu0 0.0
    %2043 = vmatpush.msra.mxu0 0.0
    %2044 = vmatpush.msra.mxu0 0.0
    %2045 = vmatpush.msra.mxu0 0.0
    %2046 = vmatpush.msra.mxu0 0.0
    %2047 = vmatpush.msra.mxu0 0.0
    %2048 = vmatpush.msra.mxu0 0.0
    %2049 = vmatpush.msra.mxu0 0.0
    %2050 = vmatpush.msra.mxu0 0.0
    %2051 = vmatpush.msra.mxu0 %v1984
    %2052 = vmatpush.msra.mxu0 %v1981
    %2053 = vmatpush.msra.mxu0 %v1978
    %2054 = vmatpush.msra.mxu0 %v1975
    %2055 = vmatmul.f32.gmra.mxu0 %v2028
    %v2056 = vpop.f32.mrf.mxu0
    %v2057 = vadd.f32 0.0, %v2056
    %2058 = vmatmul.f32.gmra.mxu0 %v2031
    %v2059 = vpop.f32.mrf.mxu0
    %v2060 = vadd.f32 0.0, %v2059
    %2061 = vmatmul.f32.gmra.mxu0 %v2034
    %v2062 = vpop.f32.mrf.mxu0
    %v2063 = vadd.f32 0.0, %v2062
    %2064 = vmatmul.f32.gmra.mxu0 %v2037
    %v2065 = vpop.f32.mrf.mxu0
    %v2066 = vadd.f32 0.0, %v2065
    %2067 = vdwg.mxu0
    %v2068 = vsub.f32 %v975, %v2057
    %v2069 = vsub.f32 %v976, %v2060
    %v2070 = vsub.f32 %v977, %v2063
    %v2071 = vsub.f32 %v978, %v2066
    %v2072 = vmul.f32 %v2068, 0.5
    %v2073 = vmul.f32 %v2069, 0.5
    %v2074 = vmul.f32 %v2070, 0.5
    %v2075 = vmul.f32 %v2071, 0.5
    %v2077 = vsel %vm815, %v1975, 0
    %v2080 = vsel %vm815, %v1978, 0
    %v2083 = vsel %vm815, %v1981, 0
    %v2086 = vsel %vm815, %v1984, 0
    %2088 = vmatpush.msra.mxu0 0.0
    %2089 = vmatpush.msra.mxu0 0.0
    %2090 = vmatpush.msra.mxu0 0.0
    %2091 = vmatpush.msra.mxu0 0.0
    %2092 = vmatpush.msra.mxu0 0.0
    %2093 = vmatpush.msra.mxu0 0.0
    %2094 = vmatpush.msra.mxu0 0.0
    %2095 = vmatpush.msra.mxu0 0.0
    %2096 = vmatpush.msra.mxu0 0.0
    %2097 = vmatpush.msra.mxu0 0.0
    %2098 = vmatpush.msra.mxu0 0.0
    %2099 = vmatpush.msra.mxu0 0.0
    %2100 = vmatpush.msra.mxu0 %v2075
    %2101 = vmatpush.msra.mxu0 %v2074
    %2102 = vmatpush.msra.mxu0 %v2073
    %2103 = vmatpush.msra.mxu0 %v2072
    %2104 = vmatmul.f32.gmra.mxu0 %v2077
    %v2105 = vpop.f32.mrf.mxu0
    %v2106 = vadd.f32 0.0, %v2105
    %2107 = vmatmul.f32.gmra.mxu0 %v2080
    %v2108 = vpop.f32.mrf.mxu0
    %v2109 = vadd.f32 0.0, %v2108
    %2110 = vmatmul.f32.gmra.mxu0 %v2083
    %v2111 = vpop.f32.mrf.mxu0
    %v2112 = vadd.f32 0.0, %v2111
    %2113 = vmatmul.f32.gmra.mxu0 %v2086
    %v2114 = vpop.f32.mrf.mxu0
    %v2115 = vadd.f32 0.0, %v2114
    %2116 = vdwg.mxu0
    %v2118 = vsel %vm815, %v2072, 0
    %v2121 = vsel %vm815, %v2073, 0
    %v2124 = vsel %vm815, %v2074, 0
    %v2127 = vsel %vm815, %v2075, 0
    %2129 = vmatpush.msra.mxu0 0.0
    %2130 = vmatpush.msra.mxu0 0.0
    %2131 = vmatpush.msra.mxu0 0.0
    %2132 = vmatpush.msra.mxu0 0.0
    %2133 = vmatpush.msra.mxu0 0.0
    %2134 = vmatpush.msra.mxu0 0.0
    %2135 = vmatpush.msra.mxu0 0.0
    %2136 = vmatpush.msra.mxu0 0.0
    %2137 = vmatpush.msra.mxu0 0.0
    %2138 = vmatpush.msra.mxu0 0.0
    %2139 = vmatpush.msra.mxu0 0.0
    %2140 = vmatpush.msra.mxu0 0.0
    %2141 = vmatpush.msra.mxu0 %v2025
    %2142 = vmatpush.msra.mxu0 %v2022
    %2143 = vmatpush.msra.mxu0 %v2019
    %2144 = vmatpush.msra.mxu0 %v2016
    %2145 = vmatmul.f32.gmra.mxu0 %v2118
    %v2146 = vpop.f32.mrf.mxu0
    %v2147 = vadd.f32 0.0, %v2146
    %2148 = vmatmul.f32.gmra.mxu0 %v2121
    %v2149 = vpop.f32.mrf.mxu0
    %v2150 = vadd.f32 0.0, %v2149
    %2151 = vmatmul.f32.gmra.mxu0 %v2124
    %v2152 = vpop.f32.mrf.mxu0
    %v2153 = vadd.f32 0.0, %v2152
    %2154 = vmatmul.f32.gmra.mxu0 %v2127
    %v2155 = vpop.f32.mrf.mxu0
    %v2156 = vadd.f32 0.0, %v2155
    %2157 = vdwg.mxu0
    %v2159 = vsel %vm815, %v2147, 0
    %v2162 = vsel %vm815, %v2150, 0
    %v2165 = vsel %vm815, %v2153, 0
    %v2168 = vsel %vm815, %v2156, 0
    %2170 = vmatpush.msra.mxu0 0.0
    %2171 = vmatpush.msra.mxu0 0.0
    %2172 = vmatpush.msra.mxu0 0.0
    %2173 = vmatpush.msra.mxu0 0.0
    %2174 = vmatpush.msra.mxu0 0.0
    %2175 = vmatpush.msra.mxu0 0.0
    %2176 = vmatpush.msra.mxu0 0.0
    %2177 = vmatpush.msra.mxu0 0.0
    %2178 = vmatpush.msra.mxu0 0.0
    %2179 = vmatpush.msra.mxu0 0.0
    %2180 = vmatpush.msra.mxu0 0.0
    %2181 = vmatpush.msra.mxu0 0.0
    %2182 = vmatpush.msra.mxu0 %v2115
    %2183 = vmatpush.msra.mxu0 %v2112
    %2184 = vmatpush.msra.mxu0 %v2109
    %2185 = vmatpush.msra.mxu0 %v2106
    %2186 = vmatmul.f32.gmra.mxu0 %v2159
    %v2187 = vpop.f32.mrf.mxu0
    %v2188 = vadd.f32 0.0, %v2187
    %2189 = vmatmul.f32.gmra.mxu0 %v2162
    %v2190 = vpop.f32.mrf.mxu0
    %v2191 = vadd.f32 0.0, %v2190
    %2192 = vmatmul.f32.gmra.mxu0 %v2165
    %v2193 = vpop.f32.mrf.mxu0
    %v2194 = vadd.f32 0.0, %v2193
    %2195 = vmatmul.f32.gmra.mxu0 %v2168
    %v2196 = vpop.f32.mrf.mxu0
    %v2197 = vadd.f32 0.0, %v2196
    %2198 = vdwg.mxu0
    %v2199 = vsub.f32 %v975, %v2188
    %v2200 = vsub.f32 %v976, %v2191
    %v2201 = vsub.f32 %v977, %v2194
    %v2202 = vsub.f32 %v978, %v2197
    %v2203 = vmul.f32 %v2199, 0.5
    %v2204 = vmul.f32 %v2200, 0.5
    %v2205 = vmul.f32 %v2201, 0.5
    %v2206 = vmul.f32 %v2202, 0.5
    %v2208 = vsel %vm815, %v2106, 0
    %v2211 = vsel %vm815, %v2109, 0
    %v2214 = vsel %vm815, %v2112, 0
    %v2217 = vsel %vm815, %v2115, 0
    %2219 = vmatpush.msra.mxu0 0.0
    %2220 = vmatpush.msra.mxu0 0.0
    %2221 = vmatpush.msra.mxu0 0.0
    %2222 = vmatpush.msra.mxu0 0.0
    %2223 = vmatpush.msra.mxu0 0.0
    %2224 = vmatpush.msra.mxu0 0.0
    %2225 = vmatpush.msra.mxu0 0.0
    %2226 = vmatpush.msra.mxu0 0.0
    %2227 = vmatpush.msra.mxu0 0.0
    %2228 = vmatpush.msra.mxu0 0.0
    %2229 = vmatpush.msra.mxu0 0.0
    %2230 = vmatpush.msra.mxu0 0.0
    %2231 = vmatpush.msra.mxu0 %v2206
    %2232 = vmatpush.msra.mxu0 %v2205
    %2233 = vmatpush.msra.mxu0 %v2204
    %2234 = vmatpush.msra.mxu0 %v2203
    %2235 = vmatmul.f32.gmra.mxu0 %v2208
    %v2236 = vpop.f32.mrf.mxu0
    %v2237 = vadd.f32 0.0, %v2236
    %2238 = vmatmul.f32.gmra.mxu0 %v2211
    %v2239 = vpop.f32.mrf.mxu0
    %v2240 = vadd.f32 0.0, %v2239
    %2241 = vmatmul.f32.gmra.mxu0 %v2214
    %v2242 = vpop.f32.mrf.mxu0
    %v2243 = vadd.f32 0.0, %v2242
    %2244 = vmatmul.f32.gmra.mxu0 %v2217
    %v2245 = vpop.f32.mrf.mxu0
    %v2246 = vadd.f32 0.0, %v2245
    %2247 = vdwg.mxu0
    %v2249 = vsel %vm815, %v2203, 0
    %v2252 = vsel %vm815, %v2204, 0
    %v2255 = vsel %vm815, %v2205, 0
    %v2258 = vsel %vm815, %v2206, 0
    %2260 = vmatpush.msra.mxu0 0.0
    %2261 = vmatpush.msra.mxu0 0.0
    %2262 = vmatpush.msra.mxu0 0.0
    %2263 = vmatpush.msra.mxu0 0.0
    %2264 = vmatpush.msra.mxu0 0.0
    %2265 = vmatpush.msra.mxu0 0.0
    %2266 = vmatpush.msra.mxu0 0.0
    %2267 = vmatpush.msra.mxu0 0.0
    %2268 = vmatpush.msra.mxu0 0.0
    %2269 = vmatpush.msra.mxu0 0.0
    %2270 = vmatpush.msra.mxu0 0.0
    %2271 = vmatpush.msra.mxu0 0.0
    %2272 = vmatpush.msra.mxu0 %v2156
    %2273 = vmatpush.msra.mxu0 %v2153
    %2274 = vmatpush.msra.mxu0 %v2150
    %2275 = vmatpush.msra.mxu0 %v2147
    %2276 = vmatmul.f32.gmra.mxu0 %v2249
    %v2277 = vpop.f32.mrf.mxu0
    %v2278 = vadd.f32 0.0, %v2277
    %2279 = vmatmul.f32.gmra.mxu0 %v2252
    %v2280 = vpop.f32.mrf.mxu0
    %v2281 = vadd.f32 0.0, %v2280
    %2282 = vmatmul.f32.gmra.mxu0 %v2255
    %v2283 = vpop.f32.mrf.mxu0
    %v2284 = vadd.f32 0.0, %v2283
    %2285 = vmatmul.f32.gmra.mxu0 %v2258
    %v2286 = vpop.f32.mrf.mxu0
    %v2287 = vadd.f32 0.0, %v2286
    %2288 = vdwg.mxu0
    %v2290 = vsel %vm815, %v2278, 0
    %v2293 = vsel %vm815, %v2281, 0
    %v2296 = vsel %vm815, %v2284, 0
    %v2299 = vsel %vm815, %v2287, 0
    %2301 = vmatpush.msra.mxu0 0.0
    %2302 = vmatpush.msra.mxu0 0.0
    %2303 = vmatpush.msra.mxu0 0.0
    %2304 = vmatpush.msra.mxu0 0.0
    %2305 = vmatpush.msra.mxu0 0.0
    %2306 = vmatpush.msra.mxu0 0.0
    %2307 = vmatpush.msra.mxu0 0.0
    %2308 = vmatpush.msra.mxu0 0.0
    %2309 = vmatpush.msra.mxu0 0.0
    %2310 = vmatpush.msra.mxu0 0.0
    %2311 = vmatpush.msra.mxu0 0.0
    %2312 = vmatpush.msra.mxu0 0.0
    %2313 = vmatpush.msra.mxu0 %v2246
    %2314 = vmatpush.msra.mxu0 %v2243
    %2315 = vmatpush.msra.mxu0 %v2240
    %2316 = vmatpush.msra.mxu0 %v2237
    %2317 = vmatmul.f32.gmra.mxu0 %v2290
    %v2318 = vpop.f32.mrf.mxu0
    %v2319 = vadd.f32 0.0, %v2318
    %2320 = vmatmul.f32.gmra.mxu0 %v2293
    %v2321 = vpop.f32.mrf.mxu0
    %v2322 = vadd.f32 0.0, %v2321
    %2323 = vmatmul.f32.gmra.mxu0 %v2296
    %v2324 = vpop.f32.mrf.mxu0
    %v2325 = vadd.f32 0.0, %v2324
    %2326 = vmatmul.f32.gmra.mxu0 %v2299
    %v2327 = vpop.f32.mrf.mxu0
    %v2328 = vadd.f32 0.0, %v2327
    %2329 = vdwg.mxu0
    %v2330 = vsub.f32 %v975, %v2319
    %v2331 = vsub.f32 %v976, %v2322
    %v2332 = vsub.f32 %v977, %v2325
    %v2333 = vsub.f32 %v978, %v2328
    %v2334 = vmul.f32 %v2330, 0.5
    %v2335 = vmul.f32 %v2331, 0.5
    %v2336 = vmul.f32 %v2332, 0.5
    %v2337 = vmul.f32 %v2333, 0.5
    %v2339 = vsel %vm815, %v2237, 0
    %v2342 = vsel %vm815, %v2240, 0
    %v2345 = vsel %vm815, %v2243, 0
    %v2348 = vsel %vm815, %v2246, 0
    %2350 = vmatpush.msra.mxu0 0.0
    %2351 = vmatpush.msra.mxu0 0.0
    %2352 = vmatpush.msra.mxu0 0.0
    %2353 = vmatpush.msra.mxu0 0.0
    %2354 = vmatpush.msra.mxu0 0.0
    %2355 = vmatpush.msra.mxu0 0.0
    %2356 = vmatpush.msra.mxu0 0.0
    %2357 = vmatpush.msra.mxu0 0.0
    %2358 = vmatpush.msra.mxu0 0.0
    %2359 = vmatpush.msra.mxu0 0.0
    %2360 = vmatpush.msra.mxu0 0.0
    %2361 = vmatpush.msra.mxu0 0.0
    %2362 = vmatpush.msra.mxu0 %v2337
    %2363 = vmatpush.msra.mxu0 %v2336
    %2364 = vmatpush.msra.mxu0 %v2335
    %2365 = vmatpush.msra.mxu0 %v2334
    %2366 = vmatmul.f32.gmra.mxu0 %v2339
    %v2367 = vpop.f32.mrf.mxu0
    %v2368 = vadd.f32 0.0, %v2367
    %2369 = vmatmul.f32.gmra.mxu0 %v2342
    %v2370 = vpop.f32.mrf.mxu0
    %v2371 = vadd.f32 0.0, %v2370
    %2372 = vmatmul.f32.gmra.mxu0 %v2345
    %v2373 = vpop.f32.mrf.mxu0
    %v2374 = vadd.f32 0.0, %v2373
    %2375 = vmatmul.f32.gmra.mxu0 %v2348
    %v2376 = vpop.f32.mrf.mxu0
    %v2377 = vadd.f32 0.0, %v2376
    %2378 = vdwg.mxu0
    %v2380 = vsel %vm815, %v2334, 0
    %v2383 = vsel %vm815, %v2335, 0
    %v2386 = vsel %vm815, %v2336, 0
    %v2389 = vsel %vm815, %v2337, 0
    %2391 = vmatpush.msra.mxu0 0.0
    %2392 = vmatpush.msra.mxu0 0.0
    %2393 = vmatpush.msra.mxu0 0.0
    %2394 = vmatpush.msra.mxu0 0.0
    %2395 = vmatpush.msra.mxu0 0.0
    %2396 = vmatpush.msra.mxu0 0.0
    %2397 = vmatpush.msra.mxu0 0.0
    %2398 = vmatpush.msra.mxu0 0.0
    %2399 = vmatpush.msra.mxu0 0.0
    %2400 = vmatpush.msra.mxu0 0.0
    %2401 = vmatpush.msra.mxu0 0.0
    %2402 = vmatpush.msra.mxu0 0.0
    %2403 = vmatpush.msra.mxu0 %v2287
    %2404 = vmatpush.msra.mxu0 %v2284
    %2405 = vmatpush.msra.mxu0 %v2281
    %2406 = vmatpush.msra.mxu0 %v2278
    %2407 = vmatmul.f32.gmra.mxu0 %v2380
    %v2408 = vpop.f32.mrf.mxu0
    %v2409 = vadd.f32 0.0, %v2408
    %2410 = vmatmul.f32.gmra.mxu0 %v2383
    %v2411 = vpop.f32.mrf.mxu0
    %v2412 = vadd.f32 0.0, %v2411
    %2413 = vmatmul.f32.gmra.mxu0 %v2386
    %v2414 = vpop.f32.mrf.mxu0
    %v2415 = vadd.f32 0.0, %v2414
    %2416 = vmatmul.f32.gmra.mxu0 %v2389
    %v2417 = vpop.f32.mrf.mxu0
    %v2418 = vadd.f32 0.0, %v2417
    %2419 = vdwg.mxu0
    %v2421 = vsel %vm815, %v2409, 0
    %v2424 = vsel %vm815, %v2412, 0
    %v2427 = vsel %vm815, %v2415, 0
    %v2430 = vsel %vm815, %v2418, 0
    %2432 = vmatpush.msra.mxu0 0.0
    %2433 = vmatpush.msra.mxu0 0.0
    %2434 = vmatpush.msra.mxu0 0.0
    %2435 = vmatpush.msra.mxu0 0.0
    %2436 = vmatpush.msra.mxu0 0.0
    %2437 = vmatpush.msra.mxu0 0.0
    %2438 = vmatpush.msra.mxu0 0.0
    %2439 = vmatpush.msra.mxu0 0.0
    %2440 = vmatpush.msra.mxu0 0.0
    %2441 = vmatpush.msra.mxu0 0.0
    %2442 = vmatpush.msra.mxu0 0.0
    %2443 = vmatpush.msra.mxu0 0.0
    %2444 = vmatpush.msra.mxu0 %v2377
    %2445 = vmatpush.msra.mxu0 %v2374
    %2446 = vmatpush.msra.mxu0 %v2371
    %2447 = vmatpush.msra.mxu0 %v2368
    %2448 = vmatmul.f32.gmra.mxu0 %v2421
    %v2449 = vpop.f32.mrf.mxu0
    %v2450 = vadd.f32 0.0, %v2449
    %2451 = vmatmul.f32.gmra.mxu0 %v2424
    %v2452 = vpop.f32.mrf.mxu0
    %v2453 = vadd.f32 0.0, %v2452
    %2454 = vmatmul.f32.gmra.mxu0 %v2427
    %v2455 = vpop.f32.mrf.mxu0
    %v2456 = vadd.f32 0.0, %v2455
    %2457 = vmatmul.f32.gmra.mxu0 %v2430
    %v2458 = vpop.f32.mrf.mxu0
    %v2459 = vadd.f32 0.0, %v2458
    %2460 = vdwg.mxu0
    %v2461 = vsub.f32 %v975, %v2450
    %v2462 = vsub.f32 %v976, %v2453
    %v2463 = vsub.f32 %v977, %v2456
    %v2464 = vsub.f32 %v978, %v2459
    %v2465 = vmul.f32 %v2461, 0.5
    %v2466 = vmul.f32 %v2462, 0.5
    %v2467 = vmul.f32 %v2463, 0.5
    %v2468 = vmul.f32 %v2464, 0.5
    %v2470 = vsel %vm815, %v2368, 0
    %v2473 = vsel %vm815, %v2371, 0
    %v2476 = vsel %vm815, %v2374, 0
    %v2479 = vsel %vm815, %v2377, 0
    %2481 = vmatpush.msra.mxu0 0.0
    %2482 = vmatpush.msra.mxu0 0.0
    %2483 = vmatpush.msra.mxu0 0.0
    %2484 = vmatpush.msra.mxu0 0.0
    %2485 = vmatpush.msra.mxu0 0.0
    %2486 = vmatpush.msra.mxu0 0.0
    %2487 = vmatpush.msra.mxu0 0.0
    %2488 = vmatpush.msra.mxu0 0.0
    %2489 = vmatpush.msra.mxu0 0.0
    %2490 = vmatpush.msra.mxu0 0.0
    %2491 = vmatpush.msra.mxu0 0.0
    %2492 = vmatpush.msra.mxu0 0.0
    %2493 = vmatpush.msra.mxu0 %v2468
    %2494 = vmatpush.msra.mxu0 %v2467
    %2495 = vmatpush.msra.mxu0 %v2466
    %2496 = vmatpush.msra.mxu0 %v2465
    %2497 = vmatmul.f32.gmra.mxu0 %v2470
    %v2498 = vpop.f32.mrf.mxu0
    %v2499 = vadd.f32 0.0, %v2498
    %2500 = vmatmul.f32.gmra.mxu0 %v2473
    %v2501 = vpop.f32.mrf.mxu0
    %v2502 = vadd.f32 0.0, %v2501
    %2503 = vmatmul.f32.gmra.mxu0 %v2476
    %v2504 = vpop.f32.mrf.mxu0
    %v2505 = vadd.f32 0.0, %v2504
    %2506 = vmatmul.f32.gmra.mxu0 %v2479
    %v2507 = vpop.f32.mrf.mxu0
    %v2508 = vadd.f32 0.0, %v2507
    %2509 = vdwg.mxu0
    %v2511 = vsel %vm815, %v2465, 0
    %v2514 = vsel %vm815, %v2466, 0
    %v2517 = vsel %vm815, %v2467, 0
    %v2520 = vsel %vm815, %v2468, 0
    %2522 = vmatpush.msra.mxu0 0.0
    %2523 = vmatpush.msra.mxu0 0.0
    %2524 = vmatpush.msra.mxu0 0.0
    %2525 = vmatpush.msra.mxu0 0.0
    %2526 = vmatpush.msra.mxu0 0.0
    %2527 = vmatpush.msra.mxu0 0.0
    %2528 = vmatpush.msra.mxu0 0.0
    %2529 = vmatpush.msra.mxu0 0.0
    %2530 = vmatpush.msra.mxu0 0.0
    %2531 = vmatpush.msra.mxu0 0.0
    %2532 = vmatpush.msra.mxu0 0.0
    %2533 = vmatpush.msra.mxu0 0.0
    %2534 = vmatpush.msra.mxu0 %v2418
    %2535 = vmatpush.msra.mxu0 %v2415
    %2536 = vmatpush.msra.mxu0 %v2412
    %2537 = vmatpush.msra.mxu0 %v2409
    %2538 = vmatmul.f32.gmra.mxu0 %v2511
    %v2539 = vpop.f32.mrf.mxu0
    %v2540 = vadd.f32 0.0, %v2539
    %2541 = vmatmul.f32.gmra.mxu0 %v2514
    %v2542 = vpop.f32.mrf.mxu0
    %v2543 = vadd.f32 0.0, %v2542
    %2544 = vmatmul.f32.gmra.mxu0 %v2517
    %v2545 = vpop.f32.mrf.mxu0
    %v2546 = vadd.f32 0.0, %v2545
    %2547 = vmatmul.f32.gmra.mxu0 %v2520
    %v2548 = vpop.f32.mrf.mxu0
    %v2549 = vadd.f32 0.0, %v2548
    %2550 = vdwg.mxu0
    %v2552 = vsel %vm815, %v2540, 0
    %v2555 = vsel %vm815, %v2543, 0
    %v2558 = vsel %vm815, %v2546, 0
    %v2561 = vsel %vm815, %v2549, 0
    %2563 = vmatpush.msra.mxu0 0.0
    %2564 = vmatpush.msra.mxu0 0.0
    %2565 = vmatpush.msra.mxu0 0.0
    %2566 = vmatpush.msra.mxu0 0.0
    %2567 = vmatpush.msra.mxu0 0.0
    %2568 = vmatpush.msra.mxu0 0.0
    %2569 = vmatpush.msra.mxu0 0.0
    %2570 = vmatpush.msra.mxu0 0.0
    %2571 = vmatpush.msra.mxu0 0.0
    %2572 = vmatpush.msra.mxu0 0.0
    %2573 = vmatpush.msra.mxu0 0.0
    %2574 = vmatpush.msra.mxu0 0.0
    %2575 = vmatpush.msra.mxu0 %v2508
    %2576 = vmatpush.msra.mxu0 %v2505
    %2577 = vmatpush.msra.mxu0 %v2502
    %2578 = vmatpush.msra.mxu0 %v2499
    %2579 = vmatmul.f32.gmra.mxu0 %v2552
    %v2580 = vpop.f32.mrf.mxu0
    %v2581 = vadd.f32 0.0, %v2580
    %2582 = vmatmul.f32.gmra.mxu0 %v2555
    %v2583 = vpop.f32.mrf.mxu0
    %v2584 = vadd.f32 0.0, %v2583
    %2585 = vmatmul.f32.gmra.mxu0 %v2558
    %v2586 = vpop.f32.mrf.mxu0
    %v2587 = vadd.f32 0.0, %v2586
    %2588 = vmatmul.f32.gmra.mxu0 %v2561
    %v2589 = vpop.f32.mrf.mxu0
    %v2590 = vadd.f32 0.0, %v2589
    %2591 = vdwg.mxu0
    %v2592 = vsub.f32 %v975, %v2581
    %v2593 = vsub.f32 %v976, %v2584
    %v2594 = vsub.f32 %v977, %v2587
    %v2595 = vsub.f32 %v978, %v2590
    %v2596 = vmul.f32 %v2592, 0.5
    %v2597 = vmul.f32 %v2593, 0.5
    %v2598 = vmul.f32 %v2594, 0.5
    %v2599 = vmul.f32 %v2595, 0.5
    %v2601 = vsel %vm815, %v2499, 0
    %v2604 = vsel %vm815, %v2502, 0
    %v2607 = vsel %vm815, %v2505, 0
    %v2610 = vsel %vm815, %v2508, 0
    %2612 = vmatpush.msra.mxu0 0.0
    %2613 = vmatpush.msra.mxu0 0.0
    %2614 = vmatpush.msra.mxu0 0.0
    %2615 = vmatpush.msra.mxu0 0.0
    %2616 = vmatpush.msra.mxu0 0.0
    %2617 = vmatpush.msra.mxu0 0.0
    %2618 = vmatpush.msra.mxu0 0.0
    %2619 = vmatpush.msra.mxu0 0.0
    %2620 = vmatpush.msra.mxu0 0.0
    %2621 = vmatpush.msra.mxu0 0.0
    %2622 = vmatpush.msra.mxu0 0.0
    %2623 = vmatpush.msra.mxu0 0.0
    %2624 = vmatpush.msra.mxu0 %v2599
    %2625 = vmatpush.msra.mxu0 %v2598
    %2626 = vmatpush.msra.mxu0 %v2597
    %2627 = vmatpush.msra.mxu0 %v2596
    %2628 = vmatmul.f32.gmra.mxu0 %v2601
    %v2629 = vpop.f32.mrf.mxu0
    %v2630 = vadd.f32 0.0, %v2629
    %2631 = vmatmul.f32.gmra.mxu0 %v2604
    %v2632 = vpop.f32.mrf.mxu0
    %v2633 = vadd.f32 0.0, %v2632
    %2634 = vmatmul.f32.gmra.mxu0 %v2607
    %v2635 = vpop.f32.mrf.mxu0
    %v2636 = vadd.f32 0.0, %v2635
    %2637 = vmatmul.f32.gmra.mxu0 %v2610
    %v2638 = vpop.f32.mrf.mxu0
    %v2639 = vadd.f32 0.0, %v2638
    %2640 = vdwg.mxu0
    %v2642 = vsel %vm815, %v2596, 0
    %v2645 = vsel %vm815, %v2597, 0
    %v2648 = vsel %vm815, %v2598, 0
    %v2651 = vsel %vm815, %v2599, 0
    %2653 = vmatpush.msra.mxu0 0.0
    %2654 = vmatpush.msra.mxu0 0.0
    %2655 = vmatpush.msra.mxu0 0.0
    %2656 = vmatpush.msra.mxu0 0.0
    %2657 = vmatpush.msra.mxu0 0.0
    %2658 = vmatpush.msra.mxu0 0.0
    %2659 = vmatpush.msra.mxu0 0.0
    %2660 = vmatpush.msra.mxu0 0.0
    %2661 = vmatpush.msra.mxu0 0.0
    %2662 = vmatpush.msra.mxu0 0.0
    %2663 = vmatpush.msra.mxu0 0.0
    %2664 = vmatpush.msra.mxu0 0.0
    %2665 = vmatpush.msra.mxu0 %v2549
    %2666 = vmatpush.msra.mxu0 %v2546
    %2667 = vmatpush.msra.mxu0 %v2543
    %2668 = vmatpush.msra.mxu0 %v2540
    %2669 = vmatmul.f32.gmra.mxu0 %v2642
    %v2670 = vpop.f32.mrf.mxu0
    %v2671 = vadd.f32 0.0, %v2670
    %2672 = vmatmul.f32.gmra.mxu0 %v2645
    %v2673 = vpop.f32.mrf.mxu0
    %v2674 = vadd.f32 0.0, %v2673
    %2675 = vmatmul.f32.gmra.mxu0 %v2648
    %v2676 = vpop.f32.mrf.mxu0
    %v2677 = vadd.f32 0.0, %v2676
    %2678 = vmatmul.f32.gmra.mxu0 %v2651
    %v2679 = vpop.f32.mrf.mxu0
    %v2680 = vadd.f32 0.0, %v2679
    %2681 = vdwg.mxu0
    %v2683 = vsel %vm815, %v2671, 0
    %v2686 = vsel %vm815, %v2674, 0
    %v2689 = vsel %vm815, %v2677, 0
    %v2692 = vsel %vm815, %v2680, 0
    %2694 = vmatpush.msra.mxu0 0.0
    %2695 = vmatpush.msra.mxu0 0.0
    %2696 = vmatpush.msra.mxu0 0.0
    %2697 = vmatpush.msra.mxu0 0.0
    %2698 = vmatpush.msra.mxu0 0.0
    %2699 = vmatpush.msra.mxu0 0.0
    %2700 = vmatpush.msra.mxu0 0.0
    %2701 = vmatpush.msra.mxu0 0.0
    %2702 = vmatpush.msra.mxu0 0.0
    %2703 = vmatpush.msra.mxu0 0.0
    %2704 = vmatpush.msra.mxu0 0.0
    %2705 = vmatpush.msra.mxu0 0.0
    %2706 = vmatpush.msra.mxu0 %v2639
    %2707 = vmatpush.msra.mxu0 %v2636
    %2708 = vmatpush.msra.mxu0 %v2633
    %2709 = vmatpush.msra.mxu0 %v2630
    %2710 = vmatmul.f32.gmra.mxu0 %v2683
    %v2711 = vpop.f32.mrf.mxu0
    %v2712 = vadd.f32 0.0, %v2711
    %2713 = vmatmul.f32.gmra.mxu0 %v2686
    %v2714 = vpop.f32.mrf.mxu0
    %v2715 = vadd.f32 0.0, %v2714
    %2716 = vmatmul.f32.gmra.mxu0 %v2689
    %v2717 = vpop.f32.mrf.mxu0
    %v2718 = vadd.f32 0.0, %v2717
    %2719 = vmatmul.f32.gmra.mxu0 %v2692
    %v2720 = vpop.f32.mrf.mxu0
    %v2721 = vadd.f32 0.0, %v2720
    %2722 = vdwg.mxu0
    %v2723 = vsub.f32 %v975, %v2712
    %v2724 = vsub.f32 %v976, %v2715
    %v2725 = vsub.f32 %v977, %v2718
    %v2726 = vsub.f32 %v978, %v2721
    %v2727 = vmul.f32 %v2723, 0.5
    %v2728 = vmul.f32 %v2724, 0.5
    %v2729 = vmul.f32 %v2725, 0.5
    %v2730 = vmul.f32 %v2726, 0.5
    %v2732 = vsel %vm815, %v2630, 0
    %v2735 = vsel %vm815, %v2633, 0
    %v2738 = vsel %vm815, %v2636, 0
    %v2741 = vsel %vm815, %v2639, 0
    %2743 = vmatpush.msra.mxu0 0.0
    %2744 = vmatpush.msra.mxu0 0.0
    %2745 = vmatpush.msra.mxu0 0.0
    %2746 = vmatpush.msra.mxu0 0.0
    %2747 = vmatpush.msra.mxu0 0.0
    %2748 = vmatpush.msra.mxu0 0.0
    %2749 = vmatpush.msra.mxu0 0.0
    %2750 = vmatpush.msra.mxu0 0.0
    %2751 = vmatpush.msra.mxu0 0.0
    %2752 = vmatpush.msra.mxu0 0.0
    %2753 = vmatpush.msra.mxu0 0.0
    %2754 = vmatpush.msra.mxu0 0.0
    %2755 = vmatpush.msra.mxu0 %v2730
    %2756 = vmatpush.msra.mxu0 %v2729
    %2757 = vmatpush.msra.mxu0 %v2728
    %2758 = vmatpush.msra.mxu0 %v2727
    %2759 = vmatmul.f32.gmra.mxu0 %v2732
    %v2760 = vpop.f32.mrf.mxu0
    %v2761 = vadd.f32 0.0, %v2760
    %2762 = vmatmul.f32.gmra.mxu0 %v2735
    %v2763 = vpop.f32.mrf.mxu0
    %v2764 = vadd.f32 0.0, %v2763
    %2765 = vmatmul.f32.gmra.mxu0 %v2738
    %v2766 = vpop.f32.mrf.mxu0
    %v2767 = vadd.f32 0.0, %v2766
    %2768 = vmatmul.f32.gmra.mxu0 %v2741
    %v2769 = vpop.f32.mrf.mxu0
    %v2770 = vadd.f32 0.0, %v2769
    %2771 = vdwg.mxu0
    %v2773 = vsel %vm815, %v2727, 0
    %v2776 = vsel %vm815, %v2728, 0
    %v2779 = vsel %vm815, %v2729, 0
    %v2782 = vsel %vm815, %v2730, 0
    %2784 = vmatpush.msra.mxu0 0.0
    %2785 = vmatpush.msra.mxu0 0.0
    %2786 = vmatpush.msra.mxu0 0.0
    %2787 = vmatpush.msra.mxu0 0.0
    %2788 = vmatpush.msra.mxu0 0.0
    %2789 = vmatpush.msra.mxu0 0.0
    %2790 = vmatpush.msra.mxu0 0.0
    %2791 = vmatpush.msra.mxu0 0.0
    %2792 = vmatpush.msra.mxu0 0.0
    %2793 = vmatpush.msra.mxu0 0.0
    %2794 = vmatpush.msra.mxu0 0.0
    %2795 = vmatpush.msra.mxu0 0.0
    %2796 = vmatpush.msra.mxu0 %v2680
    %2797 = vmatpush.msra.mxu0 %v2677
    %2798 = vmatpush.msra.mxu0 %v2674
    %2799 = vmatpush.msra.mxu0 %v2671
    %2800 = vmatmul.f32.gmra.mxu0 %v2773
    %v2801 = vpop.f32.mrf.mxu0
    %v2802 = vadd.f32 0.0, %v2801
    %2803 = vmatmul.f32.gmra.mxu0 %v2776
    %v2804 = vpop.f32.mrf.mxu0
    %v2805 = vadd.f32 0.0, %v2804
    %2806 = vmatmul.f32.gmra.mxu0 %v2779
    %v2807 = vpop.f32.mrf.mxu0
    %v2808 = vadd.f32 0.0, %v2807
    %2809 = vmatmul.f32.gmra.mxu0 %v2782
    %v2810 = vpop.f32.mrf.mxu0
    %v2811 = vadd.f32 0.0, %v2810
    %2812 = vdwg.mxu0
    %v2814 = vsel %vm815, %v2802, 0
    %v2817 = vsel %vm815, %v2805, 0
    %v2820 = vsel %vm815, %v2808, 0
    %v2823 = vsel %vm815, %v2811, 0
    %2825 = vmatpush.msra.mxu0 0.0
    %2826 = vmatpush.msra.mxu0 0.0
    %2827 = vmatpush.msra.mxu0 0.0
    %2828 = vmatpush.msra.mxu0 0.0
    %2829 = vmatpush.msra.mxu0 0.0
    %2830 = vmatpush.msra.mxu0 0.0
    %2831 = vmatpush.msra.mxu0 0.0
    %2832 = vmatpush.msra.mxu0 0.0
    %2833 = vmatpush.msra.mxu0 0.0
    %2834 = vmatpush.msra.mxu0 0.0
    %2835 = vmatpush.msra.mxu0 0.0
    %2836 = vmatpush.msra.mxu0 0.0
    %2837 = vmatpush.msra.mxu0 %v2770
    %2838 = vmatpush.msra.mxu0 %v2767
    %2839 = vmatpush.msra.mxu0 %v2764
    %2840 = vmatpush.msra.mxu0 %v2761
    %2841 = vmatmul.f32.gmra.mxu0 %v2814
    %v2842 = vpop.f32.mrf.mxu0
    %v2843 = vadd.f32 0.0, %v2842
    %2844 = vmatmul.f32.gmra.mxu0 %v2817
    %v2845 = vpop.f32.mrf.mxu0
    %v2846 = vadd.f32 0.0, %v2845
    %2847 = vmatmul.f32.gmra.mxu0 %v2820
    %v2848 = vpop.f32.mrf.mxu0
    %v2849 = vadd.f32 0.0, %v2848
    %2850 = vmatmul.f32.gmra.mxu0 %v2823
    %v2851 = vpop.f32.mrf.mxu0
    %v2852 = vadd.f32 0.0, %v2851
    %2853 = vdwg.mxu0
    %v2854 = vsub.f32 %v975, %v2843
    %v2855 = vsub.f32 %v976, %v2846
    %v2856 = vsub.f32 %v977, %v2849
    %v2857 = vsub.f32 %v978, %v2852
    %v2858 = vmul.f32 %v2854, 0.5
    %v2859 = vmul.f32 %v2855, 0.5
    %v2860 = vmul.f32 %v2856, 0.5
    %v2861 = vmul.f32 %v2857, 0.5
    %v2863 = vsel %vm815, %v2761, 0
    %v2866 = vsel %vm815, %v2764, 0
    %v2869 = vsel %vm815, %v2767, 0
    %v2872 = vsel %vm815, %v2770, 0
    %2874 = vmatpush.msra.mxu0 0.0
    %2875 = vmatpush.msra.mxu0 0.0
    %2876 = vmatpush.msra.mxu0 0.0
    %2877 = vmatpush.msra.mxu0 0.0
    %2878 = vmatpush.msra.mxu0 0.0
    %2879 = vmatpush.msra.mxu0 0.0
    %2880 = vmatpush.msra.mxu0 0.0
    %2881 = vmatpush.msra.mxu0 0.0
    %2882 = vmatpush.msra.mxu0 0.0
    %2883 = vmatpush.msra.mxu0 0.0
    %2884 = vmatpush.msra.mxu0 0.0
    %2885 = vmatpush.msra.mxu0 0.0
    %2886 = vmatpush.msra.mxu0 %v2861
    %2887 = vmatpush.msra.mxu0 %v2860
    %2888 = vmatpush.msra.mxu0 %v2859
    %2889 = vmatpush.msra.mxu0 %v2858
    %2890 = vmatmul.f32.gmra.mxu0 %v2863
    %v2891 = vpop.f32.mrf.mxu0
    %v2892 = vadd.f32 0.0, %v2891
    %2893 = vmatmul.f32.gmra.mxu0 %v2866
    %v2894 = vpop.f32.mrf.mxu0
    %v2895 = vadd.f32 0.0, %v2894
    %2896 = vmatmul.f32.gmra.mxu0 %v2869
    %v2897 = vpop.f32.mrf.mxu0
    %v2898 = vadd.f32 0.0, %v2897
    %2899 = vmatmul.f32.gmra.mxu0 %v2872
    %v2900 = vpop.f32.mrf.mxu0
    %v2901 = vadd.f32 0.0, %v2900
    %2902 = vdwg.mxu0
    %v2903 = vmul.f32 %v2892, %v785
    %v2904 = vmul.f32 %v2895, %v786
    %v2905 = vmul.f32 %v2898, %v787
    %v2906 = vmul.f32 %v2901, %v788
    %v2907 = vsel %vm815, %v2903, 0.0
    %v2908 = vsel %vm815, %v2904, 0.0
    %v2909 = vadd.f32 %v2907, %v2908
    %v2910 = vsel %vm815, %v2905, 0.0
    %v2911 = vadd.f32 %v2909, %v2910
    %v2912 = vsel %vm815, %v2906, 0.0
    %v2913 = vadd.f32 %v2911, %v2912
    %2914 = vadd.xlane.f32.xlu0 %v2913
    %v2915 = vpop.xlane.xlu0 %2914
    %v2916 = vrot.slane %v2915, 4
    %v2917 = vadd.f32 %v2915, %v2916
    %v2918 = vrot.slane %v2917, 2
    %v2919 = vadd.f32 %v2917, %v2918
    %v2920 = vrot.slane %v2919, 1
    %v2921 = vadd.f32 %v2919, %v2920
    %s2922 = vtos %v2921
    %v2923 = vstv %s953
    %v2924 = vrsqrt.pop %v2923
    %v2925 = vmul.f32 %v2924, %v2923
    %v2926 = vmul.f32 %v2925, %v2924
    %v2927 = vmul.f32 0.5, %v2926
    %v2928 = vsub.f32 1.5, %v2927
    %v2929 = vmul.f32 %v2924, %v2928
    %v2930 = vmul.f32 %v2923, %v2929
    %vm2931 = vcmp.eq.f32.partialorder %v2923, inf
    %v2932 = vsel %vm2931, %v2923, %v2930
    %vm2933 = vcmp.eq.f32.partialorder %v2923, 0.0
    %v2934 = vand.u32 %v2923, 2147483648
    %v2935 = vsel %vm2933, %v2934, %v2932
    %s2936 = vtos %v2935
    %s2937 = smul.f32 %s2922, %s2936
    %s2938 = smul.f32 %s2937, 2.0
    %s2939 = ssub.f32 %s832, %s2938
    %v2940 = vstv %s2939
    %vm2941 = vcmask 0
    %2942 = vst.msk [vmem:[#allocation5] sm:$0x1] %vm2941, %v2940
    %v2943 = vld [vmem:[#allocation2] sm:$0x1]
    %vm2944 = vcmp.gt.f32.partialorder %v2940, %v2943
    %v2945 = vsel %vm2944, 1, 0
    %2946 = vst.msk [vmem:[#allocation7] sm:$0x1] %vm2941, %v2945
    %v2947 = vld [vmem:[%s7] sm:$0xff]
    %v2948 = vld [vmem:[%s7 + $0x8] sm:$0xff]
    %v2949 = vld [vmem:[%s7 + $0x10] sm:$0xff]
    %v2950 = vld [vmem:[%s7 + $0x18] sm:$0xff]
    %v2951 = vld [vmem:[%s8] sm:$0x1]
    %v2953 = vperm.slane %v2951, 0
    %v2956 = vsel %vm815, %v681, 0
    %2958 = vmatpush.msra.mxu0 0.0
    %2959 = vmatpush.msra.mxu0 0.0
    %2960 = vmatpush.msra.mxu0 0.0
    %2961 = vmatpush.msra.mxu0 0.0
    %2962 = vmatpush.msra.mxu0 0.0
    %2963 = vmatpush.msra.mxu0 0.0
    %2964 = vmatpush.msra.mxu0 0.0
    %2965 = vmatpush.msra.mxu0 0.0
    %2966 = vmatpush.msra.mxu0 0.0
    %2967 = vmatpush.msra.mxu0 0.0
    %2968 = vmatpush.msra.mxu0 0.0
    %2969 = vmatpush.msra.mxu0 0.0
    %2970 = vmatpush.msra.mxu0 %v2950
    %2971 = vmatpush.msra.mxu0 %v2949
    %2972 = vmatpush.msra.mxu0 %v2948
    %2973 = vmatpush.msra.mxu0 %v2947
    %2974 = vmatmul.f32.gmra.mxu0 %v2956
    %v2975 = vpop.f32.mrf.mxu0
    %v2976 = vadd.f32 %v2953, %v2975
    %2977 = vdwg.mxu0
    %v2978 = vld [vmem:[%s6] sm:$0x3]
    %v2980 = vsel %vm815, %v2978, 0
    %2982 = vmatpush.msra.mxu0 0.0
    %2983 = vmatpush.msra.mxu0 0.0
    %2984 = vmatpush.msra.mxu0 0.0
    %2985 = vmatpush.msra.mxu0 0.0
    %2986 = vmatpush.msra.mxu0 0.0
    %2987 = vmatpush.msra.mxu0 0.0
    %2988 = vmatpush.msra.mxu0 0.0
    %2989 = vmatpush.msra.mxu0 0.0
    %2990 = vmatpush.msra.mxu0 0.0
    %2991 = vmatpush.msra.mxu0 0.0
    %2992 = vmatpush.msra.mxu0 0.0
    %2993 = vmatpush.msra.mxu0 0.0
    %2994 = vmatpush.msra.mxu0 %v2950
    %2995 = vmatpush.msra.mxu0 %v2949
    %2996 = vmatpush.msra.mxu0 %v2948
    %2997 = vmatpush.msra.mxu0 %v2947
    %2998 = vmatmul.f32.gmra.mxu0 %v2980
    %v2999 = vpop.f32.mrf.mxu0
    %v3000 = vadd.f32 %v2953, %v2999
    %3001 = vdwg.mxu0
    %v3002 = vcvt.s32.f32 %v2945
    %v3004 = vperm.slane %v3002, 0
    %3005 = vset.pattern.permute.xlu0 0
    %3006 = vperm.xlu0 %3005, %v3004
    %v3007 = vpop.permute.xlu0 %3006
    %v3009 = vmul.f32 %v3007, %v3000
    %v3010 = vsub.f32 1.0, %v3002
    %v3012 = vperm.slane %v3010, 0
    %3013 = vset.pattern.permute.xlu0 0
    %3014 = vperm.xlu0 %3013, %v3012
    %v3015 = vpop.permute.xlu0 %3014
    %v3017 = vmul.f32 %v3015, %v2976
    %v3018 = vadd.f32 %v3009, %v3017
    %vm3019 = vcmask 74752
    %3020 = vst.msk [vmem:[#allocation3] sm:$0x3] %vm3019, %v3018
    // Predicated region
    $region42: #{patch_plugin_forward.1} parent=1 // pred_check
      _
    $region43: #{patch_plugin_forward.1} parent=1 // pred_check_branch
      %3022 = sbr.rel (0) target = $region45
    $region44: #{patch_plugin_forward.1} parent=1 // pred_region
      %3024 = vsyncadd [#allocation4], 0
      %s3026 = sshll.u32 [#allocation3], 4
      %s3027 = int_to_ptr.vmem [resolvable:$true] %s3026
      %s3028 = sshll.u32 %s10, 4
      %s3029 = int_to_ptr.hbm [resolvable:$true] %s3028
      %3031 = dma.vmem_to_hbm [thread:$0]  %s3027, 32, %s3029, [#allocation4]
    $region45: #{patch_plugin_forward.1} parent=1 // pred_fallthru
      _
    // Predicated region
    $region46: #{patch_plugin_forward.1} parent=1 // pred_check
      _
    $region47: #{patch_plugin_forward.1} parent=1 // pred_check_branch
      %3033 = sbr.rel (0) target = $region49
    $region48: #{patch_plugin_forward.1} parent=1 // pred_region
      %3035 = vsyncadd [#allocation6], 0
      %s3037 = sshll.u32 [#allocation5], 4
      %s3038 = int_to_ptr.vmem [resolvable:$true] %s3037
      %s3039 = sshll.u32 %s11, 4
      %s3040 = int_to_ptr.hbm [resolvable:$true] %s3039
      %3042 = dma.vmem_to_hbm [thread:$0]  %s3038, 16, %s3040, [#allocation6]
    $region49: #{patch_plugin_forward.1} parent=1 // pred_fallthru
      _
    // Predicated region
    $region50: #{patch_plugin_forward.1} parent=1 // pred_check
      _
    $region51: #{patch_plugin_forward.1} parent=1 // pred_check_branch
      %3044 = sbr.rel (0) target = $region53
    $region52: #{patch_plugin_forward.1} parent=1 // pred_region
      %3046 = vsyncadd [#allocation6], 0
      %s3048 = sshll.u32 [#allocation7], 4
      %s3049 = int_to_ptr.vmem [resolvable:$true] %s3048
      %s3050 = sshll.u32 %s12, 4
      %s3051 = int_to_ptr.hbm [resolvable:$true] %s3050
      %3053 = dma.vmem_to_hbm [thread:$0]  %s3049, 16, %s3051, [#allocation6]
    $region53: #{patch_plugin_forward.1} parent=1 // pred_fallthru
      _
    // Predicated region
    $region54: #{patch_plugin_forward.1} parent=1 // pred_check
      _
    $region55: #{patch_plugin_forward.1} parent=1 // pred_check_branch
      %3055 = sbr.rel (0) target = $region57
    $region56: #{patch_plugin_forward.1} parent=1 // pred_region
      %3057 = dma.done [#allocation4], 32
    $region57: #{patch_plugin_forward.1} parent=1 // pred_fallthru
      _
    // Predicated region
    $region58: #{patch_plugin_forward.1} parent=1 // pred_check
      _
    $region59: #{patch_plugin_forward.1} parent=1 // pred_check_branch
      %3059 = sbr.rel (0) target = $region61
    $region60: #{patch_plugin_forward.1} parent=1 // pred_region
      %3061 = dma.done [#allocation6], 16
    $region61: #{patch_plugin_forward.1} parent=1 // pred_fallthru
      _
    // Predicated region
    $region62: #{patch_plugin_forward.1} parent=1 // pred_check
      _
    $region63: #{patch_plugin_forward.1} parent=1 // pred_check_branch
      %3063 = sbr.rel (0) target = $region65
    $region64: #{patch_plugin_forward.1} parent=1 // pred_region
      %3065 = dma.done [#allocation6], 16
    $region65: #{patch_plugin_forward.1} parent=1 // pred_fallthru
      _
    %3066 = vsyncpa [#allocation4], 1
    %3067 = vsyncpa [#allocation6], 1

</llo_original>
